<compile_context>
chip_gen: v6e
topology: v6e:2x2x1
jax: 0.10.0
libtpu: 0.0.40
codegen_flags: <defaults>
</compile_context>

<pallas_src>
import functools

import jax
import jax.numpy as jnp
from jax.experimental import pallas as pl
from jax.experimental.pallas import tpu as pltpu

LN_EPS = 1e-12   # BERT layer-norm epsilon
LANE = 128       # TPU lane width


def _round_up(x, m):
    return ((x + m - 1) // m) * m


def _gelu_tanh(y):
    # TODO(synk): HF BERT default is exact erf-GELU; tanh approximation used here.
    return 0.5 * y * (1.0 + jnp.tanh(0.7978845608028654 * (y + 0.044715 * y * y * y)))


# ------------------------------ fused kernel --------------------------------

def _bert_kernel(emb_ref, bias_ref, eg_ref, eb_ref,
                 qkvw_ref, qkvb_ref, ow_ref, ob_ref, g1_ref, b1_ref,
                 iw_ref, ib_ref, fow_ref, fob_ref, g2_ref, b2_ref,
                 pw_ref, pb_ref, cw_ref, cb_ref,
                 out_ref, attn_scr, cls_scr, *, B, S, H, nH, Dh, Hp, L):
    # Hoisted lane-validity mask for the zero-padded hidden dimension.
    lane = jax.lax.broadcasted_iota(jnp.int32, (1, Hp), 1)
    valid = (lane < H).astype(jnp.float32)

    def layer_norm(x, g, b):
        # x: [M, Hp]; padded lanes of x are zero. Stats over the H real lanes.
        mu = jnp.sum(x, axis=-1, keepdims=True) * (1.0 / H)
        d = (x - mu) * valid
        var = jnp.sum(d * d, axis=-1, keepdims=True) * (1.0 / H)
        inv = jax.lax.rsqrt(var + LN_EPS)
        return (d * inv) * g + b            # padded lanes stay exactly zero

    attn_bias = bias_ref[...]               # [B, S] additive -1e4 key mask

    # Embedding LayerNorm (fused into this kernel).
    x = layer_norm(emb_ref[...], eg_ref[...], eb_ref[...])       # [M, Hp]

    for l in range(L):                       # static unroll over layers
        # Fused QKV projection (Q pre-scaled by 1/sqrt(Dh) at pack time).
        qkv = jnp.dot(x, qkvw_ref[l], preferred_element_type=jnp.float32) + qkvb_ref[l]
        ow = ow_ref[l]                       # [Hp, Hp]
        for b in range(B):                   # static unroll (B*nH tiny tiles)
            qkv_b = qkv[b * S:(b + 1) * S, :]          # [S, 3*Hp]
            bias_b = attn_bias[b:b + 1, :]             # [1, S]
            acc = x[b * S:(b + 1) * S, :]              # residual folded in
            for h in range(nH):
                q = qkv_b[:, h * Dh:(h + 1) * Dh]                        # [S, Dh]
                k = qkv_b[:, Hp + h * Dh:Hp + (h + 1) * Dh]              # [S, Dh]
                v = qkv_b[:, 2 * Hp + h * Dh:2 * Hp + (h + 1) * Dh]      # [S, Dh]
                # q @ k.T without an explicit transpose (contract last dims).
                s = jax.lax.dot_general(q, k, (((1,), (1,)), ((), ())),
                                        preferred_element_type=jnp.float32)
                s = s + bias_b                                           # key mask
                m = jnp.max(s, axis=-1, keepdims=True)
                p = jnp.exp(s - m)
                denom = jnp.sum(p, axis=-1, keepdims=True)
                probs = p * pl.reciprocal(denom, approx=True)            # EUP slot
                ctx = jnp.dot(probs, v, preferred_element_type=jnp.float32)
                # Output projection folded into the head loop:
                #   concat_h(ctx_h) @ W_o == sum_h ctx_h @ W_o[h*Dh:(h+1)*Dh, :]
                acc = acc + jnp.dot(ctx, ow[h * Dh:(h + 1) * Dh, :],
                                    preferred_element_type=jnp.float32)
            attn_scr[pl.ds(b * S, S), :] = acc         # no in-kernel concatenate
        x = layer_norm(attn_scr[...] + ob_ref[l], g1_ref[l], b1_ref[l])  # res + LN

        inter = jnp.dot(x, iw_ref[l], preferred_element_type=jnp.float32) + ib_ref[l]
        inter = _gelu_tanh(inter)
        ffn = jnp.dot(inter, fow_ref[l], preferred_element_type=jnp.float32) + fob_ref[l]
        x = layer_norm(x + ffn, g2_ref[l], b2_ref[l])                    # res + LN

    # Pooler (tanh(hidden[:, 0] @ W_pool + b)) + classifier, fused.
    cls_scr[...] = jnp.zeros_like(cls_scr)             # rows B..7 stay zero (pad)
    for b in range(B):
        cls_scr[pl.ds(b, 1), :] = x[b * S:b * S + 1, :]
    pooled = jnp.tanh(jnp.dot(cls_scr[...], pw_ref[...],
                              preferred_element_type=jnp.float32) + pb_ref[...])
    out_ref[...] = (jnp.dot(pooled, cw_ref[...], preferred_element_type=jnp.float32)
                    + cb_ref[...])                      # dense (8, 128) store


# ------------------------------- parameters ---------------------------------

def init_params(key, cfg):
    def nrm(k, shape):
        return 0.02 * jax.random.normal(k, shape, dtype=jnp.float32)

    H, I = cfg["hidden"], cfg["intermediate"]
    keys = jax.random.split(key, 8 + cfg["layers"])
    params = {
        "word_emb": nrm(keys[0], (cfg["vocab"], H)),
        "pos_emb": nrm(keys[1], (cfg["max_pos"], H)),
        "type_emb": nrm(keys[2], (cfg["type_vocab"], H)),
        "emb_ln_g": jnp.ones((H,), jnp.float32),
        "emb_ln_b": jnp.zeros((H,), jnp.float32),
        "pool_w": nrm(keys[3], (H, H)),
        "pool_b": jnp.zeros((H,), jnp.float32),
        "cls_w": nrm(keys[4], (H, cfg["n_labels"])),
        "cls_b": jnp.zeros((cfg["n_labels"],), jnp.float32),
        "layers": [],
    }
    for l in range(cfg["layers"]):
        lk = jax.random.split(keys[8 + l], 6)
        params["layers"].append({
            "q_w": nrm(lk[0], (H, H)), "q_b": jnp.zeros((H,), jnp.float32),
            "k_w": nrm(lk[1], (H, H)), "k_b": jnp.zeros((H,), jnp.float32),
            "v_w": nrm(lk[2], (H, H)), "v_b": jnp.zeros((H,), jnp.float32),
            "o_w": nrm(lk[3], (H, H)), "o_b": jnp.zeros((H,), jnp.float32),
            "ln1_g": jnp.ones((H,), jnp.float32), "ln1_b": jnp.zeros((H,), jnp.float32),
            "i_w": nrm(lk[4], (H, I)), "i_b": jnp.zeros((I,), jnp.float32),
            "fo_w": nrm(lk[5], (I, H)), "fo_b": jnp.zeros((H,), jnp.float32),
            "ln2_g": jnp.ones((H,), jnp.float32), "ln2_b": jnp.zeros((H,), jnp.float32),
        })
    return params


def pack_params(params, cfg):
    """Zero-pad all parameters to lane-dense (multiples of 128) layouts, fuse
    QKV weights/biases (with the 1/sqrt(Dh) scale folded into Q), and stack
    per-layer tensors along a leading L axis."""
    H, I, L = cfg["hidden"], cfg["intermediate"], cfg["layers"]
    NL, Dh = cfg["n_labels"], cfg["head_dim"]
    Hp, Ip, NLp = _round_up(H, LANE), _round_up(I, LANE), _round_up(NL, LANE)
    scale = 1.0 / float(Dh) ** 0.5

    def pad2(w, r, c):
        return jnp.pad(w, ((0, r - w.shape[0]), (0, c - w.shape[1])))

    def pad1(v, n):
        return jnp.pad(v, (0, n - v.shape[0]))[None, :]

    ls = params["layers"]
    packed = {
        "word_emb": params["word_emb"],
        "pos_emb": params["pos_emb"],
        "type_emb": params["type_emb"],
        "emb_ln_g": pad1(params["emb_ln_g"], Hp),
        "emb_ln_b": pad1(params["emb_ln_b"], Hp),
        "qkv_w": jnp.stack([jnp.concatenate(
            [pad2(p["q_w"] * scale, Hp, Hp), pad2(p["k_w"], Hp, Hp),
             pad2(p["v_w"], Hp, Hp)], axis=1) for p in ls]),      # [L, Hp, 3Hp]
        "qkv_b": jnp.stack([jnp.concatenate(
            [pad1(p["q_b"] * scale, Hp), pad1(p["k_b"], Hp),
             pad1(p["v_b"], Hp)], axis=1) for p in ls]),          # [L, 1, 3Hp]
        "o_w": jnp.stack([pad2(p["o_w"], Hp, Hp) for p in ls]),
        "o_b": jnp.stack([pad1(p["o_b"], Hp) for p in ls]),
        "ln1_g": jnp.stack([pad1(p["ln1_g"], Hp) for p in ls]),
        "ln1_b": jnp.stack([pad1(p["ln1_b"], Hp) for p in ls]),
        "i_w": jnp.stack([pad2(p["i_w"], Hp, Ip) for p in ls]),
        "i_b": jnp.stack([pad1(p["i_b"], Ip) for p in ls]),
        "fo_w": jnp.stack([pad2(p["fo_w"], Ip, Hp) for p in ls]),
        "fo_b": jnp.stack([pad1(p["fo_b"], Hp) for p in ls]),
        "ln2_g": jnp.stack([pad1(p["ln2_g"], Hp) for p in ls]),
        "ln2_b": jnp.stack([pad1(p["ln2_b"], Hp) for p in ls]),
        "pool_w": pad2(params["pool_w"], Hp, Hp),
        "pool_b": pad1(params["pool_b"], Hp),
        "cls_w": pad2(params["cls_w"], Hp, NLp),
        "cls_b": pad1(params["cls_b"], NLp),
    }
    return packed


# ------------------------------- forward pass --------------------------------

def bert_for_multilabel_forward(packed, input_ids, attention_mask, cfg):
    B, S = input_ids.shape
    H, nH, Dh, L = cfg["hidden"], cfg["heads"], cfg["head_dim"], cfg["layers"]
    NL = cfg["n_labels"]
    Hp, NLp = _round_up(H, LANE), _round_up(NL, LANE)
    M = B * S
    out_rows = _round_up(B, 8)

    # Embedding gathers stay in plain JAX glue (data-dependent gather).
    we = packed["word_emb"][input_ids]                    # [B, S, H]
    pe = packed["pos_emb"][:S]                            # [S, H]
    te = packed["type_emb"][0]                            # [H]  (token_type_ids == 0)
    emb = (we + pe[None, :, :] + te[None, None, :]).reshape(M, H)
    emb = jnp.pad(emb, ((0, 0), (0, Hp - H)))             # lane-dense [M, Hp]

    # Additive attention mask bias (original-BERT style -10000 penalty).
    attn_bias = (1.0 - attention_mask.astype(jnp.float32)) * (-10000.0)   # [B, S]

    kern = functools.partial(_bert_kernel, B=B, S=S, H=H, nH=nH, Dh=Dh, Hp=Hp, L=L)

    out = pl.pallas_call(
        kern,
        out_shape=jax.ShapeDtypeStruct((out_rows, NLp), jnp.float32),
        scratch_shapes=[pltpu.VMEM((M, Hp), jnp.float32),        # attention slab
                        pltpu.VMEM((out_rows, Hp), jnp.float32)],  # CLS rows
    )(emb, attn_bias,
      packed["emb_ln_g"], packed["emb_ln_b"],
      packed["qkv_w"], packed["qkv_b"], packed["o_w"], packed["o_b"],
      packed["ln1_g"], packed["ln1_b"],
      packed["i_w"], packed["i_b"], packed["fo_w"], packed["fo_b"],
      packed["ln2_g"], packed["ln2_b"],
      packed["pool_w"], packed["pool_b"], packed["cls_w"], packed["cls_b"])

    return out[:B, :NL]


# ----------------------------------- main ------------------------------------

if __name__ == "__main__":
    cfg = dict(vocab=100, hidden=32, heads=2, head_dim=16, intermediate=64,
               layers=2, max_pos=16, type_vocab=2, n_labels=4)

    key = jax.random.PRNGKey(0)
    pkey, ikey = jax.random.split(key)
    params = init_params(pkey, cfg)
    packed = pack_params(params, cfg)      # one-time lane-dense packing

    B, S = 2, 8
    input_ids = jax.random.randint(ikey, (B, S), 0, cfg["vocab"], dtype=jnp.int32)
    attention_mask = jnp.array([[1, 1, 1, 1, 1, 1, 1, 1],
                                [1, 1, 1, 1, 1, 1, 0, 0]], dtype=jnp.int32)

    fwd = jax.jit(functools.partial(bert_for_multilabel_forward, cfg=cfg))
    logits = fwd(packed, input_ids, attention_mask)
    jax.block_until_ready(logits)

    assert logits.shape == (B, cfg["n_labels"])
    assert logits.dtype == jnp.float32
    print("KERNEL_OK")
</pallas_src>

<mosaic_0001>
module attributes {stable_mosaic.version = 11 : i64} {
  func.func @_bert_kernel(%arg0: memref<16x128xf32, #tpu.memory_space<vmem>>, %arg1: memref<2x8xf32, #tpu.memory_space<vmem>>, %arg2: memref<1x128xf32, #tpu.memory_space<vmem>>, %arg3: memref<1x128xf32, #tpu.memory_space<vmem>>, %arg4: memref<2x128x384xf32, #tpu.memory_space<vmem>>, %arg5: memref<2x1x384xf32, #tpu.memory_space<vmem>>, %arg6: memref<2x128x128xf32, #tpu.memory_space<vmem>>, %arg7: memref<2x1x128xf32, #tpu.memory_space<vmem>>, %arg8: memref<2x1x128xf32, #tpu.memory_space<vmem>>, %arg9: memref<2x1x128xf32, #tpu.memory_space<vmem>>, %arg10: memref<2x128x128xf32, #tpu.memory_space<vmem>>, %arg11: memref<2x1x128xf32, #tpu.memory_space<vmem>>, %arg12: memref<2x128x128xf32, #tpu.memory_space<vmem>>, %arg13: memref<2x1x128xf32, #tpu.memory_space<vmem>>, %arg14: memref<2x1x128xf32, #tpu.memory_space<vmem>>, %arg15: memref<2x1x128xf32, #tpu.memory_space<vmem>>, %arg16: memref<128x128xf32, #tpu.memory_space<vmem>>, %arg17: memref<1x128xf32, #tpu.memory_space<vmem>>, %arg18: memref<128x128xf32, #tpu.memory_space<vmem>>, %arg19: memref<1x128xf32, #tpu.memory_space<vmem>>, %arg20: memref<8x128xf32, #tpu.memory_space<vmem>>, %arg21: memref<16x128xf32, #tpu.memory_space<vmem>>, %arg22: memref<8x128xf32, #tpu.memory_space<vmem>>) attributes {dimension_semantics = [], scalar_prefetch = 0 : i64, scratch_operands = 2 : i64, tpu.core_type = #tpu.core_type<tc>} {
    %0 = tpu.iota {dimensions = array<i32: 1>} : vector<1x128xi32>
    %c32_i32 = arith.constant 32 : i32
    %1 = vector.broadcast %c32_i32 : i32 to vector<1x128xi32>
    %2 = arith.cmpi slt, %0, %1 : vector<1x128xi32>
    %3 = arith.extui %2 : vector<1x128xi1> to vector<1x128xi32>
    %4 = arith.sitofp %3 : vector<1x128xi32> to vector<1x128xf32>
    %c0 = arith.constant 0 : index
    %c0_0 = arith.constant 0 : index
    %5 = vector.load %arg1[%c0, %c0_0] : memref<2x8xf32, #tpu.memory_space<vmem>>, vector<2x8xf32>
    %c0_1 = arith.constant 0 : index
    %c0_2 = arith.constant 0 : index
    %6 = vector.load %arg0[%c0_1, %c0_2] : memref<16x128xf32, #tpu.memory_space<vmem>>, vector<16x128xf32>
    %c0_3 = arith.constant 0 : index
    %c0_4 = arith.constant 0 : index
    %7 = vector.load %arg2[%c0_3, %c0_4] : memref<1x128xf32, #tpu.memory_space<vmem>>, vector<1x128xf32>
    %c0_5 = arith.constant 0 : index
    %c0_6 = arith.constant 0 : index
    %8 = vector.load %arg3[%c0_5, %c0_6] : memref<1x128xf32, #tpu.memory_space<vmem>>, vector<1x128xf32>
    %cst = arith.constant dense<0.000000e+00> : vector<16xf32>
    %9 = vector.multi_reduction <add>, %6, %cst [1] : vector<16x128xf32> to vector<16xf32>
    %10 = vector.shape_cast %9 : vector<16xf32> to vector<16x1xf32>
    %cst_7 = arith.constant 3.125000e-02 : f32
    %11 = vector.broadcast %cst_7 : f32 to vector<16x1xf32>
    %12 = arith.mulf %10, %11 : vector<16x1xf32>
    %13 = vector.broadcast %12 : vector<16x1xf32> to vector<16x128xf32>
    %14 = arith.subf %6, %13 : vector<16x128xf32>
    %15 = vector.broadcast %4 : vector<1x128xf32> to vector<16x128xf32>
    %16 = arith.mulf %14, %15 : vector<16x128xf32>
    %17 = arith.mulf %16, %16 : vector<16x128xf32>
    %cst_8 = arith.constant dense<0.000000e+00> : vector<16xf32>
    %18 = vector.multi_reduction <add>, %17, %cst_8 [1] : vector<16x128xf32> to vector<16xf32>
    %19 = vector.shape_cast %18 : vector<16xf32> to vector<16x1xf32>
    %cst_9 = arith.constant 3.125000e-02 : f32
    %20 = vector.broadcast %cst_9 : f32 to vector<16x1xf32>
    %21 = arith.mulf %19, %20 : vector<16x1xf32>
    %cst_10 = arith.constant 9.99999996E-13 : f32
    %22 = vector.broadcast %cst_10 : f32 to vector<16x1xf32>
    %23 = arith.addf %21, %22 : vector<16x1xf32>
    %24 = math.rsqrt %23 : vector<16x1xf32>
    %25 = vector.broadcast %24 : vector<16x1xf32> to vector<16x128xf32>
    %26 = arith.mulf %16, %25 : vector<16x128xf32>
    %27 = vector.broadcast %7 : vector<1x128xf32> to vector<16x128xf32>
    %28 = arith.mulf %26, %27 : vector<16x128xf32>
    %29 = vector.broadcast %8 : vector<1x128xf32> to vector<16x128xf32>
    %30 = arith.addf %28, %29 : vector<16x128xf32>
    %c0_11 = arith.constant 0 : index
    %c0_12 = arith.constant 0 : index
    %c0_13 = arith.constant 0 : index
    %31 = vector.load %arg4[%c0_11, %c0_12, %c0_13] : memref<2x128x384xf32, #tpu.memory_space<vmem>>, vector<1x128x384xf32>
    %32 = vector.shape_cast %31 : vector<1x128x384xf32> to vector<128x384xf32>
    %cst_14 = arith.constant dense<0.000000e+00> : vector<16x384xf32>
    %33 = tpu.matmul %30, %32, %cst_14 {dimension_numbers = #tpu.dot_dimension_numbers<[1], [0], [0], [1], [0, 0, 1, 1], [], []>} : vector<16x128xf32>, vector<128x384xf32>, vector<16x384xf32> -> vector<16x384xf32>
    %c0_15 = arith.constant 0 : index
    %c0_16 = arith.constant 0 : index
    %c0_17 = arith.constant 0 : index
    %34 = vector.load %arg5[%c0_15, %c0_16, %c0_17] : memref<2x1x384xf32, #tpu.memory_space<vmem>>, vector<1x1x384xf32>
    %35 = vector.shape_cast %34 : vector<1x1x384xf32> to vector<1x384xf32>
    %36 = vector.broadcast %35 : vector<1x384xf32> to vector<16x384xf32>
    %37 = arith.addf %33, %36 : vector<16x384xf32>
    %c0_18 = arith.constant 0 : index
    %c0_19 = arith.constant 0 : index
    %c0_20 = arith.constant 0 : index
    %38 = vector.load %arg6[%c0_18, %c0_19, %c0_20] : memref<2x128x128xf32, #tpu.memory_space<vmem>>, vector<1x128x128xf32>
    %39 = vector.shape_cast %38 : vector<1x128x128xf32> to vector<128x128xf32>
    %40 = vector.extract_strided_slice %37 {offsets = [0, 0], sizes = [8, 384], strides = [1, 1]} : vector<16x384xf32> to vector<8x384xf32>
    %41 = vector.extract_strided_slice %5 {offsets = [0, 0], sizes = [1, 8], strides = [1, 1]} : vector<2x8xf32> to vector<1x8xf32>
    %42 = vector.extract_strided_slice %30 {offsets = [0, 0], sizes = [8, 128], strides = [1, 1]} : vector<16x128xf32> to vector<8x128xf32>
    %43 = vector.extract_strided_slice %40 {offsets = [0, 0], sizes = [8, 16], strides = [1, 1]} : vector<8x384xf32> to vector<8x16xf32>
    %44 = vector.extract_strided_slice %40 {offsets = [0, 128], sizes = [8, 16], strides = [1, 1]} : vector<8x384xf32> to vector<8x16xf32>
    %45 = vector.extract_strided_slice %40 {offsets = [0, 256], sizes = [8, 16], strides = [1, 1]} : vector<8x384xf32> to vector<8x16xf32>
    %cst_21 = arith.constant dense<0.000000e+00> : vector<8x8xf32>
    %46 = tpu.matmul %43, %44, %cst_21 {dimension_numbers = #tpu.dot_dimension_numbers<[1], [1], [0], [0], [0, 0, 1, 0], [], []>} : vector<8x16xf32>, vector<8x16xf32>, vector<8x8xf32> -> vector<8x8xf32>
    %47 = vector.broadcast %41 : vector<1x8xf32> to vector<8x8xf32>
    %48 = arith.addf %46, %47 : vector<8x8xf32>
    %cst_22 = arith.constant dense<0xFF800000> : vector<8xf32>
    %49 = vector.multi_reduction <maximumf>, %48, %cst_22 [1] : vector<8x8xf32> to vector<8xf32>
    %50 = vector.shape_cast %49 : vector<8xf32> to vector<8x1xf32>
    %51 = vector.broadcast %50 : vector<8x1xf32> to vector<8x8xf32>
    %52 = arith.subf %48, %51 : vector<8x8xf32>
    %53 = math.exp %52 : vector<8x8xf32>
    %cst_23 = arith.constant dense<0.000000e+00> : vector<8xf32>
    %54 = vector.multi_reduction <add>, %53, %cst_23 [1] : vector<8x8xf32> to vector<8xf32>
    %55 = vector.shape_cast %54 : vector<8xf32> to vector<8x1xf32>
    %56 = tpu.reciprocal %55 {approx = true} : vector<8x1xf32> -> vector<8x1xf32>
    %57 = vector.broadcast %56 : vector<8x1xf32> to vector<8x8xf32>
    %58 = arith.mulf %53, %57 : vector<8x8xf32>
    %cst_24 = arith.constant dense<0.000000e+00> : vector<8x16xf32>
    %59 = tpu.matmul %58, %45, %cst_24 {dimension_numbers = #tpu.dot_dimension_numbers<[1], [0], [0], [1], [0, 0, 1, 1], [], []>} : vector<8x8xf32>, vector<8x16xf32>, vector<8x16xf32> -> vector<8x16xf32>
    %60 = vector.extract_strided_slice %39 {offsets = [0, 0], sizes = [16, 128], strides = [1, 1]} : vector<128x128xf32> to vector<16x128xf32>
    %cst_25 = arith.constant dense<0.000000e+00> : vector<8x128xf32>
    %61 = tpu.matmul %59, %60, %cst_25 {dimension_numbers = #tpu.dot_dimension_numbers<[1], [0], [0], [1], [0, 0, 1, 1], [], []>} : vector<8x16xf32>, vector<16x128xf32>, vector<8x128xf32> -> vector<8x128xf32>
    %62 = arith.addf %42, %61 : vector<8x128xf32>
    %63 = vector.extract_strided_slice %40 {offsets = [0, 16], sizes = [8, 16], strides = [1, 1]} : vector<8x384xf32> to vector<8x16xf32>
    %64 = vector.extract_strided_slice %40 {offsets = [0, 144], sizes = [8, 16], strides = [1, 1]} : vector<8x384xf32> to vector<8x16xf32>
    %65 = vector.extract_strided_slice %40 {offsets = [0, 272], sizes = [8, 16], strides = [1, 1]} : vector<8x384xf32> to vector<8x16xf32>
    %cst_26 = arith.constant dense<0.000000e+00> : vector<8x8xf32>
    %66 = tpu.matmul %63, %64, %cst_26 {dimension_numbers = #tpu.dot_dimension_numbers<[1], [1], [0], [0], [0, 0, 1, 0], [], []>} : vector<8x16xf32>, vector<8x16xf32>, vector<8x8xf32> -> vector<8x8xf32>
    %67 = vector.broadcast %41 : vector<1x8xf32> to vector<8x8xf32>
    %68 = arith.addf %66, %67 : vector<8x8xf32>
    %cst_27 = arith.constant dense<0xFF800000> : vector<8xf32>
    %69 = vector.multi_reduction <maximumf>, %68, %cst_27 [1] : vector<8x8xf32> to vector<8xf32>
    %70 = vector.shape_cast %69 : vector<8xf32> to vector<8x1xf32>
    %71 = vector.broadcast %70 : vector<8x1xf32> to vector<8x8xf32>
    %72 = arith.subf %68, %71 : vector<8x8xf32>
    %73 = math.exp %72 : vector<8x8xf32>
    %cst_28 = arith.constant dense<0.000000e+00> : vector<8xf32>
    %74 = vector.multi_reduction <add>, %73, %cst_28 [1] : vector<8x8xf32> to vector<8xf32>
    %75 = vector.shape_cast %74 : vector<8xf32> to vector<8x1xf32>
    %76 = tpu.reciprocal %75 {approx = true} : vector<8x1xf32> -> vector<8x1xf32>
    %77 = vector.broadcast %76 : vector<8x1xf32> to vector<8x8xf32>
    %78 = arith.mulf %73, %77 : vector<8x8xf32>
    %cst_29 = arith.constant dense<0.000000e+00> : vector<8x16xf32>
    %79 = tpu.matmul %78, %65, %cst_29 {dimension_numbers = #tpu.dot_dimension_numbers<[1], [0], [0], [1], [0, 0, 1, 1], [], []>} : vector<8x8xf32>, vector<8x16xf32>, vector<8x16xf32> -> vector<8x16xf32>
    %80 = vector.extract_strided_slice %39 {offsets = [16, 0], sizes = [16, 128], strides = [1, 1]} : vector<128x128xf32> to vector<16x128xf32>
    %cst_30 = arith.constant dense<0.000000e+00> : vector<8x128xf32>
    %81 = tpu.matmul %79, %80, %cst_30 {dimension_numbers = #tpu.dot_dimension_numbers<[1], [0], [0], [1], [0, 0, 1, 1], [], []>} : vector<8x16xf32>, vector<16x128xf32>, vector<8x128xf32> -> vector<8x128xf32>
    %82 = arith.addf %62, %81 : vector<8x128xf32>
    %c0_31 = arith.constant 0 : index
    %c0_32 = arith.constant 0 : index
    %83 = vector.load %arg21[%c0_31, %c0_32] : memref<16x128xf32, #tpu.memory_space<vmem>>, vector<8x128xf32>
    tpu.vector_store %arg21[%c0_31, %c0_32], %82 {strides = array<i32>} : memref<16x128xf32, #tpu.memory_space<vmem>>, vector<8x128xf32>,
    %84 = vector.extract_strided_slice %37 {offsets = [8, 0], sizes = [8, 384], strides = [1, 1]} : vector<16x384xf32> to vector<8x384xf32>
    %85 = vector.extract_strided_slice %5 {offsets = [1, 0], sizes = [1, 8], strides = [1, 1]} : vector<2x8xf32> to vector<1x8xf32>
    %86 = vector.extract_strided_slice %30 {offsets = [8, 0], sizes = [8, 128], strides = [1, 1]} : vector<16x128xf32> to vector<8x128xf32>
    %87 = vector.extract_strided_slice %84 {offsets = [0, 0], sizes = [8, 16], strides = [1, 1]} : vector<8x384xf32> to vector<8x16xf32>
    %88 = vector.extract_strided_slice %84 {offsets = [0, 128], sizes = [8, 16], strides = [1, 1]} : vector<8x384xf32> to vector<8x16xf32>
    %89 = vector.extract_strided_slice %84 {offsets = [0, 256], sizes = [8, 16], strides = [1, 1]} : vector<8x384xf32> to vector<8x16xf32>
    %cst_33 = arith.constant dense<0.000000e+00> : vector<8x8xf32>
    %90 = tpu.matmul %87, %88, %cst_33 {dimension_numbers = #tpu.dot_dimension_numbers<[1], [1], [0], [0], [0, 0, 1, 0], [], []>} : vector<8x16xf32>, vector<8x16xf32>, vector<8x8xf32> -> vector<8x8xf32>
    %91 = vector.broadcast %85 : vector<1x8xf32> to vector<8x8xf32>
    %92 = arith.addf %90, %91 : vector<8x8xf32>
    %cst_34 = arith.constant dense<0xFF800000> : vector<8xf32>
    %93 = vector.multi_reduction <maximumf>, %92, %cst_34 [1] : vector<8x8xf32> to vector<8xf32>
    %94 = vector.shape_cast %93 : vector<8xf32> to vector<8x1xf32>
    %95 = vector.broadcast %94 : vector<8x1xf32> to vector<8x8xf32>
    %96 = arith.subf %92, %95 : vector<8x8xf32>
    %97 = math.exp %96 : vector<8x8xf32>
    %cst_35 = arith.constant dense<0.000000e+00> : vector<8xf32>
    %98 = vector.multi_reduction <add>, %97, %cst_35 [1] : vector<8x8xf32> to vector<8xf32>
    %99 = vector.shape_cast %98 : vector<8xf32> to vector<8x1xf32>
    %100 = tpu.reciprocal %99 {approx = true} : vector<8x1xf32> -> vector<8x1xf32>
    %101 = vector.broadcast %100 : vector<8x1xf32> to vector<8x8xf32>
    %102 = arith.mulf %97, %101 : vector<8x8xf32>
    %cst_36 = arith.constant dense<0.000000e+00> : vector<8x16xf32>
    %103 = tpu.matmul %102, %89, %cst_36 {dimension_numbers = #tpu.dot_dimension_numbers<[1], [0], [0], [1], [0, 0, 1, 1], [], []>} : vector<8x8xf32>, vector<8x16xf32>, vector<8x16xf32> -> vector<8x16xf32>
    %104 = vector.extract_strided_slice %39 {offsets = [0, 0], sizes = [16, 128], strides = [1, 1]} : vector<128x128xf32> to vector<16x128xf32>
    %cst_37 = arith.constant dense<0.000000e+00> : vector<8x128xf32>
    %105 = tpu.matmul %103, %104, %cst_37 {dimension_numbers = #tpu.dot_dimension_numbers<[1], [0], [0], [1], [0, 0, 1, 1], [], []>} : vector<8x16xf32>, vector<16x128xf32>, vector<8x128xf32> -> vector<8x128xf32>
    %106 = arith.addf %86, %105 : vector<8x128xf32>
    %107 = vector.extract_strided_slice %84 {offsets = [0, 16], sizes = [8, 16], strides = [1, 1]} : vector<8x384xf32> to vector<8x16xf32>
    %108 = vector.extract_strided_slice %84 {offsets = [0, 144], sizes = [8, 16], strides = [1, 1]} : vector<8x384xf32> to vector<8x16xf32>
    %109 = vector.extract_strided_slice %84 {offsets = [0, 272], sizes = [8, 16], strides = [1, 1]} : vector<8x384xf32> to vector<8x16xf32>
    %cst_38 = arith.constant dense<0.000000e+00> : vector<8x8xf32>
    %110 = tpu.matmul %107, %108, %cst_38 {dimension_numbers = #tpu.dot_dimension_numbers<[1], [1], [0], [0], [0, 0, 1, 0], [], []>} : vector<8x16xf32>, vector<8x16xf32>, vector<8x8xf32> -> vector<8x8xf32>
    %111 = vector.broadcast %85 : vector<1x8xf32> to vector<8x8xf32>
    %112 = arith.addf %110, %111 : vector<8x8xf32>
    %cst_39 = arith.constant dense<0xFF800000> : vector<8xf32>
    %113 = vector.multi_reduction <maximumf>, %112, %cst_39 [1] : vector<8x8xf32> to vector<8xf32>
    %114 = vector.shape_cast %113 : vector<8xf32> to vector<8x1xf32>
    %115 = vector.broadcast %114 : vector<8x1xf32> to vector<8x8xf32>
    %116 = arith.subf %112, %115 : vector<8x8xf32>
    %117 = math.exp %116 : vector<8x8xf32>
    %cst_40 = arith.constant dense<0.000000e+00> : vector<8xf32>
    %118 = vector.multi_reduction <add>, %117, %cst_40 [1] : vector<8x8xf32> to vector<8xf32>
    %119 = vector.shape_cast %118 : vector<8xf32> to vector<8x1xf32>
    %120 = tpu.reciprocal %119 {approx = true} : vector<8x1xf32> -> vector<8x1xf32>
    %121 = vector.broadcast %120 : vector<8x1xf32> to vector<8x8xf32>
    %122 = arith.mulf %117, %121 : vector<8x8xf32>
    %cst_41 = arith.constant dense<0.000000e+00> : vector<8x16xf32>
    %123 = tpu.matmul %122, %109, %cst_41 {dimension_numbers = #tpu.dot_dimension_numbers<[1], [0], [0], [1], [0, 0, 1, 1], [], []>} : vector<8x8xf32>, vector<8x16xf32>, vector<8x16xf32> -> vector<8x16xf32>
    %124 = vector.extract_strided_slice %39 {offsets = [16, 0], sizes = [16, 128], strides = [1, 1]} : vector<128x128xf32> to vector<16x128xf32>
    %cst_42 = arith.constant dense<0.000000e+00> : vector<8x128xf32>
    %125 = tpu.matmul %123, %124, %cst_42 {dimension_numbers = #tpu.dot_dimension_numbers<[1], [0], [0], [1], [0, 0, 1, 1], [], []>} : vector<8x16xf32>, vector<16x128xf32>, vector<8x128xf32> -> vector<8x128xf32>
    %126 = arith.addf %106, %125 : vector<8x128xf32>
    %c8 = arith.constant 8 : index
    %c0_43 = arith.constant 0 : index
    %127 = vector.load %arg21[%c8, %c0_43] : memref<16x128xf32, #tpu.memory_space<vmem>>, vector<8x128xf32>
    tpu.vector_store %arg21[%c8, %c0_43], %126 {strides = array<i32>} : memref<16x128xf32, #tpu.memory_space<vmem>>, vector<8x128xf32>,
    %c0_44 = arith.constant 0 : index
    %c0_45 = arith.constant 0 : index
    %128 = vector.load %arg21[%c0_44, %c0_45] : memref<16x128xf32, #tpu.memory_space<vmem>>, vector<16x128xf32>
    %c0_46 = arith.constant 0 : index
    %c0_47 = arith.constant 0 : index
    %c0_48 = arith.constant 0 : index
    %129 = vector.load %arg7[%c0_46, %c0_47, %c0_48] : memref<2x1x128xf32, #tpu.memory_space<vmem>>, vector<1x1x128xf32>
    %130 = vector.shape_cast %129 : vector<1x1x128xf32> to vector<1x128xf32>
    %131 = vector.broadcast %130 : vector<1x128xf32> to vector<16x128xf32>
    %132 = arith.addf %128, %131 : vector<16x128xf32>
    %c0_49 = arith.constant 0 : index
    %c0_50 = arith.constant 0 : index
    %c0_51 = arith.constant 0 : index
    %133 = vector.load %arg8[%c0_49, %c0_50, %c0_51] : memref<2x1x128xf32, #tpu.memory_space<vmem>>, vector<1x1x128xf32>
    %134 = vector.shape_cast %133 : vector<1x1x128xf32> to vector<1x128xf32>
    %c0_52 = arith.constant 0 : index
    %c0_53 = arith.constant 0 : index
    %c0_54 = arith.constant 0 : index
    %135 = vector.load %arg9[%c0_52, %c0_53, %c0_54] : memref<2x1x128xf32, #tpu.memory_space<vmem>>, vector<1x1x128xf32>
    %136 = vector.shape_cast %135 : vector<1x1x128xf32> to vector<1x128xf32>
    %cst_55 = arith.constant dense<0.000000e+00> : vector<16xf32>
    %137 = vector.multi_reduction <add>, %132, %cst_55 [1] : vector<16x128xf32> to vector<16xf32>
    %138 = vector.shape_cast %137 : vector<16xf32> to vector<16x1xf32>
    %cst_56 = arith.constant 3.125000e-02 : f32
    %139 = vector.broadcast %cst_56 : f32 to vector<16x1xf32>
    %140 = arith.mulf %138, %139 : vector<16x1xf32>
    %141 = vector.broadcast %140 : vector<16x1xf32> to vector<16x128xf32>
    %142 = arith.subf %132, %141 : vector<16x128xf32>
    %143 = vector.broadcast %4 : vector<1x128xf32> to vector<16x128xf32>
    %144 = arith.mulf %142, %143 : vector<16x128xf32>
    %145 = arith.mulf %144, %144 : vector<16x128xf32>
    %cst_57 = arith.constant dense<0.000000e+00> : vector<16xf32>
    %146 = vector.multi_reduction <add>, %145, %cst_57 [1] : vector<16x128xf32> to vector<16xf32>
    %147 = vector.shape_cast %146 : vector<16xf32> to vector<16x1xf32>
    %cst_58 = arith.constant 3.125000e-02 : f32
    %148 = vector.broadcast %cst_58 : f32 to vector<16x1xf32>
    %149 = arith.mulf %147, %148 : vector<16x1xf32>
    %cst_59 = arith.constant 9.99999996E-13 : f32
    %150 = vector.broadcast %cst_59 : f32 to vector<16x1xf32>
    %151 = arith.addf %149, %150 : vector<16x1xf32>
    %152 = math.rsqrt %151 : vector<16x1xf32>
    %153 = vector.broadcast %152 : vector<16x1xf32> to vector<16x128xf32>
    %154 = arith.mulf %144, %153 : vector<16x128xf32>
    %155 = vector.broadcast %134 : vector<1x128xf32> to vector<16x128xf32>
    %156 = arith.mulf %154, %155 : vector<16x128xf32>
    %157 = vector.broadcast %136 : vector<1x128xf32> to vector<16x128xf32>
    %158 = arith.addf %156, %157 : vector<16x128xf32>
    %c0_60 = arith.constant 0 : index
    %c0_61 = arith.constant 0 : index
    %c0_62 = arith.constant 0 : index
    %159 = vector.load %arg10[%c0_60, %c0_61, %c0_62] : memref<2x128x128xf32, #tpu.memory_space<vmem>>, vector<1x128x128xf32>
    %160 = vector.shape_cast %159 : vector<1x128x128xf32> to vector<128x128xf32>
    %cst_63 = arith.constant dense<0.000000e+00> : vector<16x128xf32>
    %161 = tpu.matmul %158, %160, %cst_63 {dimension_numbers = #tpu.dot_dimension_numbers<[1], [0], [0], [1], [0, 0, 1, 1], [], []>} : vector<16x128xf32>, vector<128x128xf32>, vector<16x128xf32> -> vector<16x128xf32>
    %c0_64 = arith.constant 0 : index
    %c0_65 = arith.constant 0 : index
    %c0_66 = arith.constant 0 : index
    %162 = vector.load %arg11[%c0_64, %c0_65, %c0_66] : memref<2x1x128xf32, #tpu.memory_space<vmem>>, vector<1x1x128xf32>
    %163 = vector.shape_cast %162 : vector<1x1x128xf32> to vector<1x128xf32>
    %164 = vector.broadcast %163 : vector<1x128xf32> to vector<16x128xf32>
    %165 = arith.addf %161, %164 : vector<16x128xf32>
    %cst_67 = arith.constant 5.000000e-01 : f32
    %166 = vector.broadcast %cst_67 : f32 to vector<16x128xf32>
    %167 = arith.mulf %166, %165 : vector<16x128xf32>
    %cst_68 = arith.constant 4.471500e-02 : f32
    %168 = vector.broadcast %cst_68 : f32 to vector<16x128xf32>
    %169 = arith.mulf %168, %165 : vector<16x128xf32>
    %170 = arith.mulf %169, %165 : vector<16x128xf32>
    %171 = arith.mulf %170, %165 : vector<16x128xf32>
    %172 = arith.addf %165, %171 : vector<16x128xf32>
    %cst_69 = arith.constant 0.797884583 : f32
    %173 = vector.broadcast %cst_69 : f32 to vector<16x128xf32>
    %174 = arith.mulf %173, %172 : vector<16x128xf32>
    %175 = math.tanh %174 : vector<16x128xf32>
    %cst_70 = arith.constant 1.000000e+00 : f32
    %176 = vector.broadcast %cst_70 : f32 to vector<16x128xf32>
    %177 = arith.addf %176, %175 : vector<16x128xf32>
    %178 = arith.mulf %167, %177 : vector<16x128xf32>
    %c0_71 = arith.constant 0 : index
    %c0_72 = arith.constant 0 : index
    %c0_73 = arith.constant 0 : index
    %179 = vector.load %arg12[%c0_71, %c0_72, %c0_73] : memref<2x128x128xf32, #tpu.memory_space<vmem>>, vector<1x128x128xf32>
    %180 = vector.shape_cast %179 : vector<1x128x128xf32> to vector<128x128xf32>
    %cst_74 = arith.constant dense<0.000000e+00> : vector<16x128xf32>
    %181 = tpu.matmul %178, %180, %cst_74 {dimension_numbers = #tpu.dot_dimension_numbers<[1], [0], [0], [1], [0, 0, 1, 1], [], []>} : vector<16x128xf32>, vector<128x128xf32>, vector<16x128xf32> -> vector<16x128xf32>
    %c0_75 = arith.constant 0 : index
    %c0_76 = arith.constant 0 : index
    %c0_77 = arith.constant 0 : index
    %182 = vector.load %arg13[%c0_75, %c0_76, %c0_77] : memref<2x1x128xf32, #tpu.memory_space<vmem>>, vector<1x1x128xf32>
    %183 = vector.shape_cast %182 : vector<1x1x128xf32> to vector<1x128xf32>
    %184 = vector.broadcast %183 : vector<1x128xf32> to vector<16x128xf32>
    %185 = arith.addf %181, %184 : vector<16x128xf32>
    %186 = arith.addf %158, %185 : vector<16x128xf32>
    %c0_78 = arith.constant 0 : index
    %c0_79 = arith.constant 0 : index
    %c0_80 = arith.constant 0 : index
    %187 = vector.load %arg14[%c0_78, %c0_79, %c0_80] : memref<2x1x128xf32, #tpu.memory_space<vmem>>, vector<1x1x128xf32>
    %188 = vector.shape_cast %187 : vector<1x1x128xf32> to vector<1x128xf32>
    %c0_81 = arith.constant 0 : index
    %c0_82 = arith.constant 0 : index
    %c0_83 = arith.constant 0 : index
    %189 = vector.load %arg15[%c0_81, %c0_82, %c0_83] : memref<2x1x128xf32, #tpu.memory_space<vmem>>, vector<1x1x128xf32>
    %190 = vector.shape_cast %189 : vector<1x1x128xf32> to vector<1x128xf32>
    %cst_84 = arith.constant dense<0.000000e+00> : vector<16xf32>
    %191 = vector.multi_reduction <add>, %186, %cst_84 [1] : vector<16x128xf32> to vector<16xf32>
    %192 = vector.shape_cast %191 : vector<16xf32> to vector<16x1xf32>
    %cst_85 = arith.constant 3.125000e-02 : f32
    %193 = vector.broadcast %cst_85 : f32 to vector<16x1xf32>
    %194 = arith.mulf %192, %193 : vector<16x1xf32>
    %195 = vector.broadcast %194 : vector<16x1xf32> to vector<16x128xf32>
    %196 = arith.subf %186, %195 : vector<16x128xf32>
    %197 = vector.broadcast %4 : vector<1x128xf32> to vector<16x128xf32>
    %198 = arith.mulf %196, %197 : vector<16x128xf32>
    %199 = arith.mulf %198, %198 : vector<16x128xf32>
    %cst_86 = arith.constant dense<0.000000e+00> : vector<16xf32>
    %200 = vector.multi_reduction <add>, %199, %cst_86 [1] : vector<16x128xf32> to vector<16xf32>
    %201 = vector.shape_cast %200 : vector<16xf32> to vector<16x1xf32>
    %cst_87 = arith.constant 3.125000e-02 : f32
    %202 = vector.broadcast %cst_87 : f32 to vector<16x1xf32>
    %203 = arith.mulf %201, %202 : vector<16x1xf32>
    %cst_88 = arith.constant 9.99999996E-13 : f32
    %204 = vector.broadcast %cst_88 : f32 to vector<16x1xf32>
    %205 = arith.addf %203, %204 : vector<16x1xf32>
    %206 = math.rsqrt %205 : vector<16x1xf32>
    %207 = vector.broadcast %206 : vector<16x1xf32> to vector<16x128xf32>
    %208 = arith.mulf %198, %207 : vector<16x128xf32>
    %209 = vector.broadcast %188 : vector<1x128xf32> to vector<16x128xf32>
    %210 = arith.mulf %208, %209 : vector<16x128xf32>
    %211 = vector.broadcast %190 : vector<1x128xf32> to vector<16x128xf32>
    %212 = arith.addf %210, %211 : vector<16x128xf32>
    %c1 = arith.constant 1 : index
    %c0_89 = arith.constant 0 : index
    %c0_90 = arith.constant 0 : index
    %213 = vector.load %arg4[%c1, %c0_89, %c0_90] : memref<2x128x384xf32, #tpu.memory_space<vmem>>, vector<1x128x384xf32>
    %214 = vector.shape_cast %213 : vector<1x128x384xf32> to vector<128x384xf32>
    %cst_91 = arith.constant dense<0.000000e+00> : vector<16x384xf32>
    %215 = tpu.matmul %212, %214, %cst_91 {dimension_numbers = #tpu.dot_dimension_numbers<[1], [0], [0], [1], [0, 0, 1, 1], [], []>} : vector<16x128xf32>, vector<128x384xf32>, vector<16x384xf32> -> vector<16x384xf32>
    %c1_92 = arith.constant 1 : index
    %c0_93 = arith.constant 0 : index
    %c0_94 = arith.constant 0 : index
    %216 = vector.load %arg5[%c1_92, %c0_93, %c0_94] : memref<2x1x384xf32, #tpu.memory_space<vmem>>, vector<1x1x384xf32>
    %217 = vector.shape_cast %216 : vector<1x1x384xf32> to vector<1x384xf32>
    %218 = vector.broadcast %217 : vector<1x384xf32> to vector<16x384xf32>
    %219 = arith.addf %215, %218 : vector<16x384xf32>
    %c1_95 = arith.constant 1 : index
    %c0_96 = arith.constant 0 : index
    %c0_97 = arith.constant 0 : index
    %220 = vector.load %arg6[%c1_95, %c0_96, %c0_97] : memref<2x128x128xf32, #tpu.memory_space<vmem>>, vector<1x128x128xf32>
    %221 = vector.shape_cast %220 : vector<1x128x128xf32> to vector<128x128xf32>
    %222 = vector.extract_strided_slice %219 {offsets = [0, 0], sizes = [8, 384], strides = [1, 1]} : vector<16x384xf32> to vector<8x384xf32>
    %223 = vector.extract_strided_slice %5 {offsets = [0, 0], sizes = [1, 8], strides = [1, 1]} : vector<2x8xf32> to vector<1x8xf32>
    %224 = vector.extract_strided_slice %212 {offsets = [0, 0], sizes = [8, 128], strides = [1, 1]} : vector<16x128xf32> to vector<8x128xf32>
    %225 = vector.extract_strided_slice %222 {offsets = [0, 0], sizes = [8, 16], strides = [1, 1]} : vector<8x384xf32> to vector<8x16xf32>
    %226 = vector.extract_strided_slice %222 {offsets = [0, 128], sizes = [8, 16], strides = [1, 1]} : vector<8x384xf32> to vector<8x16xf32>
    %227 = vector.extract_strided_slice %222 {offsets = [0, 256], sizes = [8, 16], strides = [1, 1]} : vector<8x384xf32> to vector<8x16xf32>
    %cst_98 = arith.constant dense<0.000000e+00> : vector<8x8xf32>
    %228 = tpu.matmul %225, %226, %cst_98 {dimension_numbers = #tpu.dot_dimension_numbers<[1], [1], [0], [0], [0, 0, 1, 0], [], []>} : vector<8x16xf32>, vector<8x16xf32>, vector<8x8xf32> -> vector<8x8xf32>
    %229 = vector.broadcast %223 : vector<1x8xf32> to vector<8x8xf32>
    %230 = arith.addf %228, %229 : vector<8x8xf32>
    %cst_99 = arith.constant dense<0xFF800000> : vector<8xf32>
    %231 = vector.multi_reduction <maximumf>, %230, %cst_99 [1] : vector<8x8xf32> to vector<8xf32>
    %232 = vector.shape_cast %231 : vector<8xf32> to vector<8x1xf32>
    %233 = vector.broadcast %232 : vector<8x1xf32> to vector<8x8xf32>
    %234 = arith.subf %230, %233 : vector<8x8xf32>
    %235 = math.exp %234 : vector<8x8xf32>
    %cst_100 = arith.constant dense<0.000000e+00> : vector<8xf32>
    %236 = vector.multi_reduction <add>, %235, %cst_100 [1] : vector<8x8xf32> to vector<8xf32>
    %237 = vector.shape_cast %236 : vector<8xf32> to vector<8x1xf32>
    %238 = tpu.reciprocal %237 {approx = true} : vector<8x1xf32> -> vector<8x1xf32>
    %239 = vector.broadcast %238 : vector<8x1xf32> to vector<8x8xf32>
    %240 = arith.mulf %235, %239 : vector<8x8xf32>
    %cst_101 = arith.constant dense<0.000000e+00> : vector<8x16xf32>
    %241 = tpu.matmul %240, %227, %cst_101 {dimension_numbers = #tpu.dot_dimension_numbers<[1], [0], [0], [1], [0, 0, 1, 1], [], []>} : vector<8x8xf32>, vector<8x16xf32>, vector<8x16xf32> -> vector<8x16xf32>
    %242 = vector.extract_strided_slice %221 {offsets = [0, 0], sizes = [16, 128], strides = [1, 1]} : vector<128x128xf32> to vector<16x128xf32>
    %cst_102 = arith.constant dense<0.000000e+00> : vector<8x128xf32>
    %243 = tpu.matmul %241, %242, %cst_102 {dimension_numbers = #tpu.dot_dimension_numbers<[1], [0], [0], [1], [0, 0, 1, 1], [], []>} : vector<8x16xf32>, vector<16x128xf32>, vector<8x128xf32> -> vector<8x128xf32>
    %244 = arith.addf %224, %243 : vector<8x128xf32>
    %245 = vector.extract_strided_slice %222 {offsets = [0, 16], sizes = [8, 16], strides = [1, 1]} : vector<8x384xf32> to vector<8x16xf32>
    %246 = vector.extract_strided_slice %222 {offsets = [0, 144], sizes = [8, 16], strides = [1, 1]} : vector<8x384xf32> to vector<8x16xf32>
    %247 = vector.extract_strided_slice %222 {offsets = [0, 272], sizes = [8, 16], strides = [1, 1]} : vector<8x384xf32> to vector<8x16xf32>
    %cst_103 = arith.constant dense<0.000000e+00> : vector<8x8xf32>
    %248 = tpu.matmul %245, %246, %cst_103 {dimension_numbers = #tpu.dot_dimension_numbers<[1], [1], [0], [0], [0, 0, 1, 0], [], []>} : vector<8x16xf32>, vector<8x16xf32>, vector<8x8xf32> -> vector<8x8xf32>
    %249 = vector.broadcast %223 : vector<1x8xf32> to vector<8x8xf32>
    %250 = arith.addf %248, %249 : vector<8x8xf32>
    %cst_104 = arith.constant dense<0xFF800000> : vector<8xf32>
    %251 = vector.multi_reduction <maximumf>, %250, %cst_104 [1] : vector<8x8xf32> to vector<8xf32>
    %252 = vector.shape_cast %251 : vector<8xf32> to vector<8x1xf32>
    %253 = vector.broadcast %252 : vector<8x1xf32> to vector<8x8xf32>
    %254 = arith.subf %250, %253 : vector<8x8xf32>
    %255 = math.exp %254 : vector<8x8xf32>
    %cst_105 = arith.constant dense<0.000000e+00> : vector<8xf32>
    %256 = vector.multi_reduction <add>, %255, %cst_105 [1] : vector<8x8xf32> to vector<8xf32>
    %257 = vector.shape_cast %256 : vector<8xf32> to vector<8x1xf32>
    %258 = tpu.reciprocal %257 {approx = true} : vector<8x1xf32> -> vector<8x1xf32>
    %259 = vector.broadcast %258 : vector<8x1xf32> to vector<8x8xf32>
    %260 = arith.mulf %255, %259 : vector<8x8xf32>
    %cst_106 = arith.constant dense<0.000000e+00> : vector<8x16xf32>
    %261 = tpu.matmul %260, %247, %cst_106 {dimension_numbers = #tpu.dot_dimension_numbers<[1], [0], [0], [1], [0, 0, 1, 1], [], []>} : vector<8x8xf32>, vector<8x16xf32>, vector<8x16xf32> -> vector<8x16xf32>
    %262 = vector.extract_strided_slice %221 {offsets = [16, 0], sizes = [16, 128], strides = [1, 1]} : vector<128x128xf32> to vector<16x128xf32>
    %cst_107 = arith.constant dense<0.000000e+00> : vector<8x128xf32>
    %263 = tpu.matmul %261, %262, %cst_107 {dimension_numbers = #tpu.dot_dimension_numbers<[1], [0], [0], [1], [0, 0, 1, 1], [], []>} : vector<8x16xf32>, vector<16x128xf32>, vector<8x128xf32> -> vector<8x128xf32>
    %264 = arith.addf %244, %263 : vector<8x128xf32>
    %c0_108 = arith.constant 0 : index
    %c0_109 = arith.constant 0 : index
    %265 = vector.load %arg21[%c0_108, %c0_109] : memref<16x128xf32, #tpu.memory_space<vmem>>, vector<8x128xf32>
    tpu.vector_store %arg21[%c0_108, %c0_109], %264 {strides = array<i32>} : memref<16x128xf32, #tpu.memory_space<vmem>>, vector<8x128xf32>,
    %266 = vector.extract_strided_slice %219 {offsets = [8, 0], sizes = [8, 384], strides = [1, 1]} : vector<16x384xf32> to vector<8x384xf32>
    %267 = vector.extract_strided_slice %5 {offsets = [1, 0], sizes = [1, 8], strides = [1, 1]} : vector<2x8xf32> to vector<1x8xf32>
    %268 = vector.extract_strided_slice %212 {offsets = [8, 0], sizes = [8, 128], strides = [1, 1]} : vector<16x128xf32> to vector<8x128xf32>
    %269 = vector.extract_strided_slice %266 {offsets = [0, 0], sizes = [8, 16], strides = [1, 1]} : vector<8x384xf32> to vector<8x16xf32>
    %270 = vector.extract_strided_slice %266 {offsets = [0, 128], sizes = [8, 16], strides = [1, 1]} : vector<8x384xf32> to vector<8x16xf32>
    %271 = vector.extract_strided_slice %266 {offsets = [0, 256], sizes = [8, 16], strides = [1, 1]} : vector<8x384xf32> to vector<8x16xf32>
    %cst_110 = arith.constant dense<0.000000e+00> : vector<8x8xf32>
    %272 = tpu.matmul %269, %270, %cst_110 {dimension_numbers = #tpu.dot_dimension_numbers<[1], [1], [0], [0], [0, 0, 1, 0], [], []>} : vector<8x16xf32>, vector<8x16xf32>, vector<8x8xf32> -> vector<8x8xf32>
    %273 = vector.broadcast %267 : vector<1x8xf32> to vector<8x8xf32>
    %274 = arith.addf %272, %273 : vector<8x8xf32>
    %cst_111 = arith.constant dense<0xFF800000> : vector<8xf32>
    %275 = vector.multi_reduction <maximumf>, %274, %cst_111 [1] : vector<8x8xf32> to vector<8xf32>
    %276 = vector.shape_cast %275 : vector<8xf32> to vector<8x1xf32>
    %277 = vector.broadcast %276 : vector<8x1xf32> to vector<8x8xf32>
    %278 = arith.subf %274, %277 : vector<8x8xf32>
    %279 = math.exp %278 : vector<8x8xf32>
    %cst_112 = arith.constant dense<0.000000e+00> : vector<8xf32>
    %280 = vector.multi_reduction <add>, %279, %cst_112 [1] : vector<8x8xf32> to vector<8xf32>
    %281 = vector.shape_cast %280 : vector<8xf32> to vector<8x1xf32>
    %282 = tpu.reciprocal %281 {approx = true} : vector<8x1xf32> -> vector<8x1xf32>
    %283 = vector.broadcast %282 : vector<8x1xf32> to vector<8x8xf32>
    %284 = arith.mulf %279, %283 : vector<8x8xf32>
    %cst_113 = arith.constant dense<0.000000e+00> : vector<8x16xf32>
    %285 = tpu.matmul %284, %271, %cst_113 {dimension_numbers = #tpu.dot_dimension_numbers<[1], [0], [0], [1], [0, 0, 1, 1], [], []>} : vector<8x8xf32>, vector<8x16xf32>, vector<8x16xf32> -> vector<8x16xf32>
    %286 = vector.extract_strided_slice %221 {offsets = [0, 0], sizes = [16, 128], strides = [1, 1]} : vector<128x128xf32> to vector<16x128xf32>
    %cst_114 = arith.constant dense<0.000000e+00> : vector<8x128xf32>
    %287 = tpu.matmul %285, %286, %cst_114 {dimension_numbers = #tpu.dot_dimension_numbers<[1], [0], [0], [1], [0, 0, 1, 1], [], []>} : vector<8x16xf32>, vector<16x128xf32>, vector<8x128xf32> -> vector<8x128xf32>
    %288 = arith.addf %268, %287 : vector<8x128xf32>
    %289 = vector.extract_strided_slice %266 {offsets = [0, 16], sizes = [8, 16], strides = [1, 1]} : vector<8x384xf32> to vector<8x16xf32>
    %290 = vector.extract_strided_slice %266 {offsets = [0, 144], sizes = [8, 16], strides = [1, 1]} : vector<8x384xf32> to vector<8x16xf32>
    %291 = vector.extract_strided_slice %266 {offsets = [0, 272], sizes = [8, 16], strides = [1, 1]} : vector<8x384xf32> to vector<8x16xf32>
    %cst_115 = arith.constant dense<0.000000e+00> : vector<8x8xf32>
    %292 = tpu.matmul %289, %290, %cst_115 {dimension_numbers = #tpu.dot_dimension_numbers<[1], [1], [0], [0], [0, 0, 1, 0], [], []>} : vector<8x16xf32>, vector<8x16xf32>, vector<8x8xf32> -> vector<8x8xf32>
    %293 = vector.broadcast %267 : vector<1x8xf32> to vector<8x8xf32>
    %294 = arith.addf %292, %293 : vector<8x8xf32>
    %cst_116 = arith.constant dense<0xFF800000> : vector<8xf32>
    %295 = vector.multi_reduction <maximumf>, %294, %cst_116 [1] : vector<8x8xf32> to vector<8xf32>
    %296 = vector.shape_cast %295 : vector<8xf32> to vector<8x1xf32>
    %297 = vector.broadcast %296 : vector<8x1xf32> to vector<8x8xf32>
    %298 = arith.subf %294, %297 : vector<8x8xf32>
    %299 = math.exp %298 : vector<8x8xf32>
    %cst_117 = arith.constant dense<0.000000e+00> : vector<8xf32>
    %300 = vector.multi_reduction <add>, %299, %cst_117 [1] : vector<8x8xf32> to vector<8xf32>
    %301 = vector.shape_cast %300 : vector<8xf32> to vector<8x1xf32>
    %302 = tpu.reciprocal %301 {approx = true} : vector<8x1xf32> -> vector<8x1xf32>
    %303 = vector.broadcast %302 : vector<8x1xf32> to vector<8x8xf32>
    %304 = arith.mulf %299, %303 : vector<8x8xf32>
    %cst_118 = arith.constant dense<0.000000e+00> : vector<8x16xf32>
    %305 = tpu.matmul %304, %291, %cst_118 {dimension_numbers = #tpu.dot_dimension_numbers<[1], [0], [0], [1], [0, 0, 1, 1], [], []>} : vector<8x8xf32>, vector<8x16xf32>, vector<8x16xf32> -> vector<8x16xf32>
    %306 = vector.extract_strided_slice %221 {offsets = [16, 0], sizes = [16, 128], strides = [1, 1]} : vector<128x128xf32> to vector<16x128xf32>
    %cst_119 = arith.constant dense<0.000000e+00> : vector<8x128xf32>
    %307 = tpu.matmul %305, %306, %cst_119 {dimension_numbers = #tpu.dot_dimension_numbers<[1], [0], [0], [1], [0, 0, 1, 1], [], []>} : vector<8x16xf32>, vector<16x128xf32>, vector<8x128xf32> -> vector<8x128xf32>
    %308 = arith.addf %288, %307 : vector<8x128xf32>
    %c8_120 = arith.constant 8 : index
    %c0_121 = arith.constant 0 : index
    %309 = vector.load %arg21[%c8_120, %c0_121] : memref<16x128xf32, #tpu.memory_space<vmem>>, vector<8x128xf32>
    tpu.vector_store %arg21[%c8_120, %c0_121], %308 {strides = array<i32>} : memref<16x128xf32, #tpu.memory_space<vmem>>, vector<8x128xf32>,
    %c0_122 = arith.constant 0 : index
    %c0_123 = arith.constant 0 : index
    %310 = vector.load %arg21[%c0_122, %c0_123] : memref<16x128xf32, #tpu.memory_space<vmem>>, vector<16x128xf32>
    %c1_124 = arith.constant 1 : index
    %c0_125 = arith.constant 0 : index
    %c0_126 = arith.constant 0 : index
    %311 = vector.load %arg7[%c1_124, %c0_125, %c0_126] : memref<2x1x128xf32, #tpu.memory_space<vmem>>, vector<1x1x128xf32>
    %312 = vector.shape_cast %311 : vector<1x1x128xf32> to vector<1x128xf32>
    %313 = vector.broadcast %312 : vector<1x128xf32> to vector<16x128xf32>
    %314 = arith.addf %310, %313 : vector<16x128xf32>
    %c1_127 = arith.constant 1 : index
    %c0_128 = arith.constant 0 : index
    %c0_129 = arith.constant 0 : index
    %315 = vector.load %arg8[%c1_127, %c0_128, %c0_129] : memref<2x1x128xf32, #tpu.memory_space<vmem>>, vector<1x1x128xf32>
    %316 = vector.shape_cast %315 : vector<1x1x128xf32> to vector<1x128xf32>
    %c1_130 = arith.constant 1 : index
    %c0_131 = arith.constant 0 : index
    %c0_132 = arith.constant 0 : index
    %317 = vector.load %arg9[%c1_130, %c0_131, %c0_132] : memref<2x1x128xf32, #tpu.memory_space<vmem>>, vector<1x1x128xf32>
    %318 = vector.shape_cast %317 : vector<1x1x128xf32> to vector<1x128xf32>
    %cst_133 = arith.constant dense<0.000000e+00> : vector<16xf32>
    %319 = vector.multi_reduction <add>, %314, %cst_133 [1] : vector<16x128xf32> to vector<16xf32>
    %320 = vector.shape_cast %319 : vector<16xf32> to vector<16x1xf32>
    %cst_134 = arith.constant 3.125000e-02 : f32
    %321 = vector.broadcast %cst_134 : f32 to vector<16x1xf32>
    %322 = arith.mulf %320, %321 : vector<16x1xf32>
    %323 = vector.broadcast %322 : vector<16x1xf32> to vector<16x128xf32>
    %324 = arith.subf %314, %323 : vector<16x128xf32>
    %325 = vector.broadcast %4 : vector<1x128xf32> to vector<16x128xf32>
    %326 = arith.mulf %324, %325 : vector<16x128xf32>
    %327 = arith.mulf %326, %326 : vector<16x128xf32>
    %cst_135 = arith.constant dense<0.000000e+00> : vector<16xf32>
    %328 = vector.multi_reduction <add>, %327, %cst_135 [1] : vector<16x128xf32> to vector<16xf32>
    %329 = vector.shape_cast %328 : vector<16xf32> to vector<16x1xf32>
    %cst_136 = arith.constant 3.125000e-02 : f32
    %330 = vector.broadcast %cst_136 : f32 to vector<16x1xf32>
    %331 = arith.mulf %329, %330 : vector<16x1xf32>
    %cst_137 = arith.constant 9.99999996E-13 : f32
    %332 = vector.broadcast %cst_137 : f32 to vector<16x1xf32>
    %333 = arith.addf %331, %332 : vector<16x1xf32>
    %334 = math.rsqrt %333 : vector<16x1xf32>
    %335 = vector.broadcast %334 : vector<16x1xf32> to vector<16x128xf32>
    %336 = arith.mulf %326, %335 : vector<16x128xf32>
    %337 = vector.broadcast %316 : vector<1x128xf32> to vector<16x128xf32>
    %338 = arith.mulf %336, %337 : vector<16x128xf32>
    %339 = vector.broadcast %318 : vector<1x128xf32> to vector<16x128xf32>
    %340 = arith.addf %338, %339 : vector<16x128xf32>
    %c1_138 = arith.constant 1 : index
    %c0_139 = arith.constant 0 : index
    %c0_140 = arith.constant 0 : index
    %341 = vector.load %arg10[%c1_138, %c0_139, %c0_140] : memref<2x128x128xf32, #tpu.memory_space<vmem>>, vector<1x128x128xf32>
    %342 = vector.shape_cast %341 : vector<1x128x128xf32> to vector<128x128xf32>
    %cst_141 = arith.constant dense<0.000000e+00> : vector<16x128xf32>
    %343 = tpu.matmul %340, %342, %cst_141 {dimension_numbers = #tpu.dot_dimension_numbers<[1], [0], [0], [1], [0, 0, 1, 1], [], []>} : vector<16x128xf32>, vector<128x128xf32>, vector<16x128xf32> -> vector<16x128xf32>
    %c1_142 = arith.constant 1 : index
    %c0_143 = arith.constant 0 : index
    %c0_144 = arith.constant 0 : index
    %344 = vector.load %arg11[%c1_142, %c0_143, %c0_144] : memref<2x1x128xf32, #tpu.memory_space<vmem>>, vector<1x1x128xf32>
    %345 = vector.shape_cast %344 : vector<1x1x128xf32> to vector<1x128xf32>
    %346 = vector.broadcast %345 : vector<1x128xf32> to vector<16x128xf32>
    %347 = arith.addf %343, %346 : vector<16x128xf32>
    %cst_145 = arith.constant 5.000000e-01 : f32
    %348 = vector.broadcast %cst_145 : f32 to vector<16x128xf32>
    %349 = arith.mulf %348, %347 : vector<16x128xf32>
    %cst_146 = arith.constant 4.471500e-02 : f32
    %350 = vector.broadcast %cst_146 : f32 to vector<16x128xf32>
    %351 = arith.mulf %350, %347 : vector<16x128xf32>
    %352 = arith.mulf %351, %347 : vector<16x128xf32>
    %353 = arith.mulf %352, %347 : vector<16x128xf32>
    %354 = arith.addf %347, %353 : vector<16x128xf32>
    %cst_147 = arith.constant 0.797884583 : f32
    %355 = vector.broadcast %cst_147 : f32 to vector<16x128xf32>
    %356 = arith.mulf %355, %354 : vector<16x128xf32>
    %357 = math.tanh %356 : vector<16x128xf32>
    %cst_148 = arith.constant 1.000000e+00 : f32
    %358 = vector.broadcast %cst_148 : f32 to vector<16x128xf32>
    %359 = arith.addf %358, %357 : vector<16x128xf32>
    %360 = arith.mulf %349, %359 : vector<16x128xf32>
    %c1_149 = arith.constant 1 : index
    %c0_150 = arith.constant 0 : index
    %c0_151 = arith.constant 0 : index
    %361 = vector.load %arg12[%c1_149, %c0_150, %c0_151] : memref<2x128x128xf32, #tpu.memory_space<vmem>>, vector<1x128x128xf32>
    %362 = vector.shape_cast %361 : vector<1x128x128xf32> to vector<128x128xf32>
    %cst_152 = arith.constant dense<0.000000e+00> : vector<16x128xf32>
    %363 = tpu.matmul %360, %362, %cst_152 {dimension_numbers = #tpu.dot_dimension_numbers<[1], [0], [0], [1], [0, 0, 1, 1], [], []>} : vector<16x128xf32>, vector<128x128xf32>, vector<16x128xf32> -> vector<16x128xf32>
    %c1_153 = arith.constant 1 : index
    %c0_154 = arith.constant 0 : index
    %c0_155 = arith.constant 0 : index
    %364 = vector.load %arg13[%c1_153, %c0_154, %c0_155] : memref<2x1x128xf32, #tpu.memory_space<vmem>>, vector<1x1x128xf32>
    %365 = vector.shape_cast %364 : vector<1x1x128xf32> to vector<1x128xf32>
    %366 = vector.broadcast %365 : vector<1x128xf32> to vector<16x128xf32>
    %367 = arith.addf %363, %366 : vector<16x128xf32>
    %368 = arith.addf %340, %367 : vector<16x128xf32>
    %c1_156 = arith.constant 1 : index
    %c0_157 = arith.constant 0 : index
    %c0_158 = arith.constant 0 : index
    %369 = vector.load %arg14[%c1_156, %c0_157, %c0_158] : memref<2x1x128xf32, #tpu.memory_space<vmem>>, vector<1x1x128xf32>
    %370 = vector.shape_cast %369 : vector<1x1x128xf32> to vector<1x128xf32>
    %c1_159 = arith.constant 1 : index
    %c0_160 = arith.constant 0 : index
    %c0_161 = arith.constant 0 : index
    %371 = vector.load %arg15[%c1_159, %c0_160, %c0_161] : memref<2x1x128xf32, #tpu.memory_space<vmem>>, vector<1x1x128xf32>
    %372 = vector.shape_cast %371 : vector<1x1x128xf32> to vector<1x128xf32>
    %cst_162 = arith.constant dense<0.000000e+00> : vector<16xf32>
    %373 = vector.multi_reduction <add>, %368, %cst_162 [1] : vector<16x128xf32> to vector<16xf32>
    %374 = vector.shape_cast %373 : vector<16xf32> to vector<16x1xf32>
    %cst_163 = arith.constant 3.125000e-02 : f32
    %375 = vector.broadcast %cst_163 : f32 to vector<16x1xf32>
    %376 = arith.mulf %374, %375 : vector<16x1xf32>
    %377 = vector.broadcast %376 : vector<16x1xf32> to vector<16x128xf32>
    %378 = arith.subf %368, %377 : vector<16x128xf32>
    %379 = vector.broadcast %4 : vector<1x128xf32> to vector<16x128xf32>
    %380 = arith.mulf %378, %379 : vector<16x128xf32>
    %381 = arith.mulf %380, %380 : vector<16x128xf32>
    %cst_164 = arith.constant dense<0.000000e+00> : vector<16xf32>
    %382 = vector.multi_reduction <add>, %381, %cst_164 [1] : vector<16x128xf32> to vector<16xf32>
    %383 = vector.shape_cast %382 : vector<16xf32> to vector<16x1xf32>
    %cst_165 = arith.constant 3.125000e-02 : f32
    %384 = vector.broadcast %cst_165 : f32 to vector<16x1xf32>
    %385 = arith.mulf %383, %384 : vector<16x1xf32>
    %cst_166 = arith.constant 9.99999996E-13 : f32
    %386 = vector.broadcast %cst_166 : f32 to vector<16x1xf32>
    %387 = arith.addf %385, %386 : vector<16x1xf32>
    %388 = math.rsqrt %387 : vector<16x1xf32>
    %389 = vector.broadcast %388 : vector<16x1xf32> to vector<16x128xf32>
    %390 = arith.mulf %380, %389 : vector<16x128xf32>
    %391 = vector.broadcast %370 : vector<1x128xf32> to vector<16x128xf32>
    %392 = arith.mulf %390, %391 : vector<16x128xf32>
    %393 = vector.broadcast %372 : vector<1x128xf32> to vector<16x128xf32>
    %394 = arith.addf %392, %393 : vector<16x128xf32>
    %cst_167 = arith.constant 0.000000e+00 : f32
    %395 = vector.broadcast %cst_167 : f32 to vector<8x128xf32>
    %c0_168 = arith.constant 0 : index
    %c0_169 = arith.constant 0 : index
    %396 = vector.load %arg22[%c0_168, %c0_169] : memref<8x128xf32, #tpu.memory_space<vmem>>, vector<8x128xf32>
    tpu.vector_store %arg22[%c0_168, %c0_169], %395 {strides = array<i32>} : memref<8x128xf32, #tpu.memory_space<vmem>>, vector<8x128xf32>,
    %397 = vector.extract_strided_slice %394 {offsets = [0, 0], sizes = [1, 128], strides = [1, 1]} : vector<16x128xf32> to vector<1x128xf32>
    %c0_170 = arith.constant 0 : index
    %c0_171 = arith.constant 0 : index
    %398 = vector.load %arg22[%c0_170, %c0_171] : memref<8x128xf32, #tpu.memory_space<vmem>>, vector<1x128xf32>
    tpu.vector_store %arg22[%c0_170, %c0_171], %397 {strides = array<i32>} : memref<8x128xf32, #tpu.memory_space<vmem>>, vector<1x128xf32>,
    %399 = vector.extract_strided_slice %394 {offsets = [8, 0], sizes = [1, 128], strides = [1, 1]} : vector<16x128xf32> to vector<1x128xf32>
    %c1_172 = arith.constant 1 : index
    %c0_173 = arith.constant 0 : index
    %400 = vector.load %arg22[%c1_172, %c0_173] : memref<8x128xf32, #tpu.memory_space<vmem>>, vector<1x128xf32>
    tpu.vector_store %arg22[%c1_172, %c0_173], %399 {strides = array<i32>} : memref<8x128xf32, #tpu.memory_space<vmem>>, vector<1x128xf32>,
    %c0_174 = arith.constant 0 : index
    %c0_175 = arith.constant 0 : index
    %401 = vector.load %arg22[%c0_174, %c0_175] : memref<8x128xf32, #tpu.memory_space<vmem>>, vector<8x128xf32>
    %c0_176 = arith.constant 0 : index
    %c0_177 = arith.constant 0 : index
    %402 = vector.load %arg16[%c0_176, %c0_177] : memref<128x128xf32, #tpu.memory_space<vmem>>, vector<128x128xf32>
    %cst_178 = arith.constant dense<0.000000e+00> : vector<8x128xf32>
    %403 = tpu.matmul %401, %402, %cst_178 {dimension_numbers = #tpu.dot_dimension_numbers<[1], [0], [0], [1], [0, 0, 1, 1], [], []>} : vector<8x128xf32>, vector<128x128xf32>, vector<8x128xf32> -> vector<8x128xf32>
    %c0_179 = arith.constant 0 : index
    %c0_180 = arith.constant 0 : index
    %404 = vector.load %arg17[%c0_179, %c0_180] : memref<1x128xf32, #tpu.memory_space<vmem>>, vector<1x128xf32>
    %405 = vector.broadcast %404 : vector<1x128xf32> to vector<8x128xf32>
    %406 = arith.addf %403, %405 : vector<8x128xf32>
    %407 = math.tanh %406 : vector<8x128xf32>
    %c0_181 = arith.constant 0 : index
    %c0_182 = arith.constant 0 : index
    %408 = vector.load %arg18[%c0_181, %c0_182] : memref<128x128xf32, #tpu.memory_space<vmem>>, vector<128x128xf32>
    %cst_183 = arith.constant dense<0.000000e+00> : vector<8x128xf32>
    %409 = tpu.matmul %407, %408, %cst_183 {dimension_numbers = #tpu.dot_dimension_numbers<[1], [0], [0], [1], [0, 0, 1, 1], [], []>} : vector<8x128xf32>, vector<128x128xf32>, vector<8x128xf32> -> vector<8x128xf32>
    %c0_184 = arith.constant 0 : index
    %c0_185 = arith.constant 0 : index
    %410 = vector.load %arg19[%c0_184, %c0_185] : memref<1x128xf32, #tpu.memory_space<vmem>>, vector<1x128xf32>
    %411 = vector.broadcast %410 : vector<1x128xf32> to vector<8x128xf32>
    %412 = arith.addf %409, %411 : vector<8x128xf32>
    %c0_186 = arith.constant 0 : index
    %c0_187 = arith.constant 0 : index
    %413 = vector.load %arg20[%c0_186, %c0_187] : memref<8x128xf32, #tpu.memory_space<vmem>>, vector<8x128xf32>
    tpu.vector_store %arg20[%c0_186, %c0_187], %412 {strides = array<i32>} : memref<8x128xf32, #tpu.memory_space<vmem>>, vector<8x128xf32>,
    return
  }
}

</mosaic_0001>

<llo_original>
// kernel: bert_for_multilabel_forward.1
$region0: #{bert_for_multilabel_forward.1}
  #allocation0 [shape = 'u32[]', space=smem, size = 0x4, offset = 0x4, fixed_abs, tag = 'smem constant byte address 0x4 - core index']
  #allocation1 [shape = 'u32[144,128]{1,0:T(1,128)}', space=vmem, size = 0x12000, scoped, tag = 'internal scratch']
  #allocation2 [shape = 'f32[16,128]{1,0:T(8,128)}', space=vmem, size = 0x2000, scoped, tag = 'scratch operand']
  #allocation3 [shape = 'f32[8,128]{1,0:T(8,128)}', space=vmem, size = 0x1000, scoped, tag = 'scratch operand']
  %s0 = inlined_call_operand.vmem [shape: f32[16,128], index: 0, kind: input, shape index: {}]
  %s1 = inlined_call_operand.vmem [shape: f32[2,8], index: 1, kind: input, shape index: {}]
  %s2 = inlined_call_operand.hbm [shape: f32[1,128], index: 2, kind: input, shape index: {}]
  %s3 = inlined_call_operand.hbm [shape: f32[1,128], index: 3, kind: input, shape index: {}]
  %s4 = inlined_call_operand.hbm [shape: f32[2,128,384], index: 4, kind: input, shape index: {}]
  %s5 = inlined_call_operand.vmem [shape: f32[2,1,384], index: 5, kind: input, shape index: {}]
  %s6 = inlined_call_operand.vmem [shape: f32[2,128,128], index: 6, kind: input, shape index: {}]
  %s7 = inlined_call_operand.vmem [shape: f32[2,1,128], index: 7, kind: input, shape index: {}]
  %s8 = inlined_call_operand.vmem [shape: f32[2,1,128], index: 8, kind: input, shape index: {}]
  %s9 = inlined_call_operand.hbm [shape: f32[2,1,128], index: 9, kind: input, shape index: {}]
  %s10 = inlined_call_operand.hbm [shape: f32[2,128,128], index: 10, kind: input, shape index: {}]
  %s11 = inlined_call_operand.hbm [shape: f32[2,1,128], index: 11, kind: input, shape index: {}]
  %s12 = inlined_call_operand.hbm [shape: f32[2,128,128], index: 12, kind: input, shape index: {}]
  %s13 = inlined_call_operand.hbm [shape: f32[2,1,128], index: 13, kind: input, shape index: {}]
  %s14 = inlined_call_operand.hbm [shape: f32[2,1,128], index: 14, kind: input, shape index: {}]
  %s15 = inlined_call_operand.hbm [shape: f32[2,1,128], index: 15, kind: input, shape index: {}]
  %s16 = inlined_call_operand.vmem [shape: f32[128,128], index: 16, kind: input, shape index: {}]
  %s17 = inlined_call_operand.hbm [shape: f32[1,128], index: 17, kind: input, shape index: {}]
  %s18 = inlined_call_operand.hbm [shape: f32[128,128], index: 18, kind: input, shape index: {}]
  %s19 = inlined_call_operand.hbm [shape: f32[1,128], index: 19, kind: input, shape index: {}]
  %s20 = inlined_call_operand.vmem [shape: f32[8,128], index: 20, kind: output, shape index: {}]
  %s21 = sld [smem:[#allocation0]]
  $region142: #{bert_for_multilabel_forward.1} parent=0
    _
  %s23 = ssub.s32 1, %s21
  %s24 = scalar_select 0, %s23, %s21
  $region1: #{bert_for_multilabel_forward.1} parent=0
    #allocation4 [shape = 'u8[512]{0}', space=vmem, size = 0x400, scoped, tag = 'input window, operand 2, single buffered']
    #allocation5 [shape = 's32[1]{0}', space=sflag, size = 0x4, scoped, tag = 'scoped memory for bert_for_multilabel_forward.1']
    #allocation6 [shape = 'u8[512]{0}', space=vmem, size = 0x400, scoped, tag = 'input window, operand 3, single buffered']
    #allocation7 [shape = 's32[1]{0}', space=sflag, size = 0x4, scoped, tag = 'scoped memory for bert_for_multilabel_forward.1']
    #allocation8 [shape = 'u8[393216]{0}', space=vmem, size = 0x60000, scoped, tag = 'input window, operand 4, single buffered']
    #allocation9 [shape = 'u8[1024]{0}', space=vmem, size = 0x400, scoped, tag = 'input window, operand 9, single buffered']
    #allocation10 [shape = 's32[1]{0}', space=sflag, size = 0x4, scoped, tag = 'scoped memory for bert_for_multilabel_forward.1']
    #allocation11 [shape = 'u8[131072]{0}', space=vmem, size = 0x20000, scoped, tag = 'input window, operand 10, single buffered']
    #allocation12 [shape = 'u8[1024]{0}', space=vmem, size = 0x400, scoped, tag = 'input window, operand 11, single buffered']
    #allocation13 [shape = 's32[1]{0}', space=sflag, size = 0x4, scoped, tag = 'scoped memory for bert_for_multilabel_forward.1']
    #allocation14 [shape = 'u8[131072]{0}', space=vmem, size = 0x20000, scoped, tag = 'input window, operand 12, single buffered']
    #allocation15 [shape = 'u8[1024]{0}', space=vmem, size = 0x400, scoped, tag = 'input window, operand 13, single buffered']
    #allocation16 [shape = 's32[1]{0}', space=sflag, size = 0x4, scoped, tag = 'scoped memory for bert_for_multilabel_forward.1']
    #allocation17 [shape = 'u8[1024]{0}', space=vmem, size = 0x400, scoped, tag = 'input window, operand 14, single buffered']
    #allocation18 [shape = 'u8[1024]{0}', space=vmem, size = 0x400, scoped, tag = 'input window, operand 15, single buffered']
    #allocation19 [shape = 's32[1]{0}', space=sflag, size = 0x4, scoped, tag = 'scoped memory for bert_for_multilabel_forward.1']
    #allocation20 [shape = 'u8[512]{0}', space=vmem, size = 0x400, scoped, tag = 'input window, operand 17, single buffered']
    #allocation21 [shape = 'u8[65536]{0}', space=vmem, size = 0x10000, scoped, tag = 'input window, operand 18, single buffered']
    #allocation22 [shape = 's32[1]{0}', space=sflag, size = 0x4, scoped, tag = 'scoped memory for bert_for_multilabel_forward.1']
    #allocation23 [shape = 'u8[512]{0}', space=vmem, size = 0x400, scoped, tag = 'input window, operand 19, single buffered']
    %25 = vsyncpa [#allocation5], 0
    %26 = vsyncpa [#allocation7], 0
    %27 = vsyncpa [#allocation10], 0
    %28 = vsyncpa [#allocation13], 0
    %29 = vsyncpa [#allocation16], 0
    %30 = vsyncpa [#allocation19], 0
    %31 = vsyncpa [#allocation22], 0
    // Predicated region
    $region2: #{bert_for_multilabel_forward.1} parent=1 // pred_check
      _
    $region3: #{bert_for_multilabel_forward.1} parent=1 // pred_check_branch
      %33 = sbr.rel (0) target = $region5
    $region4: #{bert_for_multilabel_forward.1} parent=1 // pred_region
      _
    $region5: #{bert_for_multilabel_forward.1} parent=1 // pred_fallthru
      _
    // Predicated region
    $region6: #{bert_for_multilabel_forward.1} parent=1 // pred_check
      _
    $region7: #{bert_for_multilabel_forward.1} parent=1 // pred_check_branch
      %35 = sbr.rel (0) target = $region9
    $region8: #{bert_for_multilabel_forward.1} parent=1 // pred_region
      _
    $region9: #{bert_for_multilabel_forward.1} parent=1 // pred_fallthru
      _
    // Predicated region
    $region10: #{bert_for_multilabel_forward.1} parent=1 // pred_check
      _
    $region11: #{bert_for_multilabel_forward.1} parent=1 // pred_check_branch
      %37 = sbr.rel (0) target = $region13
    $region12: #{bert_for_multilabel_forward.1} parent=1 // pred_region
      %s39 = ssub.s32 16, 16
      %40 = vsyncadd [#allocation5], %s39
      %s42 = sshll.u32 [#allocation4], 4
      %s43 = int_to_ptr.vmem [resolvable:$true] %s42
      %45 = dma.hbm_to_vmem [thread:$0]  %s2, 16, %s43, [#allocation5]
    $region13: #{bert_for_multilabel_forward.1} parent=1 // pred_fallthru
      _
    // Predicated region
    $region14: #{bert_for_multilabel_forward.1} parent=1 // pred_check
      _
    $region15: #{bert_for_multilabel_forward.1} parent=1 // pred_check_branch
      %47 = sbr.rel (0) target = $region17
    $region16: #{bert_for_multilabel_forward.1} parent=1 // pred_region
      %s49 = ssub.s32 16, 16
      %50 = vsyncadd [#allocation7], %s49
      %s52 = sshll.u32 [#allocation6], 4
      %s53 = int_to_ptr.vmem [resolvable:$true] %s52
      %55 = dma.hbm_to_vmem [thread:$0]  %s3, 16, %s53, [#allocation7]
    $region17: #{bert_for_multilabel_forward.1} parent=1 // pred_fallthru
      _
    // Predicated region
    $region18: #{bert_for_multilabel_forward.1} parent=1 // pred_check
      _
    $region19: #{bert_for_multilabel_forward.1} parent=1 // pred_check_branch
      %57 = sbr.rel (0) target = $region21
    $region20: #{bert_for_multilabel_forward.1} parent=1 // pred_region
      %s59 = ssub.s32 12288, 12288
      %60 = vsyncadd [#allocation7], %s59
      %s61 = sshll.u32 [#allocation8], 4
      %s62 = int_to_ptr.vmem [resolvable:$true] %s61
      %67 = dma.hbm_to_vmem [thread:$0]  %s4, 12288, %s62, [#allocation7], 384, 384, 24
    $region21: #{bert_for_multilabel_forward.1} parent=1 // pred_fallthru
      _
    // Predicated region
    $region22: #{bert_for_multilabel_forward.1} parent=1 // pred_check
      _
    $region23: #{bert_for_multilabel_forward.1} parent=1 // pred_check_branch
      %69 = sbr.rel (0) target = $region25
    $region24: #{bert_for_multilabel_forward.1} parent=1 // pred_region
      _
    $region25: #{bert_for_multilabel_forward.1} parent=1 // pred_fallthru
      _
    // Predicated region
    $region26: #{bert_for_multilabel_forward.1} parent=1 // pred_check
      _
    $region27: #{bert_for_multilabel_forward.1} parent=1 // pred_check_branch
      %71 = sbr.rel (0) target = $region29
    $region28: #{bert_for_multilabel_forward.1} parent=1 // pred_region
      _
    $region29: #{bert_for_multilabel_forward.1} parent=1 // pred_fallthru
      _
    // Predicated region
    $region30: #{bert_for_multilabel_forward.1} parent=1 // pred_check
      _
    $region31: #{bert_for_multilabel_forward.1} parent=1 // pred_check_branch
      %73 = sbr.rel (0) target = $region33
    $region32: #{bert_for_multilabel_forward.1} parent=1 // pred_region
      _
    $region33: #{bert_for_multilabel_forward.1} parent=1 // pred_fallthru
      _
    // Predicated region
    $region34: #{bert_for_multilabel_forward.1} parent=1 // pred_check
      _
    $region35: #{bert_for_multilabel_forward.1} parent=1 // pred_check_branch
      %75 = sbr.rel (0) target = $region37
    $region36: #{bert_for_multilabel_forward.1} parent=1 // pred_region
      _
    $region37: #{bert_for_multilabel_forward.1} parent=1 // pred_fallthru
      _
    // Predicated region
    $region38: #{bert_for_multilabel_forward.1} parent=1 // pred_check
      _
    $region39: #{bert_for_multilabel_forward.1} parent=1 // pred_check_branch
      %77 = sbr.rel (0) target = $region41
    $region40: #{bert_for_multilabel_forward.1} parent=1 // pred_region
      %s79 = ssub.s32 32, 32
      %80 = vsyncadd [#allocation10], %s79
      %s81 = sshll.u32 [#allocation9], 4
      %s82 = int_to_ptr.vmem [resolvable:$true] %s81
      %87 = dma.hbm_to_vmem [thread:$0]  %s9, 32, %s82, [#allocation10], 16, 16, 1
    $region41: #{bert_for_multilabel_forward.1} parent=1 // pred_fallthru
      _
    // Predicated region
    $region42: #{bert_for_multilabel_forward.1} parent=1 // pred_check
      _
    $region43: #{bert_for_multilabel_forward.1} parent=1 // pred_check_branch
      %89 = sbr.rel (0) target = $region45
    $region44: #{bert_for_multilabel_forward.1} parent=1 // pred_region
      %s91 = ssub.s32 4096, 4096
      %92 = vsyncadd [#allocation10], %s91
      %s93 = sshll.u32 [#allocation11], 4
      %s94 = int_to_ptr.vmem [resolvable:$true] %s93
      %99 = dma.hbm_to_vmem [thread:$0]  %s10, 4096, %s94, [#allocation10], 128, 128, 8
    $region45: #{bert_for_multilabel_forward.1} parent=1 // pred_fallthru
      _
    // Predicated region
    $region46: #{bert_for_multilabel_forward.1} parent=1 // pred_check
      _
    $region47: #{bert_for_multilabel_forward.1} parent=1 // pred_check_branch
      %101 = sbr.rel (0) target = $region49
    $region48: #{bert_for_multilabel_forward.1} parent=1 // pred_region
      %s103 = ssub.s32 32, 32
      %104 = vsyncadd [#allocation13], %s103
      %s105 = sshll.u32 [#allocation12], 4
      %s106 = int_to_ptr.vmem [resolvable:$true] %s105
      %111 = dma.hbm_to_vmem [thread:$0]  %s11, 32, %s106, [#allocation13], 16, 16, 1
    $region49: #{bert_for_multilabel_forward.1} parent=1 // pred_fallthru
      _
    // Predicated region
    $region50: #{bert_for_multilabel_forward.1} parent=1 // pred_check
      _
    $region51: #{bert_for_multilabel_forward.1} parent=1 // pred_check_branch
      %113 = sbr.rel (0) target = $region53
    $region52: #{bert_for_multilabel_forward.1} parent=1 // pred_region
      %s115 = ssub.s32 4096, 4096
      %116 = vsyncadd [#allocation13], %s115
      %s117 = sshll.u32 [#allocation14], 4
      %s118 = int_to_ptr.vmem [resolvable:$true] %s117
      %123 = dma.hbm_to_vmem [thread:$0]  %s12, 4096, %s118, [#allocation13], 128, 128, 8
    $region53: #{bert_for_multilabel_forward.1} parent=1 // pred_fallthru
      _
    // Predicated region
    $region54: #{bert_for_multilabel_forward.1} parent=1 // pred_check
      _
    $region55: #{bert_for_multilabel_forward.1} parent=1 // pred_check_branch
      %125 = sbr.rel (0) target = $region57
    $region56: #{bert_for_multilabel_forward.1} parent=1 // pred_region
      %s127 = ssub.s32 32, 32
      %128 = vsyncadd [#allocation16], %s127
      %s129 = sshll.u32 [#allocation15], 4
      %s130 = int_to_ptr.vmem [resolvable:$true] %s129
      %135 = dma.hbm_to_vmem [thread:$0]  %s13, 32, %s130, [#allocation16], 16, 16, 1
    $region57: #{bert_for_multilabel_forward.1} parent=1 // pred_fallthru
      _
    // Predicated region
    $region58: #{bert_for_multilabel_forward.1} parent=1 // pred_check
      _
    $region59: #{bert_for_multilabel_forward.1} parent=1 // pred_check_branch
      %137 = sbr.rel (0) target = $region61
    $region60: #{bert_for_multilabel_forward.1} parent=1 // pred_region
      %s139 = ssub.s32 32, 32
      %140 = vsyncadd [#allocation16], %s139
      %s141 = sshll.u32 [#allocation17], 4
      %s142 = int_to_ptr.vmem [resolvable:$true] %s141
      %147 = dma.hbm_to_vmem [thread:$0]  %s14, 32, %s142, [#allocation16], 16, 16, 1
    $region61: #{bert_for_multilabel_forward.1} parent=1 // pred_fallthru
      _
    // Predicated region
    $region62: #{bert_for_multilabel_forward.1} parent=1 // pred_check
      _
    $region63: #{bert_for_multilabel_forward.1} parent=1 // pred_check_branch
      %149 = sbr.rel (0) target = $region65
    $region64: #{bert_for_multilabel_forward.1} parent=1 // pred_region
      %s151 = ssub.s32 32, 32
      %152 = vsyncadd [#allocation19], %s151
      %s153 = sshll.u32 [#allocation18], 4
      %s154 = int_to_ptr.vmem [resolvable:$true] %s153
      %159 = dma.hbm_to_vmem [thread:$0]  %s15, 32, %s154, [#allocation19], 16, 16, 1
    $region65: #{bert_for_multilabel_forward.1} parent=1 // pred_fallthru
      _
    // Predicated region
    $region66: #{bert_for_multilabel_forward.1} parent=1 // pred_check
      _
    $region67: #{bert_for_multilabel_forward.1} parent=1 // pred_check_branch
      %161 = sbr.rel (0) target = $region69
    $region68: #{bert_for_multilabel_forward.1} parent=1 // pred_region
      _
    $region69: #{bert_for_multilabel_forward.1} parent=1 // pred_fallthru
      _
    // Predicated region
    $region70: #{bert_for_multilabel_forward.1} parent=1 // pred_check
      _
    $region71: #{bert_for_multilabel_forward.1} parent=1 // pred_check_branch
      %163 = sbr.rel (0) target = $region73
    $region72: #{bert_for_multilabel_forward.1} parent=1 // pred_region
      %s165 = ssub.s32 16, 16
      %166 = vsyncadd [#allocation19], %s165
      %s168 = sshll.u32 [#allocation20], 4
      %s169 = int_to_ptr.vmem [resolvable:$true] %s168
      %171 = dma.hbm_to_vmem [thread:$0]  %s17, 16, %s169, [#allocation19]
    $region73: #{bert_for_multilabel_forward.1} parent=1 // pred_fallthru
      _
    // Predicated region
    $region74: #{bert_for_multilabel_forward.1} parent=1 // pred_check
      _
    $region75: #{bert_for_multilabel_forward.1} parent=1 // pred_check_branch
      %173 = sbr.rel (0) target = $region77
    $region76: #{bert_for_multilabel_forward.1} parent=1 // pred_region
      %s175 = ssub.s32 2048, 2048
      %176 = vsyncadd [#allocation22], %s175
      %s177 = sshll.u32 [#allocation21], 4
      %s178 = int_to_ptr.vmem [resolvable:$true] %s177
      %183 = dma.hbm_to_vmem [thread:$0]  %s18, 2048, %s178, [#allocation22], 128, 128, 8
    $region77: #{bert_for_multilabel_forward.1} parent=1 // pred_fallthru
      _
    // Predicated region
    $region78: #{bert_for_multilabel_forward.1} parent=1 // pred_check
      _
    $region79: #{bert_for_multilabel_forward.1} parent=1 // pred_check_branch
      %185 = sbr.rel (0) target = $region81
    $region80: #{bert_for_multilabel_forward.1} parent=1 // pred_region
      %s187 = ssub.s32 16, 16
      %188 = vsyncadd [#allocation22], %s187
      %s190 = sshll.u32 [#allocation23], 4
      %s191 = int_to_ptr.vmem [resolvable:$true] %s190
      %193 = dma.hbm_to_vmem [thread:$0]  %s19, 16, %s191, [#allocation22]
    $region81: #{bert_for_multilabel_forward.1} parent=1 // pred_fallthru
      _
    // Predicated region
    $region82: #{bert_for_multilabel_forward.1} parent=1 // pred_check
      _
    $region83: #{bert_for_multilabel_forward.1} parent=1 // pred_check_branch
      %195 = sbr.rel (0) target = $region85
    $region84: #{bert_for_multilabel_forward.1} parent=1 // pred_region
      %196 = dma.done [#allocation5], 16
    $region85: #{bert_for_multilabel_forward.1} parent=1 // pred_fallthru
      _
    // Predicated region
    $region86: #{bert_for_multilabel_forward.1} parent=1 // pred_check
      _
    $region87: #{bert_for_multilabel_forward.1} parent=1 // pred_check_branch
      %198 = sbr.rel (0) target = $region89
    $region88: #{bert_for_multilabel_forward.1} parent=1 // pred_region
      %199 = dma.done [#allocation7], 16
    $region89: #{bert_for_multilabel_forward.1} parent=1 // pred_fallthru
      _
    // Predicated region
    $region90: #{bert_for_multilabel_forward.1} parent=1 // pred_check
      _
    $region91: #{bert_for_multilabel_forward.1} parent=1 // pred_check_branch
      %201 = sbr.rel (0) target = $region93
    $region92: #{bert_for_multilabel_forward.1} parent=1 // pred_region
      %202 = dma.done [#allocation7], 12288
    $region93: #{bert_for_multilabel_forward.1} parent=1 // pred_fallthru
      _
    // Predicated region
    $region94: #{bert_for_multilabel_forward.1} parent=1 // pred_check
      _
    $region95: #{bert_for_multilabel_forward.1} parent=1 // pred_check_branch
      %204 = sbr.rel (0) target = $region97
    $region96: #{bert_for_multilabel_forward.1} parent=1 // pred_region
      %205 = dma.done [#allocation10], 32
    $region97: #{bert_for_multilabel_forward.1} parent=1 // pred_fallthru
      _
    // Predicated region
    $region98: #{bert_for_multilabel_forward.1} parent=1 // pred_check
      _
    $region99: #{bert_for_multilabel_forward.1} parent=1 // pred_check_branch
      %207 = sbr.rel (0) target = $region101
    $region100: #{bert_for_multilabel_forward.1} parent=1 // pred_region
      %208 = dma.done [#allocation10], 4096
    $region101: #{bert_for_multilabel_forward.1} parent=1 // pred_fallthru
      _
    // Predicated region
    $region102: #{bert_for_multilabel_forward.1} parent=1 // pred_check
      _
    $region103: #{bert_for_multilabel_forward.1} parent=1 // pred_check_branch
      %210 = sbr.rel (0) target = $region105
    $region104: #{bert_for_multilabel_forward.1} parent=1 // pred_region
      %211 = dma.done [#allocation13], 32
    $region105: #{bert_for_multilabel_forward.1} parent=1 // pred_fallthru
      _
    // Predicated region
    $region106: #{bert_for_multilabel_forward.1} parent=1 // pred_check
      _
    $region107: #{bert_for_multilabel_forward.1} parent=1 // pred_check_branch
      %213 = sbr.rel (0) target = $region109
    $region108: #{bert_for_multilabel_forward.1} parent=1 // pred_region
      %214 = dma.done [#allocation13], 4096
    $region109: #{bert_for_multilabel_forward.1} parent=1 // pred_fallthru
      _
    // Predicated region
    $region110: #{bert_for_multilabel_forward.1} parent=1 // pred_check
      _
    $region111: #{bert_for_multilabel_forward.1} parent=1 // pred_check_branch
      %216 = sbr.rel (0) target = $region113
    $region112: #{bert_for_multilabel_forward.1} parent=1 // pred_region
      %217 = dma.done [#allocation16], 32
    $region113: #{bert_for_multilabel_forward.1} parent=1 // pred_fallthru
      _
    // Predicated region
    $region114: #{bert_for_multilabel_forward.1} parent=1 // pred_check
      _
    $region115: #{bert_for_multilabel_forward.1} parent=1 // pred_check_branch
      %219 = sbr.rel (0) target = $region117
    $region116: #{bert_for_multilabel_forward.1} parent=1 // pred_region
      %220 = dma.done [#allocation16], 32
    $region117: #{bert_for_multilabel_forward.1} parent=1 // pred_fallthru
      _
    // Predicated region
    $region118: #{bert_for_multilabel_forward.1} parent=1 // pred_check
      _
    $region119: #{bert_for_multilabel_forward.1} parent=1 // pred_check_branch
      %222 = sbr.rel (0) target = $region121
    $region120: #{bert_for_multilabel_forward.1} parent=1 // pred_region
      %223 = dma.done [#allocation19], 32
    $region121: #{bert_for_multilabel_forward.1} parent=1 // pred_fallthru
      _
    // Predicated region
    $region122: #{bert_for_multilabel_forward.1} parent=1 // pred_check
      _
    $region123: #{bert_for_multilabel_forward.1} parent=1 // pred_check_branch
      %225 = sbr.rel (0) target = $region125
    $region124: #{bert_for_multilabel_forward.1} parent=1 // pred_region
      %226 = dma.done [#allocation19], 16
    $region125: #{bert_for_multilabel_forward.1} parent=1 // pred_fallthru
      _
    // Predicated region
    $region126: #{bert_for_multilabel_forward.1} parent=1 // pred_check
      _
    $region127: #{bert_for_multilabel_forward.1} parent=1 // pred_check_branch
      %228 = sbr.rel (0) target = $region129
    $region128: #{bert_for_multilabel_forward.1} parent=1 // pred_region
      %229 = dma.done [#allocation22], 2048
    $region129: #{bert_for_multilabel_forward.1} parent=1 // pred_fallthru
      _
    // Predicated region
    $region130: #{bert_for_multilabel_forward.1} parent=1 // pred_check
      _
    $region131: #{bert_for_multilabel_forward.1} parent=1 // pred_check_branch
      %231 = sbr.rel (0) target = $region133
    $region132: #{bert_for_multilabel_forward.1} parent=1 // pred_region
      %232 = dma.done [#allocation22], 16
    $region133: #{bert_for_multilabel_forward.1} parent=1 // pred_fallthru
      _
    %v233 = vlaneseq
    %v234 = vand.u32 %v233, 127
    %vm235 = vcmp.lt.s32.totalorder %v234, 32
    %v236 = vsel %vm235, 1, 0
    %v237 = vcvt.s32.f32 %v236
    %v238 = vld [vmem:[%s1] sm:$0x3]
    %v239 = vld [vmem:[%s0] sm:$0xff]
    %v240 = vld [vmem:[%s0 + $0x8] sm:$0xff]
    %v241 = vld [vmem:[#allocation4] sm:$0x1]
    %v242 = vld [vmem:[#allocation6] sm:$0x1]
    %243 = vadd.xlane.f32.xlu0 %v239
    %v244 = vpop.xlane.xlu0 %243
    %245 = vadd.xlane.f32.xlu0 %v240
    %v246 = vpop.xlane.xlu0 %245
    %v247 = vmul.f32 %v244, 0.03125
    %v248 = vmul.f32 %v246, 0.03125
    %v249 = vsub.f32 %v239, %v247
    %v250 = vsub.f32 %v240, %v248
    %v251 = vmul.f32 %v249, %v237
    %v252 = vmul.f32 %v250, %v237
    %v253 = vmul.f32 %v251, %v251
    %v254 = vmul.f32 %v252, %v252
    %255 = vadd.xlane.f32.xlu0 %v253
    %v256 = vpop.xlane.xlu0 %255
    %257 = vadd.xlane.f32.xlu0 %v254
    %v258 = vpop.xlane.xlu0 %257
    %v259 = vmul.f32 %v256, 0.03125
    %v260 = vmul.f32 %v258, 0.03125
    %v261 = vadd.f32 %v259, 1e-12
    %v262 = vadd.f32 %v260, 1e-12
    %v263 = vrsqrt.pop %v261
    %v264 = vrsqrt.pop %v262
    %v265 = vmul.f32 %v251, %v263
    %v266 = vmul.f32 %v252, %v264
    %v268 = vlaneseq
    %v269 = vshrl.u32 %v268, 7
    %v270 = vsub.s32 0, %v269
    %v271 = vrot.slane %v241, %v270
    %v273 = vmul.f32 %v265, %v271
    %v274 = vmul.f32 %v266, %v271
    %v276 = vlaneseq
    %v277 = vshrl.u32 %v276, 7
    %v278 = vsub.s32 0, %v277
    %v279 = vrot.slane %v242, %v278
    %v281 = vadd.f32 %v273, %v279
    %v282 = vadd.f32 %v274, %v279
    %v283 = vld [vmem:[#allocation8] sm:$0xff]
    %v284 = vld [vmem:[#allocation8 + $0x8] sm:$0xff]
    %v285 = vld [vmem:[#allocation8 + $0x10] sm:$0xff]
    %v286 = vld [vmem:[#allocation8 + $0x18] sm:$0xff]
    %v287 = vld [vmem:[#allocation8 + $0x20] sm:$0xff]
    %v288 = vld [vmem:[#allocation8 + $0x28] sm:$0xff]
    %v289 = vld [vmem:[#allocation8 + $0x30] sm:$0xff]
    %v290 = vld [vmem:[#allocation8 + $0x38] sm:$0xff]
    %v291 = vld [vmem:[#allocation8 + $0x40] sm:$0xff]
    %v292 = vld [vmem:[#allocation8 + $0x48] sm:$0xff]
    %v293 = vld [vmem:[#allocation8 + $0x50] sm:$0xff]
    %v294 = vld [vmem:[#allocation8 + $0x58] sm:$0xff]
    %v295 = vld [vmem:[#allocation8 + $0x60] sm:$0xff]
    %v296 = vld [vmem:[#allocation8 + $0x68] sm:$0xff]
    %v297 = vld [vmem:[#allocation8 + $0x70] sm:$0xff]
    %v298 = vld [vmem:[#allocation8 + $0x78] sm:$0xff]
    %v299 = vld [vmem:[#allocation8 + $0x80] sm:$0xff]
    %v300 = vld [vmem:[#allocation8 + $0x88] sm:$0xff]
    %v301 = vld [vmem:[#allocation8 + $0x90] sm:$0xff]
    %v302 = vld [vmem:[#allocation8 + $0x98] sm:$0xff]
    %v303 = vld [vmem:[#allocation8 + $0xa0] sm:$0xff]
    %v304 = vld [vmem:[#allocation8 + $0xa8] sm:$0xff]
    %v305 = vld [vmem:[#allocation8 + $0xb0] sm:$0xff]
    %v306 = vld [vmem:[#allocation8 + $0xb8] sm:$0xff]
    %v307 = vld [vmem:[#allocation8 + $0xc0] sm:$0xff]
    %v308 = vld [vmem:[#allocation8 + $0xc8] sm:$0xff]
    %v309 = vld [vmem:[#allocation8 + $0xd0] sm:$0xff]
    %v310 = vld [vmem:[#allocation8 + $0xd8] sm:$0xff]
    %v311 = vld [vmem:[#allocation8 + $0xe0] sm:$0xff]
    %v312 = vld [vmem:[#allocation8 + $0xe8] sm:$0xff]
    %v313 = vld [vmem:[#allocation8 + $0xf0] sm:$0xff]
    %v314 = vld [vmem:[#allocation8 + $0xf8] sm:$0xff]
    %v315 = vld [vmem:[#allocation8 + $0x100] sm:$0xff]
    %v316 = vld [vmem:[#allocation8 + $0x108] sm:$0xff]
    %v317 = vld [vmem:[#allocation8 + $0x110] sm:$0xff]
    %v318 = vld [vmem:[#allocation8 + $0x118] sm:$0xff]
    %v319 = vld [vmem:[#allocation8 + $0x120] sm:$0xff]
    %v320 = vld [vmem:[#allocation8 + $0x128] sm:$0xff]
    %v321 = vld [vmem:[#allocation8 + $0x130] sm:$0xff]
    %v322 = vld [vmem:[#allocation8 + $0x138] sm:$0xff]
    %v323 = vld [vmem:[#allocation8 + $0x140] sm:$0xff]
    %v324 = vld [vmem:[#allocation8 + $0x148] sm:$0xff]
    %v325 = vld [vmem:[#allocation8 + $0x150] sm:$0xff]
    %v326 = vld [vmem:[#allocation8 + $0x158] sm:$0xff]
    %v327 = vld [vmem:[#allocation8 + $0x160] sm:$0xff]
    %v328 = vld [vmem:[#allocation8 + $0x168] sm:$0xff]
    %v329 = vld [vmem:[#allocation8 + $0x170] sm:$0xff]
    %v330 = vld [vmem:[#allocation8 + $0x178] sm:$0xff]
    %v331 = vld [vmem:[%s5] sm:$0x7]
    %v333 = vlaneseq
    %v334 = vshrl.u32 %v333, 7
    %v335 = vsub.s32 0, %v334
    %v336 = vrot.slane %v331, %v335
    %v337 = vlaneseq
    %v338 = vshrl.u32 %v337, 7
    %v339 = vsub.s32 1, %v338
    %v340 = vrot.slane %v331, %v339
    %v341 = vlaneseq
    %v342 = vshrl.u32 %v341, 7
    %v343 = vsub.s32 2, %v342
    %v344 = vrot.slane %v331, %v343
    %348 = vmatprep.subr.mxu0 %v329
    %349 = vmatpush1.msra.mxu0 %v328
    %350 = vmatprep.subr.mxu0 %v326
    %351 = vmatpush1.msra.mxu0 %v325
    %352 = vmatprep.subr.mxu0 %v323
    %353 = vmatpush1.msra.mxu0 %v322
    %354 = vmatprep.subr.mxu0 %v320
    %355 = vmatpush1.msra.mxu0 %v319
    %356 = vmatprep.subr.mxu0 %v317
    %357 = vmatpush1.msra.mxu0 %v316
    %358 = vmatprep.subr.mxu0 %v314
    %359 = vmatpush1.msra.mxu0 %v313
    %360 = vmatprep.subr.mxu0 %v311
    %361 = vmatpush1.msra.mxu0 %v310
    %362 = vmatprep.subr.mxu0 %v308
    %363 = vmatpush1.msra.mxu0 %v307
    %364 = vmatprep.subr.mxu0 %v305
    %365 = vmatpush1.msra.mxu0 %v304
    %366 = vmatprep.subr.mxu0 %v302
    %367 = vmatpush1.msra.mxu0 %v301
    %368 = vmatprep.subr.mxu0 %v299
    %369 = vmatpush1.msra.mxu0 %v298
    %370 = vmatprep.subr.mxu0 %v296
    %371 = vmatpush1.msra.mxu0 %v295
    %372 = vmatprep.subr.mxu0 %v293
    %373 = vmatpush1.msra.mxu0 %v292
    %374 = vmatprep.subr.mxu0 %v290
    %375 = vmatpush1.msra.mxu0 %v289
    %376 = vmatprep.subr.mxu0 %v287
    %377 = vmatpush1.msra.mxu0 %v286
    %378 = vmatprep.subr.mxu0 %v284
    %379 = vmatpush1.msra.mxu0 %v283
    %380 = vmatprep.subr.mxu0 0.0
    %381 = vmatpush2.msra.mxu0 0.0
    %382 = vmatprep.subr.mxu0 0.0
    %383 = vmatpush2.msra.mxu0 0.0
    %384 = vmatprep.subr.mxu0 0.0
    %385 = vmatpush2.msra.mxu0 0.0
    %386 = vmatprep.subr.mxu0 0.0
    %387 = vmatpush2.msra.mxu0 0.0
    %388 = vmatprep.subr.mxu0 0.0
    %389 = vmatpush2.msra.mxu0 0.0
    %390 = vmatprep.subr.mxu0 0.0
    %391 = vmatpush2.msra.mxu0 0.0
    %392 = vmatprep.subr.mxu0 0.0
    %393 = vmatpush2.msra.mxu0 0.0
    %394 = vmatprep.subr.mxu0 0.0
    %395 = vmatpush2.msra.mxu0 0.0
    %396 = vmatprep.subr.mxu0 0.0
    %397 = vmatpush2.msra.mxu0 0.0
    %398 = vmatprep.subr.mxu0 0.0
    %399 = vmatpush2.msra.mxu0 0.0
    %400 = vmatprep.subr.mxu0 0.0
    %401 = vmatpush2.msra.mxu0 0.0
    %402 = vmatprep.subr.mxu0 0.0
    %403 = vmatpush2.msra.mxu0 0.0
    %404 = vmatprep.subr.mxu0 0.0
    %405 = vmatpush2.msra.mxu0 0.0
    %406 = vmatprep.subr.mxu0 0.0
    %407 = vmatpush2.msra.mxu0 0.0
    %408 = vmatprep.subr.mxu0 0.0
    %409 = vmatpush2.msra.mxu0 0.0
    %410 = vmatprep.subr.mxu0 0.0
    %411 = vmatpush2.msra.mxu0 0.0
    %412 = vmatprep.mubr.f32.mxu0 0.0
    %413 = vmatmul.mubr.f32.gmra.mxu0 %v281
    %v414 = vpop.f32.mrf.mxu0
    %v415 = vadd.f32 %v336, %v414
    %v416 = vpop.f32.mrf.mxu0
    %v417 = vadd.f32 %v340, %v416
    %418 = vmatprep.mubr.f32.mxu0 0.0
    %419 = vmatmul.mubr.f32.gmra.mxu0 %v282
    %v420 = vpop.f32.mrf.mxu0
    %v421 = vadd.f32 %v336, %v420
    %v422 = vpop.f32.mrf.mxu0
    %v423 = vadd.f32 %v340, %v422
    %424 = vdwg.mxu0
    %425 = vmatprep.subr.mxu0 0.0
    %426 = vmatpush1.msra.mxu0 %v330
    %427 = vmatprep.subr.mxu0 0.0
    %428 = vmatpush1.msra.mxu0 %v327
    %429 = vmatprep.subr.mxu0 0.0
    %430 = vmatpush1.msra.mxu0 %v324
    %431 = vmatprep.subr.mxu0 0.0
    %432 = vmatpush1.msra.mxu0 %v321
    %433 = vmatprep.subr.mxu0 0.0
    %434 = vmatpush1.msra.mxu0 %v318
    %435 = vmatprep.subr.mxu0 0.0
    %436 = vmatpush1.msra.mxu0 %v315
    %437 = vmatprep.subr.mxu0 0.0
    %438 = vmatpush1.msra.mxu0 %v312
    %439 = vmatprep.subr.mxu0 0.0
    %440 = vmatpush1.msra.mxu0 %v309
    %441 = vmatprep.subr.mxu0 0.0
    %442 = vmatpush1.msra.mxu0 %v306
    %443 = vmatprep.subr.mxu0 0.0
    %444 = vmatpush1.msra.mxu0 %v303
    %445 = vmatprep.subr.mxu0 0.0
    %446 = vmatpush1.msra.mxu0 %v300
    %447 = vmatprep.subr.mxu0 0.0
    %448 = vmatpush1.msra.mxu0 %v297
    %449 = vmatprep.subr.mxu0 0.0
    %450 = vmatpush1.msra.mxu0 %v294
    %451 = vmatprep.subr.mxu0 0.0
    %452 = vmatpush1.msra.mxu0 %v291
    %453 = vmatprep.subr.mxu0 0.0
    %454 = vmatpush1.msra.mxu0 %v288
    %455 = vmatprep.subr.mxu0 0.0
    %456 = vmatpush1.msra.mxu0 %v285
    %457 = vmatprep.subr.mxu0 0.0
    %458 = vmatpush2.msra.mxu0 0.0
    %459 = vmatprep.subr.mxu0 0.0
    %460 = vmatpush2.msra.mxu0 0.0
    %461 = vmatprep.subr.mxu0 0.0
    %462 = vmatpush2.msra.mxu0 0.0
    %463 = vmatprep.subr.mxu0 0.0
    %464 = vmatpush2.msra.mxu0 0.0
    %465 = vmatprep.subr.mxu0 0.0
    %466 = vmatpush2.msra.mxu0 0.0
    %467 = vmatprep.subr.mxu0 0.0
    %468 = vmatpush2.msra.mxu0 0.0
    %469 = vmatprep.subr.mxu0 0.0
    %470 = vmatpush2.msra.mxu0 0.0
    %471 = vmatprep.subr.mxu0 0.0
    %472 = vmatpush2.msra.mxu0 0.0
    %473 = vmatprep.subr.mxu0 0.0
    %474 = vmatpush2.msra.mxu0 0.0
    %475 = vmatprep.subr.mxu0 0.0
    %476 = vmatpush2.msra.mxu0 0.0
    %477 = vmatprep.subr.mxu0 0.0
    %478 = vmatpush2.msra.mxu0 0.0
    %479 = vmatprep.subr.mxu0 0.0
    %480 = vmatpush2.msra.mxu0 0.0
    %481 = vmatprep.subr.mxu0 0.0
    %482 = vmatpush2.msra.mxu0 0.0
    %483 = vmatprep.subr.mxu0 0.0
    %484 = vmatpush2.msra.mxu0 0.0
    %485 = vmatprep.subr.mxu0 0.0
    %486 = vmatpush2.msra.mxu0 0.0
    %487 = vmatprep.subr.mxu0 0.0
    %488 = vmatpush2.msra.mxu0 0.0
    %489 = vmatprep.mubr.f32.mxu0 0.0
    %490 = vmatmul.mubr.f32.gmra.mxu0 %v281
    %v491 = vpop.f32.mrf.mxu0
    %v492 = vadd.f32 %v344, %v491
    %v493 = vpop.f32.mrf.mxu0
    %494 = vmatprep.mubr.f32.mxu0 0.0
    %495 = vmatmul.mubr.f32.gmra.mxu0 %v282
    %v496 = vpop.f32.mrf.mxu0
    %v497 = vadd.f32 %v344, %v496
    %v498 = vpop.f32.mrf.mxu0
    %499 = vdwg.mxu0
    %v500 = vld [vmem:[%s6] sm:$0xff]
    %v501 = vld [vmem:[%s6 + $0x8] sm:$0xff]
    %v502 = vld [vmem:[%s6 + $0x10] sm:$0xff]
    %v503 = vld [vmem:[%s6 + $0x18] sm:$0xff]
    %v504 = vlaneseq
    %v505 = vshrl.u32 %v504, 7
    %v506 = vsub.s32 0, %v505
    %v507 = vrot.slane %v238, %v506
    %vm508 = vcmask 130048
    %v510 = vsel %vm508, %v415, 0
    %v513 = vsel %vm508, %v417, 0
    %515 = vmatprep.subr.mxu0 0.0
    %516 = vmatpush1.xpose.msra.mxu0 0.0
    %517 = vmatprep.subr.mxu0 0.0
    %518 = vmatpush1.xpose.msra.mxu0 0.0
    %519 = vmatprep.subr.mxu0 0.0
    %520 = vmatpush1.xpose.msra.mxu0 0.0
    %521 = vmatprep.subr.mxu0 0.0
    %522 = vmatpush1.xpose.msra.mxu0 0.0
    %523 = vmatprep.subr.mxu0 0.0
    %524 = vmatpush1.xpose.msra.mxu0 0.0
    %525 = vmatprep.subr.mxu0 0.0
    %526 = vmatpush1.xpose.msra.mxu0 0.0
    %527 = vmatprep.subr.mxu0 0.0
    %528 = vmatpush1.xpose.msra.mxu0 0.0
    %529 = vmatprep.subr.mxu0 0.0
    %530 = vmatpush1.xpose.msra.mxu0 0.0
    %531 = vmatprep.subr.mxu0 0.0
    %532 = vmatpush1.xpose.msra.mxu0 0.0
    %533 = vmatprep.subr.mxu0 0.0
    %534 = vmatpush1.xpose.msra.mxu0 0.0
    %535 = vmatprep.subr.mxu0 0.0
    %536 = vmatpush1.xpose.msra.mxu0 0.0
    %537 = vmatprep.subr.mxu0 0.0
    %538 = vmatpush1.xpose.msra.mxu0 0.0
    %539 = vmatprep.subr.mxu0 0.0
    %540 = vmatpush1.xpose.msra.mxu0 0.0
    %541 = vmatprep.subr.mxu0 0.0
    %542 = vmatpush1.xpose.msra.mxu0 0.0
    %543 = vmatprep.subr.mxu0 0.0
    %544 = vmatpush1.xpose.msra.mxu0 0.0
    %545 = vmatprep.subr.mxu0 0.0
    %546 = vmatpush1.xpose.msra.mxu0 %v513
    %547 = vmatprep.subr.mxu0 0.0
    %548 = vmatpush2.xpose.msra.mxu0 0.0
    %549 = vmatprep.subr.mxu0 0.0
    %550 = vmatpush2.xpose.msra.mxu0 0.0
    %551 = vmatprep.subr.mxu0 0.0
    %552 = vmatpush2.xpose.msra.mxu0 0.0
    %553 = vmatprep.subr.mxu0 0.0
    %554 = vmatpush2.xpose.msra.mxu0 0.0
    %555 = vmatprep.subr.mxu0 0.0
    %556 = vmatpush2.xpose.msra.mxu0 0.0
    %557 = vmatprep.subr.mxu0 0.0
    %558 = vmatpush2.xpose.msra.mxu0 0.0
    %559 = vmatprep.subr.mxu0 0.0
    %560 = vmatpush2.xpose.msra.mxu0 0.0
    %561 = vmatprep.subr.mxu0 0.0
    %562 = vmatpush2.xpose.msra.mxu0 0.0
    %563 = vmatprep.subr.mxu0 0.0
    %564 = vmatpush2.xpose.msra.mxu0 0.0
    %565 = vmatprep.subr.mxu0 0.0
    %566 = vmatpush2.xpose.msra.mxu0 0.0
    %567 = vmatprep.subr.mxu0 0.0
    %568 = vmatpush2.xpose.msra.mxu0 0.0
    %569 = vmatprep.subr.mxu0 0.0
    %570 = vmatpush2.xpose.msra.mxu0 0.0
    %571 = vmatprep.subr.mxu0 0.0
    %572 = vmatpush2.xpose.msra.mxu0 0.0
    %573 = vmatprep.subr.mxu0 0.0
    %574 = vmatpush2.xpose.msra.mxu0 0.0
    %575 = vmatprep.subr.mxu0 0.0
    %576 = vmatpush2.xpose.msra.mxu0 0.0
    %577 = vmatprep.subr.mxu0 0.0
    %578 = vmatpush2.xpose.msra.mxu0 0.0
    %579 = vmatprep.mubr.f32.mxu0 0.0
    %580 = vmatmul.mubr.f32.gmra.mxu0 %v510
    %v581 = vpop.f32.mrf.mxu0
    %v582 = vadd.f32 %v507, %v581
    %v583 = vpop.f32.mrf.mxu0
    %584 = vdwg.mxu0
    %vm585 = vcmask 64512
    %v586 = vsel %vm585, %v582, -inf
    %587 = vmax.xlane.f32.xlu0 %v586
    %v588 = vpop.xlane.xlu0 %587
    %v589 = vsub.f32 %v582, %v588
    %v590 = vmul.f32 %v589, 1.442695
    %v591 = vpow.pop %v590
    %v592 = vsel %vm585, %v591, 0.0
    %593 = vadd.xlane.f32.xlu0 %v592
    %v594 = vpop.xlane.xlu0 %593
    %v595 = vrcp.pop %v594
    %v596 = vmul.f32 %v591, %v595
    %v598 = vsel %vm585, %v596, 0
    %600 = vmatprep.subr.mxu0 0.0
    %601 = vmatpush1.msra.mxu0 0.0
    %602 = vmatprep.subr.mxu0 0.0
    %603 = vmatpush1.msra.mxu0 0.0
    %604 = vmatprep.subr.mxu0 0.0
    %605 = vmatpush1.msra.mxu0 0.0
    %606 = vmatprep.subr.mxu0 0.0
    %607 = vmatpush1.msra.mxu0 0.0
    %608 = vmatprep.subr.mxu0 0.0
    %609 = vmatpush1.msra.mxu0 0.0
    %610 = vmatprep.subr.mxu0 0.0
    %611 = vmatpush1.msra.mxu0 0.0
    %612 = vmatprep.subr.mxu0 0.0
    %613 = vmatpush1.msra.mxu0 0.0
    %614 = vmatprep.subr.mxu0 0.0
    %615 = vmatpush1.msra.mxu0 0.0
    %616 = vmatprep.subr.mxu0 0.0
    %617 = vmatpush1.msra.mxu0 0.0
    %618 = vmatprep.subr.mxu0 0.0
    %619 = vmatpush1.msra.mxu0 0.0
    %620 = vmatprep.subr.mxu0 0.0
    %621 = vmatpush1.msra.mxu0 0.0
    %622 = vmatprep.subr.mxu0 0.0
    %623 = vmatpush1.msra.mxu0 0.0
    %624 = vmatprep.subr.mxu0 0.0
    %625 = vmatpush1.msra.mxu0 0.0
    %626 = vmatprep.subr.mxu0 0.0
    %627 = vmatpush1.msra.mxu0 0.0
    %628 = vmatprep.subr.mxu0 0.0
    %629 = vmatpush1.msra.mxu0 0.0
    %630 = vmatprep.subr.mxu0 0.0
    %631 = vmatpush1.msra.mxu0 %v492
    %632 = vmatprep.subr.mxu0 0.0
    %633 = vmatpush2.msra.mxu0 0.0
    %634 = vmatprep.subr.mxu0 0.0
    %635 = vmatpush2.msra.mxu0 0.0
    %636 = vmatprep.subr.mxu0 0.0
    %637 = vmatpush2.msra.mxu0 0.0
    %638 = vmatprep.subr.mxu0 0.0
    %639 = vmatpush2.msra.mxu0 0.0
    %640 = vmatprep.subr.mxu0 0.0
    %641 = vmatpush2.msra.mxu0 0.0
    %642 = vmatprep.subr.mxu0 0.0
    %643 = vmatpush2.msra.mxu0 0.0
    %644 = vmatprep.subr.mxu0 0.0
    %645 = vmatpush2.msra.mxu0 0.0
    %646 = vmatprep.subr.mxu0 0.0
    %647 = vmatpush2.msra.mxu0 0.0
    %648 = vmatprep.subr.mxu0 0.0
    %649 = vmatpush2.msra.mxu0 0.0
    %650 = vmatprep.subr.mxu0 0.0
    %651 = vmatpush2.msra.mxu0 0.0
    %652 = vmatprep.subr.mxu0 0.0
    %653 = vmatpush2.msra.mxu0 0.0
    %654 = vmatprep.subr.mxu0 0.0
    %655 = vmatpush2.msra.mxu0 0.0
    %656 = vmatprep.subr.mxu0 0.0
    %657 = vmatpush2.msra.mxu0 0.0
    %658 = vmatprep.subr.mxu0 0.0
    %659 = vmatpush2.msra.mxu0 0.0
    %660 = vmatprep.subr.mxu0 0.0
    %661 = vmatpush2.msra.mxu0 0.0
    %662 = vmatprep.subr.mxu0 0.0
    %663 = vmatpush2.msra.mxu0 0.0
    %664 = vmatprep.mubr.f32.mxu0 0.0
    %665 = vmatmul.mubr.f32.gmra.mxu0 %v598
    %v666 = vpop.f32.mrf.mxu0
    %v667 = vadd.f32 0.0, %v666
    %v668 = vpop.f32.mrf.mxu0
    %669 = vdwg.mxu0
    %v671 = vsel %vm508, %v667, 0
    %673 = vmatprep.subr.mxu0 0.0
    %674 = vmatpush1.msra.mxu0 0.0
    %675 = vmatprep.subr.mxu0 0.0
    %676 = vmatpush1.msra.mxu0 0.0
    %677 = vmatprep.subr.mxu0 0.0
    %678 = vmatpush1.msra.mxu0 0.0
    %679 = vmatprep.subr.mxu0 0.0
    %680 = vmatpush1.msra.mxu0 0.0
    %681 = vmatprep.subr.mxu0 0.0
    %682 = vmatpush1.msra.mxu0 0.0
    %683 = vmatprep.subr.mxu0 0.0
    %684 = vmatpush1.msra.mxu0 0.0
    %685 = vmatprep.subr.mxu0 0.0
    %686 = vmatpush1.msra.mxu0 0.0
    %687 = vmatprep.subr.mxu0 0.0
    %688 = vmatpush1.msra.mxu0 0.0
    %689 = vmatprep.subr.mxu0 0.0
    %690 = vmatpush1.msra.mxu0 0.0
    %691 = vmatprep.subr.mxu0 0.0
    %692 = vmatpush1.msra.mxu0 0.0
    %693 = vmatprep.subr.mxu0 0.0
    %694 = vmatpush1.msra.mxu0 0.0
    %695 = vmatprep.subr.mxu0 0.0
    %696 = vmatpush1.msra.mxu0 0.0
    %697 = vmatprep.subr.mxu0 0.0
    %698 = vmatpush1.msra.mxu0 0.0
    %699 = vmatprep.subr.mxu0 0.0
    %700 = vmatpush1.msra.mxu0 0.0
    %701 = vmatprep.subr.mxu0 0.0
    %702 = vmatpush1.msra.mxu0 %v501
    %703 = vmatprep.subr.mxu0 0.0
    %704 = vmatpush1.msra.mxu0 %v500
    %705 = vmatprep.subr.mxu0 0.0
    %706 = vmatpush2.msra.mxu0 0.0
    %707 = vmatprep.subr.mxu0 0.0
    %708 = vmatpush2.msra.mxu0 0.0
    %709 = vmatprep.subr.mxu0 0.0
    %710 = vmatpush2.msra.mxu0 0.0
    %711 = vmatprep.subr.mxu0 0.0
    %712 = vmatpush2.msra.mxu0 0.0
    %713 = vmatprep.subr.mxu0 0.0
    %714 = vmatpush2.msra.mxu0 0.0
    %715 = vmatprep.subr.mxu0 0.0
    %716 = vmatpush2.msra.mxu0 0.0
    %717 = vmatprep.subr.mxu0 0.0
    %718 = vmatpush2.msra.mxu0 0.0
    %719 = vmatprep.subr.mxu0 0.0
    %720 = vmatpush2.msra.mxu0 0.0
    %721 = vmatprep.subr.mxu0 0.0
    %722 = vmatpush2.msra.mxu0 0.0
    %723 = vmatprep.subr.mxu0 0.0
    %724 = vmatpush2.msra.mxu0 0.0
    %725 = vmatprep.subr.mxu0 0.0
    %726 = vmatpush2.msra.mxu0 0.0
    %727 = vmatprep.subr.mxu0 0.0
    %728 = vmatpush2.msra.mxu0 0.0
    %729 = vmatprep.subr.mxu0 0.0
    %730 = vmatpush2.msra.mxu0 0.0
    %731 = vmatprep.subr.mxu0 0.0
    %732 = vmatpush2.msra.mxu0 0.0
    %733 = vmatprep.subr.mxu0 0.0
    %734 = vmatpush2.msra.mxu0 0.0
    %735 = vmatprep.subr.mxu0 0.0
    %736 = vmatpush2.msra.mxu0 0.0
    %737 = vmatprep.mubr.f32.mxu0 0.0
    %738 = vmatmul.mubr.f32.gmra.mxu0 %v671
    %v739 = vpop.f32.mrf.mxu0
    %v740 = vadd.f32 0.0, %v739
    %v741 = vpop.f32.mrf.mxu0
    %742 = vdwg.mxu0
    %v743 = vadd.f32 %v281, %v740
    %744 = vrot.lane.b32.xlu0 %v415, 112
    %v745 = vpop.permute.xlu0 %744
    %746 = vrot.lane.b32.xlu0 %v417, 112
    %v747 = vpop.permute.xlu0 %746
    %v748 = vsel %vm508, %v745, 0
    %v750 = vsel %vm508, %v747, 0
    %752 = vmatprep.subr.mxu0 0.0
    %753 = vmatpush1.xpose.msra.mxu0 0.0
    %754 = vmatprep.subr.mxu0 0.0
    %755 = vmatpush1.xpose.msra.mxu0 0.0
    %756 = vmatprep.subr.mxu0 0.0
    %757 = vmatpush1.xpose.msra.mxu0 0.0
    %758 = vmatprep.subr.mxu0 0.0
    %759 = vmatpush1.xpose.msra.mxu0 0.0
    %760 = vmatprep.subr.mxu0 0.0
    %761 = vmatpush1.xpose.msra.mxu0 0.0
    %762 = vmatprep.subr.mxu0 0.0
    %763 = vmatpush1.xpose.msra.mxu0 0.0
    %764 = vmatprep.subr.mxu0 0.0
    %765 = vmatpush1.xpose.msra.mxu0 0.0
    %766 = vmatprep.subr.mxu0 0.0
    %767 = vmatpush1.xpose.msra.mxu0 0.0
    %768 = vmatprep.subr.mxu0 0.0
    %769 = vmatpush1.xpose.msra.mxu0 0.0
    %770 = vmatprep.subr.mxu0 0.0
    %771 = vmatpush1.xpose.msra.mxu0 0.0
    %772 = vmatprep.subr.mxu0 0.0
    %773 = vmatpush1.xpose.msra.mxu0 0.0
    %774 = vmatprep.subr.mxu0 0.0
    %775 = vmatpush1.xpose.msra.mxu0 0.0
    %776 = vmatprep.subr.mxu0 0.0
    %777 = vmatpush1.xpose.msra.mxu0 0.0
    %778 = vmatprep.subr.mxu0 0.0
    %779 = vmatpush1.xpose.msra.mxu0 0.0
    %780 = vmatprep.subr.mxu0 0.0
    %781 = vmatpush1.xpose.msra.mxu0 0.0
    %782 = vmatprep.subr.mxu0 0.0
    %783 = vmatpush1.xpose.msra.mxu0 %v750
    %784 = vmatprep.subr.mxu0 0.0
    %785 = vmatpush2.xpose.msra.mxu0 0.0
    %786 = vmatprep.subr.mxu0 0.0
    %787 = vmatpush2.xpose.msra.mxu0 0.0
    %788 = vmatprep.subr.mxu0 0.0
    %789 = vmatpush2.xpose.msra.mxu0 0.0
    %790 = vmatprep.subr.mxu0 0.0
    %791 = vmatpush2.xpose.msra.mxu0 0.0
    %792 = vmatprep.subr.mxu0 0.0
    %793 = vmatpush2.xpose.msra.mxu0 0.0
    %794 = vmatprep.subr.mxu0 0.0
    %795 = vmatpush2.xpose.msra.mxu0 0.0
    %796 = vmatprep.subr.mxu0 0.0
    %797 = vmatpush2.xpose.msra.mxu0 0.0
    %798 = vmatprep.subr.mxu0 0.0
    %799 = vmatpush2.xpose.msra.mxu0 0.0
    %800 = vmatprep.subr.mxu0 0.0
    %801 = vmatpush2.xpose.msra.mxu0 0.0
    %802 = vmatprep.subr.mxu0 0.0
    %803 = vmatpush2.xpose.msra.mxu0 0.0
    %804 = vmatprep.subr.mxu0 0.0
    %805 = vmatpush2.xpose.msra.mxu0 0.0
    %806 = vmatprep.subr.mxu0 0.0
    %807 = vmatpush2.xpose.msra.mxu0 0.0
    %808 = vmatprep.subr.mxu0 0.0
    %809 = vmatpush2.xpose.msra.mxu0 0.0
    %810 = vmatprep.subr.mxu0 0.0
    %811 = vmatpush2.xpose.msra.mxu0 0.0
    %812 = vmatprep.subr.mxu0 0.0
    %813 = vmatpush2.xpose.msra.mxu0 0.0
    %814 = vmatprep.subr.mxu0 0.0
    %815 = vmatpush2.xpose.msra.mxu0 0.0
    %816 = vmatprep.mubr.f32.mxu0 0.0
    %817 = vmatmul.mubr.f32.gmra.mxu0 %v748
    %v818 = vpop.f32.mrf.mxu0
    %v819 = vadd.f32 %v507, %v818
    %v820 = vpop.f32.mrf.mxu0
    %821 = vdwg.mxu0
    %v822 = vsel %vm585, %v819, -inf
    %823 = vmax.xlane.f32.xlu0 %v822
    %v824 = vpop.xlane.xlu0 %823
    %v825 = vsub.f32 %v819, %v824
    %v826 = vmul.f32 %v825, 1.442695
    %v827 = vpow.pop %v826
    %v828 = vsel %vm585, %v827, 0.0
    %829 = vadd.xlane.f32.xlu0 %v828
    %v830 = vpop.xlane.xlu0 %829
    %v831 = vrcp.pop %v830
    %v832 = vmul.f32 %v827, %v831
    %834 = vrot.lane.b32.xlu0 %v492, 112
    %v835 = vpop.permute.xlu0 %834
    %v838 = vsel %vm585, %v832, 0
    %840 = vmatprep.subr.mxu0 0.0
    %841 = vmatpush1.msra.mxu0 0.0
    %842 = vmatprep.subr.mxu0 0.0
    %843 = vmatpush1.msra.mxu0 0.0
    %844 = vmatprep.subr.mxu0 0.0
    %845 = vmatpush1.msra.mxu0 0.0
    %846 = vmatprep.subr.mxu0 0.0
    %847 = vmatpush1.msra.mxu0 0.0
    %848 = vmatprep.subr.mxu0 0.0
    %849 = vmatpush1.msra.mxu0 0.0
    %850 = vmatprep.subr.mxu0 0.0
    %851 = vmatpush1.msra.mxu0 0.0
    %852 = vmatprep.subr.mxu0 0.0
    %853 = vmatpush1.msra.mxu0 0.0
    %854 = vmatprep.subr.mxu0 0.0
    %855 = vmatpush1.msra.mxu0 0.0
    %856 = vmatprep.subr.mxu0 0.0
    %857 = vmatpush1.msra.mxu0 0.0
    %858 = vmatprep.subr.mxu0 0.0
    %859 = vmatpush1.msra.mxu0 0.0
    %860 = vmatprep.subr.mxu0 0.0
    %861 = vmatpush1.msra.mxu0 0.0
    %862 = vmatprep.subr.mxu0 0.0
    %863 = vmatpush1.msra.mxu0 0.0
    %864 = vmatprep.subr.mxu0 0.0
    %865 = vmatpush1.msra.mxu0 0.0
    %866 = vmatprep.subr.mxu0 0.0
    %867 = vmatpush1.msra.mxu0 0.0
    %868 = vmatprep.subr.mxu0 0.0
    %869 = vmatpush1.msra.mxu0 0.0
    %870 = vmatprep.subr.mxu0 0.0
    %871 = vmatpush1.msra.mxu0 %v835
    %872 = vmatprep.subr.mxu0 0.0
    %873 = vmatpush2.msra.mxu0 0.0
    %874 = vmatprep.subr.mxu0 0.0
    %875 = vmatpush2.msra.mxu0 0.0
    %876 = vmatprep.subr.mxu0 0.0
    %877 = vmatpush2.msra.mxu0 0.0
    %878 = vmatprep.subr.mxu0 0.0
    %879 = vmatpush2.msra.mxu0 0.0
    %880 = vmatprep.subr.mxu0 0.0
    %881 = vmatpush2.msra.mxu0 0.0
    %882 = vmatprep.subr.mxu0 0.0
    %883 = vmatpush2.msra.mxu0 0.0
    %884 = vmatprep.subr.mxu0 0.0
    %885 = vmatpush2.msra.mxu0 0.0
    %886 = vmatprep.subr.mxu0 0.0
    %887 = vmatpush2.msra.mxu0 0.0
    %888 = vmatprep.subr.mxu0 0.0
    %889 = vmatpush2.msra.mxu0 0.0
    %890 = vmatprep.subr.mxu0 0.0
    %891 = vmatpush2.msra.mxu0 0.0
    %892 = vmatprep.subr.mxu0 0.0
    %893 = vmatpush2.msra.mxu0 0.0
    %894 = vmatprep.subr.mxu0 0.0
    %895 = vmatpush2.msra.mxu0 0.0
    %896 = vmatprep.subr.mxu0 0.0
    %897 = vmatpush2.msra.mxu0 0.0
    %898 = vmatprep.subr.mxu0 0.0
    %899 = vmatpush2.msra.mxu0 0.0
    %900 = vmatprep.subr.mxu0 0.0
    %901 = vmatpush2.msra.mxu0 0.0
    %902 = vmatprep.subr.mxu0 0.0
    %903 = vmatpush2.msra.mxu0 0.0
    %904 = vmatprep.mubr.f32.mxu0 0.0
    %905 = vmatmul.mubr.f32.gmra.mxu0 %v838
    %v906 = vpop.f32.mrf.mxu0
    %v907 = vadd.f32 0.0, %v906
    %v908 = vpop.f32.mrf.mxu0
    %909 = vdwg.mxu0
    %v911 = vsel %vm508, %v907, 0
    %913 = vmatprep.subr.mxu0 0.0
    %914 = vmatpush1.msra.mxu0 0.0
    %915 = vmatprep.subr.mxu0 0.0
    %916 = vmatpush1.msra.mxu0 0.0
    %917 = vmatprep.subr.mxu0 0.0
    %918 = vmatpush1.msra.mxu0 0.0
    %919 = vmatprep.subr.mxu0 0.0
    %920 = vmatpush1.msra.mxu0 0.0
    %921 = vmatprep.subr.mxu0 0.0
    %922 = vmatpush1.msra.mxu0 0.0
    %923 = vmatprep.subr.mxu0 0.0
    %924 = vmatpush1.msra.mxu0 0.0
    %925 = vmatprep.subr.mxu0 0.0
    %926 = vmatpush1.msra.mxu0 0.0
    %927 = vmatprep.subr.mxu0 0.0
    %928 = vmatpush1.msra.mxu0 0.0
    %929 = vmatprep.subr.mxu0 0.0
    %930 = vmatpush1.msra.mxu0 0.0
    %931 = vmatprep.subr.mxu0 0.0
    %932 = vmatpush1.msra.mxu0 0.0
    %933 = vmatprep.subr.mxu0 0.0
    %934 = vmatpush1.msra.mxu0 0.0
    %935 = vmatprep.subr.mxu0 0.0
    %936 = vmatpush1.msra.mxu0 0.0
    %937 = vmatprep.subr.mxu0 0.0
    %938 = vmatpush1.msra.mxu0 0.0
    %939 = vmatprep.subr.mxu0 0.0
    %940 = vmatpush1.msra.mxu0 0.0
    %941 = vmatprep.subr.mxu0 0.0
    %942 = vmatpush1.msra.mxu0 %v503
    %943 = vmatprep.subr.mxu0 0.0
    %944 = vmatpush1.msra.mxu0 %v502
    %945 = vmatprep.subr.mxu0 0.0
    %946 = vmatpush2.msra.mxu0 0.0
    %947 = vmatprep.subr.mxu0 0.0
    %948 = vmatpush2.msra.mxu0 0.0
    %949 = vmatprep.subr.mxu0 0.0
    %950 = vmatpush2.msra.mxu0 0.0
    %951 = vmatprep.subr.mxu0 0.0
    %952 = vmatpush2.msra.mxu0 0.0
    %953 = vmatprep.subr.mxu0 0.0
    %954 = vmatpush2.msra.mxu0 0.0
    %955 = vmatprep.subr.mxu0 0.0
    %956 = vmatpush2.msra.mxu0 0.0
    %957 = vmatprep.subr.mxu0 0.0
    %958 = vmatpush2.msra.mxu0 0.0
    %959 = vmatprep.subr.mxu0 0.0
    %960 = vmatpush2.msra.mxu0 0.0
    %961 = vmatprep.subr.mxu0 0.0
    %962 = vmatpush2.msra.mxu0 0.0
    %963 = vmatprep.subr.mxu0 0.0
    %964 = vmatpush2.msra.mxu0 0.0
    %965 = vmatprep.subr.mxu0 0.0
    %966 = vmatpush2.msra.mxu0 0.0
    %967 = vmatprep.subr.mxu0 0.0
    %968 = vmatpush2.msra.mxu0 0.0
    %969 = vmatprep.subr.mxu0 0.0
    %970 = vmatpush2.msra.mxu0 0.0
    %971 = vmatprep.subr.mxu0 0.0
    %972 = vmatpush2.msra.mxu0 0.0
    %973 = vmatprep.subr.mxu0 0.0
    %974 = vmatpush2.msra.mxu0 0.0
    %975 = vmatprep.subr.mxu0 0.0
    %976 = vmatpush2.msra.mxu0 0.0
    %977 = vmatprep.mubr.f32.mxu0 0.0
    %978 = vmatmul.mubr.f32.gmra.mxu0 %v911
    %v979 = vpop.f32.mrf.mxu0
    %v980 = vadd.f32 0.0, %v979
    %v981 = vpop.f32.mrf.mxu0
    %982 = vdwg.mxu0
    %v983 = vadd.f32 %v743, %v980
    %984 = vst [vmem:[#allocation2] sm:$0xff] %v983
    %v985 = vlaneseq
    %v986 = vshrl.u32 %v985, 7
    %v987 = vsub.s32 1, %v986
    %v988 = vrot.slane %v238, %v987
    %v990 = vsel %vm508, %v421, 0
    %v993 = vsel %vm508, %v423, 0
    %995 = vmatprep.subr.mxu0 0.0
    %996 = vmatpush1.xpose.msra.mxu0 0.0
    %997 = vmatprep.subr.mxu0 0.0
    %998 = vmatpush1.xpose.msra.mxu0 0.0
    %999 = vmatprep.subr.mxu0 0.0
    %1000 = vmatpush1.xpose.msra.mxu0 0.0
    %1001 = vmatprep.subr.mxu0 0.0
    %1002 = vmatpush1.xpose.msra.mxu0 0.0
    %1003 = vmatprep.subr.mxu0 0.0
    %1004 = vmatpush1.xpose.msra.mxu0 0.0
    %1005 = vmatprep.subr.mxu0 0.0
    %1006 = vmatpush1.xpose.msra.mxu0 0.0
    %1007 = vmatprep.subr.mxu0 0.0
    %1008 = vmatpush1.xpose.msra.mxu0 0.0
    %1009 = vmatprep.subr.mxu0 0.0
    %1010 = vmatpush1.xpose.msra.mxu0 0.0
    %1011 = vmatprep.subr.mxu0 0.0
    %1012 = vmatpush1.xpose.msra.mxu0 0.0
    %1013 = vmatprep.subr.mxu0 0.0
    %1014 = vmatpush1.xpose.msra.mxu0 0.0
    %1015 = vmatprep.subr.mxu0 0.0
    %1016 = vmatpush1.xpose.msra.mxu0 0.0
    %1017 = vmatprep.subr.mxu0 0.0
    %1018 = vmatpush1.xpose.msra.mxu0 0.0
    %1019 = vmatprep.subr.mxu0 0.0
    %1020 = vmatpush1.xpose.msra.mxu0 0.0
    %1021 = vmatprep.subr.mxu0 0.0
    %1022 = vmatpush1.xpose.msra.mxu0 0.0
    %1023 = vmatprep.subr.mxu0 0.0
    %1024 = vmatpush1.xpose.msra.mxu0 0.0
    %1025 = vmatprep.subr.mxu0 0.0
    %1026 = vmatpush1.xpose.msra.mxu0 %v993
    %1027 = vmatprep.subr.mxu0 0.0
    %1028 = vmatpush2.xpose.msra.mxu0 0.0
    %1029 = vmatprep.subr.mxu0 0.0
    %1030 = vmatpush2.xpose.msra.mxu0 0.0
    %1031 = vmatprep.subr.mxu0 0.0
    %1032 = vmatpush2.xpose.msra.mxu0 0.0
    %1033 = vmatprep.subr.mxu0 0.0
    %1034 = vmatpush2.xpose.msra.mxu0 0.0
    %1035 = vmatprep.subr.mxu0 0.0
    %1036 = vmatpush2.xpose.msra.mxu0 0.0
    %1037 = vmatprep.subr.mxu0 0.0
    %1038 = vmatpush2.xpose.msra.mxu0 0.0
    %1039 = vmatprep.subr.mxu0 0.0
    %1040 = vmatpush2.xpose.msra.mxu0 0.0
    %1041 = vmatprep.subr.mxu0 0.0
    %1042 = vmatpush2.xpose.msra.mxu0 0.0
    %1043 = vmatprep.subr.mxu0 0.0
    %1044 = vmatpush2.xpose.msra.mxu0 0.0
    %1045 = vmatprep.subr.mxu0 0.0
    %1046 = vmatpush2.xpose.msra.mxu0 0.0
    %1047 = vmatprep.subr.mxu0 0.0
    %1048 = vmatpush2.xpose.msra.mxu0 0.0
    %1049 = vmatprep.subr.mxu0 0.0
    %1050 = vmatpush2.xpose.msra.mxu0 0.0
    %1051 = vmatprep.subr.mxu0 0.0
    %1052 = vmatpush2.xpose.msra.mxu0 0.0
    %1053 = vmatprep.subr.mxu0 0.0
    %1054 = vmatpush2.xpose.msra.mxu0 0.0
    %1055 = vmatprep.subr.mxu0 0.0
    %1056 = vmatpush2.xpose.msra.mxu0 0.0
    %1057 = vmatprep.subr.mxu0 0.0
    %1058 = vmatpush2.xpose.msra.mxu0 0.0
    %1059 = vmatprep.mubr.f32.mxu0 0.0
    %1060 = vmatmul.mubr.f32.gmra.mxu0 %v990
    %v1061 = vpop.f32.mrf.mxu0
    %v1062 = vadd.f32 %v988, %v1061
    %v1063 = vpop.f32.mrf.mxu0
    %1064 = vdwg.mxu0
    %v1065 = vsel %vm585, %v1062, -inf
    %1066 = vmax.xlane.f32.xlu0 %v1065
    %v1067 = vpop.xlane.xlu0 %1066
    %v1068 = vsub.f32 %v1062, %v1067
    %v1069 = vmul.f32 %v1068, 1.442695
    %v1070 = vpow.pop %v1069
    %v1071 = vsel %vm585, %v1070, 0.0
    %1072 = vadd.xlane.f32.xlu0 %v1071
    %v1073 = vpop.xlane.xlu0 %1072
    %v1074 = vrcp.pop %v1073
    %v1075 = vmul.f32 %v1070, %v1074
    %v1077 = vsel %vm585, %v1075, 0
    %1079 = vmatprep.subr.mxu0 0.0
    %1080 = vmatpush1.msra.mxu0 0.0
    %1081 = vmatprep.subr.mxu0 0.0
    %1082 = vmatpush1.msra.mxu0 0.0
    %1083 = vmatprep.subr.mxu0 0.0
    %1084 = vmatpush1.msra.mxu0 0.0
    %1085 = vmatprep.subr.mxu0 0.0
    %1086 = vmatpush1.msra.mxu0 0.0
    %1087 = vmatprep.subr.mxu0 0.0
    %1088 = vmatpush1.msra.mxu0 0.0
    %1089 = vmatprep.subr.mxu0 0.0
    %1090 = vmatpush1.msra.mxu0 0.0
    %1091 = vmatprep.subr.mxu0 0.0
    %1092 = vmatpush1.msra.mxu0 0.0
    %1093 = vmatprep.subr.mxu0 0.0
    %1094 = vmatpush1.msra.mxu0 0.0
    %1095 = vmatprep.subr.mxu0 0.0
    %1096 = vmatpush1.msra.mxu0 0.0
    %1097 = vmatprep.subr.mxu0 0.0
    %1098 = vmatpush1.msra.mxu0 0.0
    %1099 = vmatprep.subr.mxu0 0.0
    %1100 = vmatpush1.msra.mxu0 0.0
    %1101 = vmatprep.subr.mxu0 0.0
    %1102 = vmatpush1.msra.mxu0 0.0
    %1103 = vmatprep.subr.mxu0 0.0
    %1104 = vmatpush1.msra.mxu0 0.0
    %1105 = vmatprep.subr.mxu0 0.0
    %1106 = vmatpush1.msra.mxu0 0.0
    %1107 = vmatprep.subr.mxu0 0.0
    %1108 = vmatpush1.msra.mxu0 0.0
    %1109 = vmatprep.subr.mxu0 0.0
    %1110 = vmatpush1.msra.mxu0 %v497
    %1111 = vmatprep.subr.mxu0 0.0
    %1112 = vmatpush2.msra.mxu0 0.0
    %1113 = vmatprep.subr.mxu0 0.0
    %1114 = vmatpush2.msra.mxu0 0.0
    %1115 = vmatprep.subr.mxu0 0.0
    %1116 = vmatpush2.msra.mxu0 0.0
    %1117 = vmatprep.subr.mxu0 0.0
    %1118 = vmatpush2.msra.mxu0 0.0
    %1119 = vmatprep.subr.mxu0 0.0
    %1120 = vmatpush2.msra.mxu0 0.0
    %1121 = vmatprep.subr.mxu0 0.0
    %1122 = vmatpush2.msra.mxu0 0.0
    %1123 = vmatprep.subr.mxu0 0.0
    %1124 = vmatpush2.msra.mxu0 0.0
    %1125 = vmatprep.subr.mxu0 0.0
    %1126 = vmatpush2.msra.mxu0 0.0
    %1127 = vmatprep.subr.mxu0 0.0
    %1128 = vmatpush2.msra.mxu0 0.0
    %1129 = vmatprep.subr.mxu0 0.0
    %1130 = vmatpush2.msra.mxu0 0.0
    %1131 = vmatprep.subr.mxu0 0.0
    %1132 = vmatpush2.msra.mxu0 0.0
    %1133 = vmatprep.subr.mxu0 0.0
    %1134 = vmatpush2.msra.mxu0 0.0
    %1135 = vmatprep.subr.mxu0 0.0
    %1136 = vmatpush2.msra.mxu0 0.0
    %1137 = vmatprep.subr.mxu0 0.0
    %1138 = vmatpush2.msra.mxu0 0.0
    %1139 = vmatprep.subr.mxu0 0.0
    %1140 = vmatpush2.msra.mxu0 0.0
    %1141 = vmatprep.subr.mxu0 0.0
    %1142 = vmatpush2.msra.mxu0 0.0
    %1143 = vmatprep.mubr.f32.mxu0 0.0
    %1144 = vmatmul.mubr.f32.gmra.mxu0 %v1077
    %v1145 = vpop.f32.mrf.mxu0
    %v1146 = vadd.f32 0.0, %v1145
    %v1147 = vpop.f32.mrf.mxu0
    %1148 = vdwg.mxu0
    %v1150 = vsel %vm508, %v1146, 0
    %1152 = vmatprep.subr.mxu0 0.0
    %1153 = vmatpush1.msra.mxu0 0.0
    %1154 = vmatprep.subr.mxu0 0.0
    %1155 = vmatpush1.msra.mxu0 0.0
    %1156 = vmatprep.subr.mxu0 0.0
    %1157 = vmatpush1.msra.mxu0 0.0
    %1158 = vmatprep.subr.mxu0 0.0
    %1159 = vmatpush1.msra.mxu0 0.0
    %1160 = vmatprep.subr.mxu0 0.0
    %1161 = vmatpush1.msra.mxu0 0.0
    %1162 = vmatprep.subr.mxu0 0.0
    %1163 = vmatpush1.msra.mxu0 0.0
    %1164 = vmatprep.subr.mxu0 0.0
    %1165 = vmatpush1.msra.mxu0 0.0
    %1166 = vmatprep.subr.mxu0 0.0
    %1167 = vmatpush1.msra.mxu0 0.0
    %1168 = vmatprep.subr.mxu0 0.0
    %1169 = vmatpush1.msra.mxu0 0.0
    %1170 = vmatprep.subr.mxu0 0.0
    %1171 = vmatpush1.msra.mxu0 0.0
    %1172 = vmatprep.subr.mxu0 0.0
    %1173 = vmatpush1.msra.mxu0 0.0
    %1174 = vmatprep.subr.mxu0 0.0
    %1175 = vmatpush1.msra.mxu0 0.0
    %1176 = vmatprep.subr.mxu0 0.0
    %1177 = vmatpush1.msra.mxu0 0.0
    %1178 = vmatprep.subr.mxu0 0.0
    %1179 = vmatpush1.msra.mxu0 0.0
    %1180 = vmatprep.subr.mxu0 0.0
    %1181 = vmatpush1.msra.mxu0 %v501
    %1182 = vmatprep.subr.mxu0 0.0
    %1183 = vmatpush1.msra.mxu0 %v500
    %1184 = vmatprep.subr.mxu0 0.0
    %1185 = vmatpush2.msra.mxu0 0.0
    %1186 = vmatprep.subr.mxu0 0.0
    %1187 = vmatpush2.msra.mxu0 0.0
    %1188 = vmatprep.subr.mxu0 0.0
    %1189 = vmatpush2.msra.mxu0 0.0
    %1190 = vmatprep.subr.mxu0 0.0
    %1191 = vmatpush2.msra.mxu0 0.0
    %1192 = vmatprep.subr.mxu0 0.0
    %1193 = vmatpush2.msra.mxu0 0.0
    %1194 = vmatprep.subr.mxu0 0.0
    %1195 = vmatpush2.msra.mxu0 0.0
    %1196 = vmatprep.subr.mxu0 0.0
    %1197 = vmatpush2.msra.mxu0 0.0
    %1198 = vmatprep.subr.mxu0 0.0
    %1199 = vmatpush2.msra.mxu0 0.0
    %1200 = vmatprep.subr.mxu0 0.0
    %1201 = vmatpush2.msra.mxu0 0.0
    %1202 = vmatprep.subr.mxu0 0.0
    %1203 = vmatpush2.msra.mxu0 0.0
    %1204 = vmatprep.subr.mxu0 0.0
    %1205 = vmatpush2.msra.mxu0 0.0
    %1206 = vmatprep.subr.mxu0 0.0
    %1207 = vmatpush2.msra.mxu0 0.0
    %1208 = vmatprep.subr.mxu0 0.0
    %1209 = vmatpush2.msra.mxu0 0.0
    %1210 = vmatprep.subr.mxu0 0.0
    %1211 = vmatpush2.msra.mxu0 0.0
    %1212 = vmatprep.subr.mxu0 0.0
    %1213 = vmatpush2.msra.mxu0 0.0
    %1214 = vmatprep.subr.mxu0 0.0
    %1215 = vmatpush2.msra.mxu0 0.0
    %1216 = vmatprep.mubr.f32.mxu0 0.0
    %1217 = vmatmul.mubr.f32.gmra.mxu0 %v1150
    %v1218 = vpop.f32.mrf.mxu0
    %v1219 = vadd.f32 0.0, %v1218
    %v1220 = vpop.f32.mrf.mxu0
    %1221 = vdwg.mxu0
    %v1222 = vadd.f32 %v282, %v1219
    %1223 = vrot.lane.b32.xlu0 %v421, 112
    %v1224 = vpop.permute.xlu0 %1223
    %1225 = vrot.lane.b32.xlu0 %v423, 112
    %v1226 = vpop.permute.xlu0 %1225
    %v1227 = vsel %vm508, %v1224, 0
    %v1229 = vsel %vm508, %v1226, 0
    %1231 = vmatprep.subr.mxu0 0.0
    %1232 = vmatpush1.xpose.msra.mxu0 0.0
    %1233 = vmatprep.subr.mxu0 0.0
    %1234 = vmatpush1.xpose.msra.mxu0 0.0
    %1235 = vmatprep.subr.mxu0 0.0
    %1236 = vmatpush1.xpose.msra.mxu0 0.0
    %1237 = vmatprep.subr.mxu0 0.0
    %1238 = vmatpush1.xpose.msra.mxu0 0.0
    %1239 = vmatprep.subr.mxu0 0.0
    %1240 = vmatpush1.xpose.msra.mxu0 0.0
    %1241 = vmatprep.subr.mxu0 0.0
    %1242 = vmatpush1.xpose.msra.mxu0 0.0
    %1243 = vmatprep.subr.mxu0 0.0
    %1244 = vmatpush1.xpose.msra.mxu0 0.0
    %1245 = vmatprep.subr.mxu0 0.0
    %1246 = vmatpush1.xpose.msra.mxu0 0.0
    %1247 = vmatprep.subr.mxu0 0.0
    %1248 = vmatpush1.xpose.msra.mxu0 0.0
    %1249 = vmatprep.subr.mxu0 0.0
    %1250 = vmatpush1.xpose.msra.mxu0 0.0
    %1251 = vmatprep.subr.mxu0 0.0
    %1252 = vmatpush1.xpose.msra.mxu0 0.0
    %1253 = vmatprep.subr.mxu0 0.0
    %1254 = vmatpush1.xpose.msra.mxu0 0.0
    %1255 = vmatprep.subr.mxu0 0.0
    %1256 = vmatpush1.xpose.msra.mxu0 0.0
    %1257 = vmatprep.subr.mxu0 0.0
    %1258 = vmatpush1.xpose.msra.mxu0 0.0
    %1259 = vmatprep.subr.mxu0 0.0
    %1260 = vmatpush1.xpose.msra.mxu0 0.0
    %1261 = vmatprep.subr.mxu0 0.0
    %1262 = vmatpush1.xpose.msra.mxu0 %v1229
    %1263 = vmatprep.subr.mxu0 0.0
    %1264 = vmatpush2.xpose.msra.mxu0 0.0
    %1265 = vmatprep.subr.mxu0 0.0
    %1266 = vmatpush2.xpose.msra.mxu0 0.0
    %1267 = vmatprep.subr.mxu0 0.0
    %1268 = vmatpush2.xpose.msra.mxu0 0.0
    %1269 = vmatprep.subr.mxu0 0.0
    %1270 = vmatpush2.xpose.msra.mxu0 0.0
    %1271 = vmatprep.subr.mxu0 0.0
    %1272 = vmatpush2.xpose.msra.mxu0 0.0
    %1273 = vmatprep.subr.mxu0 0.0
    %1274 = vmatpush2.xpose.msra.mxu0 0.0
    %1275 = vmatprep.subr.mxu0 0.0
    %1276 = vmatpush2.xpose.msra.mxu0 0.0
    %1277 = vmatprep.subr.mxu0 0.0
    %1278 = vmatpush2.xpose.msra.mxu0 0.0
    %1279 = vmatprep.subr.mxu0 0.0
    %1280 = vmatpush2.xpose.msra.mxu0 0.0
    %1281 = vmatprep.subr.mxu0 0.0
    %1282 = vmatpush2.xpose.msra.mxu0 0.0
    %1283 = vmatprep.subr.mxu0 0.0
    %1284 = vmatpush2.xpose.msra.mxu0 0.0
    %1285 = vmatprep.subr.mxu0 0.0
    %1286 = vmatpush2.xpose.msra.mxu0 0.0
    %1287 = vmatprep.subr.mxu0 0.0
    %1288 = vmatpush2.xpose.msra.mxu0 0.0
    %1289 = vmatprep.subr.mxu0 0.0
    %1290 = vmatpush2.xpose.msra.mxu0 0.0
    %1291 = vmatprep.subr.mxu0 0.0
    %1292 = vmatpush2.xpose.msra.mxu0 0.0
    %1293 = vmatprep.subr.mxu0 0.0
    %1294 = vmatpush2.xpose.msra.mxu0 0.0
    %1295 = vmatprep.mubr.f32.mxu0 0.0
    %1296 = vmatmul.mubr.f32.gmra.mxu0 %v1227
    %v1297 = vpop.f32.mrf.mxu0
    %v1298 = vadd.f32 %v988, %v1297
    %v1299 = vpop.f32.mrf.mxu0
    %1300 = vdwg.mxu0
    %v1301 = vsel %vm585, %v1298, -inf
    %1302 = vmax.xlane.f32.xlu0 %v1301
    %v1303 = vpop.xlane.xlu0 %1302
    %v1304 = vsub.f32 %v1298, %v1303
    %v1305 = vmul.f32 %v1304, 1.442695
    %v1306 = vpow.pop %v1305
    %v1307 = vsel %vm585, %v1306, 0.0
    %1308 = vadd.xlane.f32.xlu0 %v1307
    %v1309 = vpop.xlane.xlu0 %1308
    %v1310 = vrcp.pop %v1309
    %v1311 = vmul.f32 %v1306, %v1310
    %1313 = vrot.lane.b32.xlu0 %v497, 112
    %v1314 = vpop.permute.xlu0 %1313
    %v1317 = vsel %vm585, %v1311, 0
    %1319 = vmatprep.subr.mxu0 0.0
    %1320 = vmatpush1.msra.mxu0 0.0
    %1321 = vmatprep.subr.mxu0 0.0
    %1322 = vmatpush1.msra.mxu0 0.0
    %1323 = vmatprep.subr.mxu0 0.0
    %1324 = vmatpush1.msra.mxu0 0.0
    %1325 = vmatprep.subr.mxu0 0.0
    %1326 = vmatpush1.msra.mxu0 0.0
    %1327 = vmatprep.subr.mxu0 0.0
    %1328 = vmatpush1.msra.mxu0 0.0
    %1329 = vmatprep.subr.mxu0 0.0
    %1330 = vmatpush1.msra.mxu0 0.0
    %1331 = vmatprep.subr.mxu0 0.0
    %1332 = vmatpush1.msra.mxu0 0.0
    %1333 = vmatprep.subr.mxu0 0.0
    %1334 = vmatpush1.msra.mxu0 0.0
    %1335 = vmatprep.subr.mxu0 0.0
    %1336 = vmatpush1.msra.mxu0 0.0
    %1337 = vmatprep.subr.mxu0 0.0
    %1338 = vmatpush1.msra.mxu0 0.0
    %1339 = vmatprep.subr.mxu0 0.0
    %1340 = vmatpush1.msra.mxu0 0.0
    %1341 = vmatprep.subr.mxu0 0.0
    %1342 = vmatpush1.msra.mxu0 0.0
    %1343 = vmatprep.subr.mxu0 0.0
    %1344 = vmatpush1.msra.mxu0 0.0
    %1345 = vmatprep.subr.mxu0 0.0
    %1346 = vmatpush1.msra.mxu0 0.0
    %1347 = vmatprep.subr.mxu0 0.0
    %1348 = vmatpush1.msra.mxu0 0.0
    %1349 = vmatprep.subr.mxu0 0.0
    %1350 = vmatpush1.msra.mxu0 %v1314
    %1351 = vmatprep.subr.mxu0 0.0
    %1352 = vmatpush2.msra.mxu0 0.0
    %1353 = vmatprep.subr.mxu0 0.0
    %1354 = vmatpush2.msra.mxu0 0.0
    %1355 = vmatprep.subr.mxu0 0.0
    %1356 = vmatpush2.msra.mxu0 0.0
    %1357 = vmatprep.subr.mxu0 0.0
    %1358 = vmatpush2.msra.mxu0 0.0
    %1359 = vmatprep.subr.mxu0 0.0
    %1360 = vmatpush2.msra.mxu0 0.0
    %1361 = vmatprep.subr.mxu0 0.0
    %1362 = vmatpush2.msra.mxu0 0.0
    %1363 = vmatprep.subr.mxu0 0.0
    %1364 = vmatpush2.msra.mxu0 0.0
    %1365 = vmatprep.subr.mxu0 0.0
    %1366 = vmatpush2.msra.mxu0 0.0
    %1367 = vmatprep.subr.mxu0 0.0
    %1368 = vmatpush2.msra.mxu0 0.0
    %1369 = vmatprep.subr.mxu0 0.0
    %1370 = vmatpush2.msra.mxu0 0.0
    %1371 = vmatprep.subr.mxu0 0.0
    %1372 = vmatpush2.msra.mxu0 0.0
    %1373 = vmatprep.subr.mxu0 0.0
    %1374 = vmatpush2.msra.mxu0 0.0
    %1375 = vmatprep.subr.mxu0 0.0
    %1376 = vmatpush2.msra.mxu0 0.0
    %1377 = vmatprep.subr.mxu0 0.0
    %1378 = vmatpush2.msra.mxu0 0.0
    %1379 = vmatprep.subr.mxu0 0.0
    %1380 = vmatpush2.msra.mxu0 0.0
    %1381 = vmatprep.subr.mxu0 0.0
    %1382 = vmatpush2.msra.mxu0 0.0
    %1383 = vmatprep.mubr.f32.mxu0 0.0
    %1384 = vmatmul.mubr.f32.gmra.mxu0 %v1317
    %v1385 = vpop.f32.mrf.mxu0
    %v1386 = vadd.f32 0.0, %v1385
    %v1387 = vpop.f32.mrf.mxu0
    %1388 = vdwg.mxu0
    %v1390 = vsel %vm508, %v1386, 0
    %1392 = vmatprep.subr.mxu0 0.0
    %1393 = vmatpush1.msra.mxu0 0.0
    %1394 = vmatprep.subr.mxu0 0.0
    %1395 = vmatpush1.msra.mxu0 0.0
    %1396 = vmatprep.subr.mxu0 0.0
    %1397 = vmatpush1.msra.mxu0 0.0
    %1398 = vmatprep.subr.mxu0 0.0
    %1399 = vmatpush1.msra.mxu0 0.0
    %1400 = vmatprep.subr.mxu0 0.0
    %1401 = vmatpush1.msra.mxu0 0.0
    %1402 = vmatprep.subr.mxu0 0.0
    %1403 = vmatpush1.msra.mxu0 0.0
    %1404 = vmatprep.subr.mxu0 0.0
    %1405 = vmatpush1.msra.mxu0 0.0
    %1406 = vmatprep.subr.mxu0 0.0
    %1407 = vmatpush1.msra.mxu0 0.0
    %1408 = vmatprep.subr.mxu0 0.0
    %1409 = vmatpush1.msra.mxu0 0.0
    %1410 = vmatprep.subr.mxu0 0.0
    %1411 = vmatpush1.msra.mxu0 0.0
    %1412 = vmatprep.subr.mxu0 0.0
    %1413 = vmatpush1.msra.mxu0 0.0
    %1414 = vmatprep.subr.mxu0 0.0
    %1415 = vmatpush1.msra.mxu0 0.0
    %1416 = vmatprep.subr.mxu0 0.0
    %1417 = vmatpush1.msra.mxu0 0.0
    %1418 = vmatprep.subr.mxu0 0.0
    %1419 = vmatpush1.msra.mxu0 0.0
    %1420 = vmatprep.subr.mxu0 0.0
    %1421 = vmatpush1.msra.mxu0 %v503
    %1422 = vmatprep.subr.mxu0 0.0
    %1423 = vmatpush1.msra.mxu0 %v502
    %1424 = vmatprep.subr.mxu0 0.0
    %1425 = vmatpush2.msra.mxu0 0.0
    %1426 = vmatprep.subr.mxu0 0.0
    %1427 = vmatpush2.msra.mxu0 0.0
    %1428 = vmatprep.subr.mxu0 0.0
    %1429 = vmatpush2.msra.mxu0 0.0
    %1430 = vmatprep.subr.mxu0 0.0
    %1431 = vmatpush2.msra.mxu0 0.0
    %1432 = vmatprep.subr.mxu0 0.0
    %1433 = vmatpush2.msra.mxu0 0.0
    %1434 = vmatprep.subr.mxu0 0.0
    %1435 = vmatpush2.msra.mxu0 0.0
    %1436 = vmatprep.subr.mxu0 0.0
    %1437 = vmatpush2.msra.mxu0 0.0
    %1438 = vmatprep.subr.mxu0 0.0
    %1439 = vmatpush2.msra.mxu0 0.0
    %1440 = vmatprep.subr.mxu0 0.0
    %1441 = vmatpush2.msra.mxu0 0.0
    %1442 = vmatprep.subr.mxu0 0.0
    %1443 = vmatpush2.msra.mxu0 0.0
    %1444 = vmatprep.subr.mxu0 0.0
    %1445 = vmatpush2.msra.mxu0 0.0
    %1446 = vmatprep.subr.mxu0 0.0
    %1447 = vmatpush2.msra.mxu0 0.0
    %1448 = vmatprep.subr.mxu0 0.0
    %1449 = vmatpush2.msra.mxu0 0.0
    %1450 = vmatprep.subr.mxu0 0.0
    %1451 = vmatpush2.msra.mxu0 0.0
    %1452 = vmatprep.subr.mxu0 0.0
    %1453 = vmatpush2.msra.mxu0 0.0
    %1454 = vmatprep.subr.mxu0 0.0
    %1455 = vmatpush2.msra.mxu0 0.0
    %1456 = vmatprep.mubr.f32.mxu0 0.0
    %1457 = vmatmul.mubr.f32.gmra.mxu0 %v1390
    %v1458 = vpop.f32.mrf.mxu0
    %v1459 = vadd.f32 0.0, %v1458
    %v1460 = vpop.f32.mrf.mxu0
    %1461 = vdwg.mxu0
    %v1462 = vadd.f32 %v1222, %v1459
    %1463 = vst [vmem:[#allocation2 + $0x8] sm:$0xff] %v1462
    %v1464 = vld [vmem:[#allocation2] sm:$0xff]
    %v1465 = vld [vmem:[#allocation2 + $0x8] sm:$0xff]
    %v1466 = vld [vmem:[%s7] sm:$0x1]
    %v1468 = vlaneseq
    %v1469 = vshrl.u32 %v1468, 7
    %v1470 = vsub.s32 0, %v1469
    %v1471 = vrot.slane %v1466, %v1470
    %v1473 = vadd.f32 %v1464, %v1471
    %v1474 = vadd.f32 %v1465, %v1471
    %v1475 = vld [vmem:[%s8] sm:$0x1]
    %v1476 = vld [vmem:[#allocation9] sm:$0x1]
    %1477 = vadd.xlane.f32.xlu0 %v1473
    %v1478 = vpop.xlane.xlu0 %1477
    %1479 = vadd.xlane.f32.xlu0 %v1474
    %v1480 = vpop.xlane.xlu0 %1479
    %v1481 = vmul.f32 %v1478, 0.03125
    %v1482 = vmul.f32 %v1480, 0.03125
    %v1483 = vsub.f32 %v1473, %v1481
    %v1484 = vsub.f32 %v1474, %v1482
    %v1485 = vmul.f32 %v1483, %v237
    %v1486 = vmul.f32 %v1484, %v237
    %v1487 = vmul.f32 %v1485, %v1485
    %v1488 = vmul.f32 %v1486, %v1486
    %1489 = vadd.xlane.f32.xlu0 %v1487
    %v1490 = vpop.xlane.xlu0 %1489
    %1491 = vadd.xlane.f32.xlu0 %v1488
    %v1492 = vpop.xlane.xlu0 %1491
    %v1493 = vmul.f32 %v1490, 0.03125
    %v1494 = vmul.f32 %v1492, 0.03125
    %v1495 = vadd.f32 %v1493, 1e-12
    %v1496 = vadd.f32 %v1494, 1e-12
    %v1497 = vrsqrt.pop %v1495
    %v1498 = vrsqrt.pop %v1496
    %v1499 = vmul.f32 %v1485, %v1497
    %v1500 = vmul.f32 %v1486, %v1498
    %v1502 = vlaneseq
    %v1503 = vshrl.u32 %v1502, 7
    %v1504 = vsub.s32 0, %v1503
    %v1505 = vrot.slane %v1475, %v1504
    %v1507 = vmul.f32 %v1499, %v1505
    %v1508 = vmul.f32 %v1500, %v1505
    %v1510 = vlaneseq
    %v1511 = vshrl.u32 %v1510, 7
    %v1512 = vsub.s32 0, %v1511
    %v1513 = vrot.slane %v1476, %v1512
    %v1515 = vadd.f32 %v1507, %v1513
    %v1516 = vadd.f32 %v1508, %v1513
    %v1517 = vld [vmem:[#allocation11] sm:$0xff]
    %v1518 = vld [vmem:[#allocation11 + $0x8] sm:$0xff]
    %v1519 = vld [vmem:[#allocation11 + $0x10] sm:$0xff]
    %v1520 = vld [vmem:[#allocation11 + $0x18] sm:$0xff]
    %v1521 = vld [vmem:[#allocation11 + $0x20] sm:$0xff]
    %v1522 = vld [vmem:[#allocation11 + $0x28] sm:$0xff]
    %v1523 = vld [vmem:[#allocation11 + $0x30] sm:$0xff]
    %v1524 = vld [vmem:[#allocation11 + $0x38] sm:$0xff]
    %v1525 = vld [vmem:[#allocation11 + $0x40] sm:$0xff]
    %v1526 = vld [vmem:[#allocation11 + $0x48] sm:$0xff]
    %v1527 = vld [vmem:[#allocation11 + $0x50] sm:$0xff]
    %v1528 = vld [vmem:[#allocation11 + $0x58] sm:$0xff]
    %v1529 = vld [vmem:[#allocation11 + $0x60] sm:$0xff]
    %v1530 = vld [vmem:[#allocation11 + $0x68] sm:$0xff]
    %v1531 = vld [vmem:[#allocation11 + $0x70] sm:$0xff]
    %v1532 = vld [vmem:[#allocation11 + $0x78] sm:$0xff]
    %v1533 = vld [vmem:[#allocation12] sm:$0x1]
    %v1535 = vlaneseq
    %v1536 = vshrl.u32 %v1535, 7
    %v1537 = vsub.s32 0, %v1536
    %v1538 = vrot.slane %v1533, %v1537
    %1540 = vmatprep.subr.mxu0 0.0
    %1541 = vmatpush1.msra.mxu0 %v1532
    %1542 = vmatprep.subr.mxu0 0.0
    %1543 = vmatpush1.msra.mxu0 %v1531
    %1544 = vmatprep.subr.mxu0 0.0
    %1545 = vmatpush1.msra.mxu0 %v1530
    %1546 = vmatprep.subr.mxu0 0.0
    %1547 = vmatpush1.msra.mxu0 %v1529
    %1548 = vmatprep.subr.mxu0 0.0
    %1549 = vmatpush1.msra.mxu0 %v1528
    %1550 = vmatprep.subr.mxu0 0.0
    %1551 = vmatpush1.msra.mxu0 %v1527
    %1552 = vmatprep.subr.mxu0 0.0
    %1553 = vmatpush1.msra.mxu0 %v1526
    %1554 = vmatprep.subr.mxu0 0.0
    %1555 = vmatpush1.msra.mxu0 %v1525
    %1556 = vmatprep.subr.mxu0 0.0
    %1557 = vmatpush1.msra.mxu0 %v1524
    %1558 = vmatprep.subr.mxu0 0.0
    %1559 = vmatpush1.msra.mxu0 %v1523
    %1560 = vmatprep.subr.mxu0 0.0
    %1561 = vmatpush1.msra.mxu0 %v1522
    %1562 = vmatprep.subr.mxu0 0.0
    %1563 = vmatpush1.msra.mxu0 %v1521
    %1564 = vmatprep.subr.mxu0 0.0
    %1565 = vmatpush1.msra.mxu0 %v1520
    %1566 = vmatprep.subr.mxu0 0.0
    %1567 = vmatpush1.msra.mxu0 %v1519
    %1568 = vmatprep.subr.mxu0 0.0
    %1569 = vmatpush1.msra.mxu0 %v1518
    %1570 = vmatprep.subr.mxu0 0.0
    %1571 = vmatpush1.msra.mxu0 %v1517
    %1572 = vmatprep.subr.mxu0 0.0
    %1573 = vmatpush2.msra.mxu0 0.0
    %1574 = vmatprep.subr.mxu0 0.0
    %1575 = vmatpush2.msra.mxu0 0.0
    %1576 = vmatprep.subr.mxu0 0.0
    %1577 = vmatpush2.msra.mxu0 0.0
    %1578 = vmatprep.subr.mxu0 0.0
    %1579 = vmatpush2.msra.mxu0 0.0
    %1580 = vmatprep.subr.mxu0 0.0
    %1581 = vmatpush2.msra.mxu0 0.0
    %1582 = vmatprep.subr.mxu0 0.0
    %1583 = vmatpush2.msra.mxu0 0.0
    %1584 = vmatprep.subr.mxu0 0.0
    %1585 = vmatpush2.msra.mxu0 0.0
    %1586 = vmatprep.subr.mxu0 0.0
    %1587 = vmatpush2.msra.mxu0 0.0
    %1588 = vmatprep.subr.mxu0 0.0
    %1589 = vmatpush2.msra.mxu0 0.0
    %1590 = vmatprep.subr.mxu0 0.0
    %1591 = vmatpush2.msra.mxu0 0.0
    %1592 = vmatprep.subr.mxu0 0.0
    %1593 = vmatpush2.msra.mxu0 0.0
    %1594 = vmatprep.subr.mxu0 0.0
    %1595 = vmatpush2.msra.mxu0 0.0
    %1596 = vmatprep.subr.mxu0 0.0
    %1597 = vmatpush2.msra.mxu0 0.0
    %1598 = vmatprep.subr.mxu0 0.0
    %1599 = vmatpush2.msra.mxu0 0.0
    %1600 = vmatprep.subr.mxu0 0.0
    %1601 = vmatpush2.msra.mxu0 0.0
    %1602 = vmatprep.subr.mxu0 0.0
    %1603 = vmatpush2.msra.mxu0 0.0
    %1604 = vmatprep.mubr.f32.mxu0 0.0
    %1605 = vmatmul.mubr.f32.gmra.mxu0 %v1515
    %v1606 = vpop.f32.mrf.mxu0
    %v1607 = vadd.f32 %v1538, %v1606
    %v1608 = vpop.f32.mrf.mxu0
    %1609 = vmatprep.mubr.f32.mxu0 0.0
    %1610 = vmatmul.mubr.f32.gmra.mxu0 %v1516
    %v1611 = vpop.f32.mrf.mxu0
    %v1612 = vadd.f32 %v1538, %v1611
    %v1613 = vpop.f32.mrf.mxu0
    %1614 = vdwg.mxu0
    %v1615 = vmul.f32 %v1607, 0.5
    %v1616 = vmul.f32 %v1612, 0.5
    %v1617 = vmul.f32 %v1607, 0.044715
    %v1618 = vmul.f32 %v1612, 0.044715
    %v1619 = vmul.f32 %v1617, %v1607
    %v1620 = vmul.f32 %v1618, %v1612
    %v1621 = vmul.f32 %v1619, %v1607
    %v1622 = vmul.f32 %v1620, %v1612
    %v1623 = vadd.f32 %v1607, %v1621
    %v1624 = vadd.f32 %v1612, %v1622
    %v1625 = vmul.f32 %v1623, 0.7978846
    %v1626 = vmul.f32 %v1624, 0.7978846
    %v1627 = vtanh.pop %v1625
    %v1628 = vtanh.pop %v1626
    %v1629 = vadd.f32 %v1627, 1.0
    %v1630 = vadd.f32 %v1628, 1.0
    %v1631 = vmul.f32 %v1615, %v1629
    %v1632 = vmul.f32 %v1616, %v1630
    %v1633 = vld [vmem:[#allocation14] sm:$0xff]
    %v1634 = vld [vmem:[#allocation14 + $0x8] sm:$0xff]
    %v1635 = vld [vmem:[#allocation14 + $0x10] sm:$0xff]
    %v1636 = vld [vmem:[#allocation14 + $0x18] sm:$0xff]
    %v1637 = vld [vmem:[#allocation14 + $0x20] sm:$0xff]
    %v1638 = vld [vmem:[#allocation14 + $0x28] sm:$0xff]
    %v1639 = vld [vmem:[#allocation14 + $0x30] sm:$0xff]
    %v1640 = vld [vmem:[#allocation14 + $0x38] sm:$0xff]
    %v1641 = vld [vmem:[#allocation14 + $0x40] sm:$0xff]
    %v1642 = vld [vmem:[#allocation14 + $0x48] sm:$0xff]
    %v1643 = vld [vmem:[#allocation14 + $0x50] sm:$0xff]
    %v1644 = vld [vmem:[#allocation14 + $0x58] sm:$0xff]
    %v1645 = vld [vmem:[#allocation14 + $0x60] sm:$0xff]
    %v1646 = vld [vmem:[#allocation14 + $0x68] sm:$0xff]
    %v1647 = vld [vmem:[#allocation14 + $0x70] sm:$0xff]
    %v1648 = vld [vmem:[#allocation14 + $0x78] sm:$0xff]
    %v1649 = vld [vmem:[#allocation15] sm:$0x1]
    %v1651 = vlaneseq
    %v1652 = vshrl.u32 %v1651, 7
    %v1653 = vsub.s32 0, %v1652
    %v1654 = vrot.slane %v1649, %v1653
    %1656 = vmatprep.subr.mxu0 0.0
    %1657 = vmatpush1.msra.mxu0 %v1648
    %1658 = vmatprep.subr.mxu0 0.0
    %1659 = vmatpush1.msra.mxu0 %v1647
    %1660 = vmatprep.subr.mxu0 0.0
    %1661 = vmatpush1.msra.mxu0 %v1646
    %1662 = vmatprep.subr.mxu0 0.0
    %1663 = vmatpush1.msra.mxu0 %v1645
    %1664 = vmatprep.subr.mxu0 0.0
    %1665 = vmatpush1.msra.mxu0 %v1644
    %1666 = vmatprep.subr.mxu0 0.0
    %1667 = vmatpush1.msra.mxu0 %v1643
    %1668 = vmatprep.subr.mxu0 0.0
    %1669 = vmatpush1.msra.mxu0 %v1642
    %1670 = vmatprep.subr.mxu0 0.0
    %1671 = vmatpush1.msra.mxu0 %v1641
    %1672 = vmatprep.subr.mxu0 0.0
    %1673 = vmatpush1.msra.mxu0 %v1640
    %1674 = vmatprep.subr.mxu0 0.0
    %1675 = vmatpush1.msra.mxu0 %v1639
    %1676 = vmatprep.subr.mxu0 0.0
    %1677 = vmatpush1.msra.mxu0 %v1638
    %1678 = vmatprep.subr.mxu0 0.0
    %1679 = vmatpush1.msra.mxu0 %v1637
    %1680 = vmatprep.subr.mxu0 0.0
    %1681 = vmatpush1.msra.mxu0 %v1636
    %1682 = vmatprep.subr.mxu0 0.0
    %1683 = vmatpush1.msra.mxu0 %v1635
    %1684 = vmatprep.subr.mxu0 0.0
    %1685 = vmatpush1.msra.mxu0 %v1634
    %1686 = vmatprep.subr.mxu0 0.0
    %1687 = vmatpush1.msra.mxu0 %v1633
    %1688 = vmatprep.subr.mxu0 0.0
    %1689 = vmatpush2.msra.mxu0 0.0
    %1690 = vmatprep.subr.mxu0 0.0
    %1691 = vmatpush2.msra.mxu0 0.0
    %1692 = vmatprep.subr.mxu0 0.0
    %1693 = vmatpush2.msra.mxu0 0.0
    %1694 = vmatprep.subr.mxu0 0.0
    %1695 = vmatpush2.msra.mxu0 0.0
    %1696 = vmatprep.subr.mxu0 0.0
    %1697 = vmatpush2.msra.mxu0 0.0
    %1698 = vmatprep.subr.mxu0 0.0
    %1699 = vmatpush2.msra.mxu0 0.0
    %1700 = vmatprep.subr.mxu0 0.0
    %1701 = vmatpush2.msra.mxu0 0.0
    %1702 = vmatprep.subr.mxu0 0.0
    %1703 = vmatpush2.msra.mxu0 0.0
    %1704 = vmatprep.subr.mxu0 0.0
    %1705 = vmatpush2.msra.mxu0 0.0
    %1706 = vmatprep.subr.mxu0 0.0
    %1707 = vmatpush2.msra.mxu0 0.0
    %1708 = vmatprep.subr.mxu0 0.0
    %1709 = vmatpush2.msra.mxu0 0.0
    %1710 = vmatprep.subr.mxu0 0.0
    %1711 = vmatpush2.msra.mxu0 0.0
    %1712 = vmatprep.subr.mxu0 0.0
    %1713 = vmatpush2.msra.mxu0 0.0
    %1714 = vmatprep.subr.mxu0 0.0
    %1715 = vmatpush2.msra.mxu0 0.0
    %1716 = vmatprep.subr.mxu0 0.0
    %1717 = vmatpush2.msra.mxu0 0.0
    %1718 = vmatprep.subr.mxu0 0.0
    %1719 = vmatpush2.msra.mxu0 0.0
    %1720 = vmatprep.mubr.f32.mxu0 0.0
    %1721 = vmatmul.mubr.f32.gmra.mxu0 %v1631
    %v1722 = vpop.f32.mrf.mxu0
    %v1723 = vadd.f32 %v1654, %v1722
    %v1724 = vpop.f32.mrf.mxu0
    %1725 = vmatprep.mubr.f32.mxu0 0.0
    %1726 = vmatmul.mubr.f32.gmra.mxu0 %v1632
    %v1727 = vpop.f32.mrf.mxu0
    %v1728 = vadd.f32 %v1654, %v1727
    %v1729 = vpop.f32.mrf.mxu0
    %1730 = vdwg.mxu0
    %v1731 = vadd.f32 %v1515, %v1723
    %v1732 = vadd.f32 %v1516, %v1728
    %v1733 = vld [vmem:[#allocation17] sm:$0x1]
    %v1734 = vld [vmem:[#allocation18] sm:$0x1]
    %1735 = vadd.xlane.f32.xlu0 %v1731
    %v1736 = vpop.xlane.xlu0 %1735
    %1737 = vadd.xlane.f32.xlu0 %v1732
    %v1738 = vpop.xlane.xlu0 %1737
    %v1739 = vmul.f32 %v1736, 0.03125
    %v1740 = vmul.f32 %v1738, 0.03125
    %v1741 = vsub.f32 %v1731, %v1739
    %v1742 = vsub.f32 %v1732, %v1740
    %v1743 = vmul.f32 %v1741, %v237
    %v1744 = vmul.f32 %v1742, %v237
    %v1745 = vmul.f32 %v1743, %v1743
    %v1746 = vmul.f32 %v1744, %v1744
    %1747 = vadd.xlane.f32.xlu0 %v1745
    %v1748 = vpop.xlane.xlu0 %1747
    %1749 = vadd.xlane.f32.xlu0 %v1746
    %v1750 = vpop.xlane.xlu0 %1749
    %v1751 = vmul.f32 %v1748, 0.03125
    %v1752 = vmul.f32 %v1750, 0.03125
    %v1753 = vadd.f32 %v1751, 1e-12
    %v1754 = vadd.f32 %v1752, 1e-12
    %v1755 = vrsqrt.pop %v1753
    %v1756 = vrsqrt.pop %v1754
    %v1757 = vmul.f32 %v1743, %v1755
    %v1758 = vmul.f32 %v1744, %v1756
    %v1760 = vlaneseq
    %v1761 = vshrl.u32 %v1760, 7
    %v1762 = vsub.s32 0, %v1761
    %v1763 = vrot.slane %v1733, %v1762
    %v1765 = vmul.f32 %v1757, %v1763
    %v1766 = vmul.f32 %v1758, %v1763
    %v1768 = vlaneseq
    %v1769 = vshrl.u32 %v1768, 7
    %v1770 = vsub.s32 0, %v1769
    %v1771 = vrot.slane %v1734, %v1770
    %v1773 = vadd.f32 %v1765, %v1771
    %v1774 = vadd.f32 %v1766, %v1771
    %s1775 = scalar_lea.vmem [#allocation8], 384
    %v1776 = vld [vmem:[%s1775] sm:$0xff]
    %v1777 = vld [vmem:[%s1775 + $0x8] sm:$0xff]
    %v1778 = vld [vmem:[%s1775 + $0x10] sm:$0xff]
    %v1779 = vld [vmem:[%s1775 + $0x18] sm:$0xff]
    %v1780 = vld [vmem:[%s1775 + $0x20] sm:$0xff]
    %v1781 = vld [vmem:[%s1775 + $0x28] sm:$0xff]
    %v1782 = vld [vmem:[%s1775 + $0x30] sm:$0xff]
    %v1783 = vld [vmem:[%s1775 + $0x38] sm:$0xff]
    %v1784 = vld [vmem:[%s1775 + $0x40] sm:$0xff]
    %v1785 = vld [vmem:[%s1775 + $0x48] sm:$0xff]
    %v1786 = vld [vmem:[%s1775 + $0x50] sm:$0xff]
    %v1787 = vld [vmem:[%s1775 + $0x58] sm:$0xff]
    %v1788 = vld [vmem:[%s1775 + $0x60] sm:$0xff]
    %v1789 = vld [vmem:[%s1775 + $0x68] sm:$0xff]
    %v1790 = vld [vmem:[%s1775 + $0x70] sm:$0xff]
    %v1791 = vld [vmem:[%s1775 + $0x78] sm:$0xff]
    %v1792 = vld [vmem:[%s1775 + $0x80] sm:$0xff]
    %v1793 = vld [vmem:[%s1775 + $0x88] sm:$0xff]
    %v1794 = vld [vmem:[%s1775 + $0x90] sm:$0xff]
    %v1795 = vld [vmem:[%s1775 + $0x98] sm:$0xff]
    %v1796 = vld [vmem:[%s1775 + $0xa0] sm:$0xff]
    %v1797 = vld [vmem:[%s1775 + $0xa8] sm:$0xff]
    %v1798 = vld [vmem:[%s1775 + $0xb0] sm:$0xff]
    %v1799 = vld [vmem:[%s1775 + $0xb8] sm:$0xff]
    %v1800 = vld [vmem:[%s1775 + $0xc0] sm:$0xff]
    %v1801 = vld [vmem:[%s1775 + $0xc8] sm:$0xff]
    %v1802 = vld [vmem:[%s1775 + $0xd0] sm:$0xff]
    %v1803 = vld [vmem:[%s1775 + $0xd8] sm:$0xff]
    %v1804 = vld [vmem:[%s1775 + $0xe0] sm:$0xff]
    %v1805 = vld [vmem:[%s1775 + $0xe8] sm:$0xff]
    %v1806 = vld [vmem:[%s1775 + $0xf0] sm:$0xff]
    %v1807 = vld [vmem:[%s1775 + $0xf8] sm:$0xff]
    %v1808 = vld [vmem:[%s1775 + $0x100] sm:$0xff]
    %v1809 = vld [vmem:[%s1775 + $0x108] sm:$0xff]
    %v1810 = vld [vmem:[%s1775 + $0x110] sm:$0xff]
    %v1811 = vld [vmem:[%s1775 + $0x118] sm:$0xff]
    %v1812 = vld [vmem:[%s1775 + $0x120] sm:$0xff]
    %v1813 = vld [vmem:[%s1775 + $0x128] sm:$0xff]
    %v1814 = vld [vmem:[%s1775 + $0x130] sm:$0xff]
    %v1815 = vld [vmem:[%s1775 + $0x138] sm:$0xff]
    %v1816 = vld [vmem:[%s1775 + $0x140] sm:$0xff]
    %v1817 = vld [vmem:[%s1775 + $0x148] sm:$0xff]
    %v1818 = vld [vmem:[%s1775 + $0x150] sm:$0xff]
    %v1819 = vld [vmem:[%s1775 + $0x158] sm:$0xff]
    %v1820 = vld [vmem:[%s1775 + $0x160] sm:$0xff]
    %v1821 = vld [vmem:[%s1775 + $0x168] sm:$0xff]
    %v1822 = vld [vmem:[%s1775 + $0x170] sm:$0xff]
    %v1823 = vld [vmem:[%s1775 + $0x178] sm:$0xff]
    %s1824 = scalar_lea.vmem %s5, 3
    %v1825 = vld [vmem:[%s1824] sm:$0x7]
    %v1827 = vlaneseq
    %v1828 = vshrl.u32 %v1827, 7
    %v1829 = vsub.s32 0, %v1828
    %v1830 = vrot.slane %v1825, %v1829
    %v1831 = vlaneseq
    %v1832 = vshrl.u32 %v1831, 7
    %v1833 = vsub.s32 1, %v1832
    %v1834 = vrot.slane %v1825, %v1833
    %v1835 = vlaneseq
    %v1836 = vshrl.u32 %v1835, 7
    %v1837 = vsub.s32 2, %v1836
    %v1838 = vrot.slane %v1825, %v1837
    %1842 = vmatprep.subr.mxu0 %v1822
    %1843 = vmatpush1.msra.mxu0 %v1821
    %1844 = vmatprep.subr.mxu0 %v1819
    %1845 = vmatpush1.msra.mxu0 %v1818
    %1846 = vmatprep.subr.mxu0 %v1816
    %1847 = vmatpush1.msra.mxu0 %v1815
    %1848 = vmatprep.subr.mxu0 %v1813
    %1849 = vmatpush1.msra.mxu0 %v1812
    %1850 = vmatprep.subr.mxu0 %v1810
    %1851 = vmatpush1.msra.mxu0 %v1809
    %1852 = vmatprep.subr.mxu0 %v1807
    %1853 = vmatpush1.msra.mxu0 %v1806
    %1854 = vmatprep.subr.mxu0 %v1804
    %1855 = vmatpush1.msra.mxu0 %v1803
    %1856 = vmatprep.subr.mxu0 %v1801
    %1857 = vmatpush1.msra.mxu0 %v1800
    %1858 = vmatprep.subr.mxu0 %v1798
    %1859 = vmatpush1.msra.mxu0 %v1797
    %1860 = vmatprep.subr.mxu0 %v1795
    %1861 = vmatpush1.msra.mxu0 %v1794
    %1862 = vmatprep.subr.mxu0 %v1792
    %1863 = vmatpush1.msra.mxu0 %v1791
    %1864 = vmatprep.subr.mxu0 %v1789
    %1865 = vmatpush1.msra.mxu0 %v1788
    %1866 = vmatprep.subr.mxu0 %v1786
    %1867 = vmatpush1.msra.mxu0 %v1785
    %1868 = vmatprep.subr.mxu0 %v1783
    %1869 = vmatpush1.msra.mxu0 %v1782
    %1870 = vmatprep.subr.mxu0 %v1780
    %1871 = vmatpush1.msra.mxu0 %v1779
    %1872 = vmatprep.subr.mxu0 %v1777
    %1873 = vmatpush1.msra.mxu0 %v1776
    %1874 = vmatprep.subr.mxu0 0.0
    %1875 = vmatpush2.msra.mxu0 0.0
    %1876 = vmatprep.subr.mxu0 0.0
    %1877 = vmatpush2.msra.mxu0 0.0
    %1878 = vmatprep.subr.mxu0 0.0
    %1879 = vmatpush2.msra.mxu0 0.0
    %1880 = vmatprep.subr.mxu0 0.0
    %1881 = vmatpush2.msra.mxu0 0.0
    %1882 = vmatprep.subr.mxu0 0.0
    %1883 = vmatpush2.msra.mxu0 0.0
    %1884 = vmatprep.subr.mxu0 0.0
    %1885 = vmatpush2.msra.mxu0 0.0
    %1886 = vmatprep.subr.mxu0 0.0
    %1887 = vmatpush2.msra.mxu0 0.0
    %1888 = vmatprep.subr.mxu0 0.0
    %1889 = vmatpush2.msra.mxu0 0.0
    %1890 = vmatprep.subr.mxu0 0.0
    %1891 = vmatpush2.msra.mxu0 0.0
    %1892 = vmatprep.subr.mxu0 0.0
    %1893 = vmatpush2.msra.mxu0 0.0
    %1894 = vmatprep.subr.mxu0 0.0
    %1895 = vmatpush2.msra.mxu0 0.0
    %1896 = vmatprep.subr.mxu0 0.0
    %1897 = vmatpush2.msra.mxu0 0.0
    %1898 = vmatprep.subr.mxu0 0.0
    %1899 = vmatpush2.msra.mxu0 0.0
    %1900 = vmatprep.subr.mxu0 0.0
    %1901 = vmatpush2.msra.mxu0 0.0
    %1902 = vmatprep.subr.mxu0 0.0
    %1903 = vmatpush2.msra.mxu0 0.0
    %1904 = vmatprep.subr.mxu0 0.0
    %1905 = vmatpush2.msra.mxu0 0.0
    %1906 = vmatprep.mubr.f32.mxu0 0.0
    %1907 = vmatmul.mubr.f32.gmra.mxu0 %v1773
    %v1908 = vpop.f32.mrf.mxu0
    %v1909 = vadd.f32 %v1830, %v1908
    %v1910 = vpop.f32.mrf.mxu0
    %v1911 = vadd.f32 %v1834, %v1910
    %1912 = vmatprep.mubr.f32.mxu0 0.0
    %1913 = vmatmul.mubr.f32.gmra.mxu0 %v1774
    %v1914 = vpop.f32.mrf.mxu0
    %v1915 = vadd.f32 %v1830, %v1914
    %v1916 = vpop.f32.mrf.mxu0
    %v1917 = vadd.f32 %v1834, %v1916
    %1918 = vdwg.mxu0
    %1919 = vmatprep.subr.mxu0 0.0
    %1920 = vmatpush1.msra.mxu0 %v1823
    %1921 = vmatprep.subr.mxu0 0.0
    %1922 = vmatpush1.msra.mxu0 %v1820
    %1923 = vmatprep.subr.mxu0 0.0
    %1924 = vmatpush1.msra.mxu0 %v1817
    %1925 = vmatprep.subr.mxu0 0.0
    %1926 = vmatpush1.msra.mxu0 %v1814
    %1927 = vmatprep.subr.mxu0 0.0
    %1928 = vmatpush1.msra.mxu0 %v1811
    %1929 = vmatprep.subr.mxu0 0.0
    %1930 = vmatpush1.msra.mxu0 %v1808
    %1931 = vmatprep.subr.mxu0 0.0
    %1932 = vmatpush1.msra.mxu0 %v1805
    %1933 = vmatprep.subr.mxu0 0.0
    %1934 = vmatpush1.msra.mxu0 %v1802
    %1935 = vmatprep.subr.mxu0 0.0
    %1936 = vmatpush1.msra.mxu0 %v1799
    %1937 = vmatprep.subr.mxu0 0.0
    %1938 = vmatpush1.msra.mxu0 %v1796
    %1939 = vmatprep.subr.mxu0 0.0
    %1940 = vmatpush1.msra.mxu0 %v1793
    %1941 = vmatprep.subr.mxu0 0.0
    %1942 = vmatpush1.msra.mxu0 %v1790
    %1943 = vmatprep.subr.mxu0 0.0
    %1944 = vmatpush1.msra.mxu0 %v1787
    %1945 = vmatprep.subr.mxu0 0.0
    %1946 = vmatpush1.msra.mxu0 %v1784
    %1947 = vmatprep.subr.mxu0 0.0
    %1948 = vmatpush1.msra.mxu0 %v1781
    %1949 = vmatprep.subr.mxu0 0.0
    %1950 = vmatpush1.msra.mxu0 %v1778
    %1951 = vmatprep.subr.mxu0 0.0
    %1952 = vmatpush2.msra.mxu0 0.0
    %1953 = vmatprep.subr.mxu0 0.0
    %1954 = vmatpush2.msra.mxu0 0.0
    %1955 = vmatprep.subr.mxu0 0.0
    %1956 = vmatpush2.msra.mxu0 0.0
    %1957 = vmatprep.subr.mxu0 0.0
    %1958 = vmatpush2.msra.mxu0 0.0
    %1959 = vmatprep.subr.mxu0 0.0
    %1960 = vmatpush2.msra.mxu0 0.0
    %1961 = vmatprep.subr.mxu0 0.0
    %1962 = vmatpush2.msra.mxu0 0.0
    %1963 = vmatprep.subr.mxu0 0.0
    %1964 = vmatpush2.msra.mxu0 0.0
    %1965 = vmatprep.subr.mxu0 0.0
    %1966 = vmatpush2.msra.mxu0 0.0
    %1967 = vmatprep.subr.mxu0 0.0
    %1968 = vmatpush2.msra.mxu0 0.0
    %1969 = vmatprep.subr.mxu0 0.0
    %1970 = vmatpush2.msra.mxu0 0.0
    %1971 = vmatprep.subr.mxu0 0.0
    %1972 = vmatpush2.msra.mxu0 0.0
    %1973 = vmatprep.subr.mxu0 0.0
    %1974 = vmatpush2.msra.mxu0 0.0
    %1975 = vmatprep.subr.mxu0 0.0
    %1976 = vmatpush2.msra.mxu0 0.0
    %1977 = vmatprep.subr.mxu0 0.0
    %1978 = vmatpush2.msra.mxu0 0.0
    %1979 = vmatprep.subr.mxu0 0.0
    %1980 = vmatpush2.msra.mxu0 0.0
    %1981 = vmatprep.subr.mxu0 0.0
    %1982 = vmatpush2.msra.mxu0 0.0
    %1983 = vmatprep.mubr.f32.mxu0 0.0
    %1984 = vmatmul.mubr.f32.gmra.mxu0 %v1773
    %v1985 = vpop.f32.mrf.mxu0
    %v1986 = vadd.f32 %v1838, %v1985
    %v1987 = vpop.f32.mrf.mxu0
    %1988 = vmatprep.mubr.f32.mxu0 0.0
    %1989 = vmatmul.mubr.f32.gmra.mxu0 %v1774
    %v1990 = vpop.f32.mrf.mxu0
    %v1991 = vadd.f32 %v1838, %v1990
    %v1992 = vpop.f32.mrf.mxu0
    %1993 = vdwg.mxu0
    %s1994 = scalar_lea.vmem %s6, 128
    %v1995 = vld [vmem:[%s1994] sm:$0xff]
    %v1996 = vld [vmem:[%s1994 + $0x8] sm:$0xff]
    %v1997 = vld [vmem:[%s1994 + $0x10] sm:$0xff]
    %v1998 = vld [vmem:[%s1994 + $0x18] sm:$0xff]
    %v2000 = vsel %vm508, %v1909, 0
    %v2003 = vsel %vm508, %v1911, 0
    %2005 = vmatprep.subr.mxu0 0.0
    %2006 = vmatpush1.xpose.msra.mxu0 0.0
    %2007 = vmatprep.subr.mxu0 0.0
    %2008 = vmatpush1.xpose.msra.mxu0 0.0
    %2009 = vmatprep.subr.mxu0 0.0
    %2010 = vmatpush1.xpose.msra.mxu0 0.0
    %2011 = vmatprep.subr.mxu0 0.0
    %2012 = vmatpush1.xpose.msra.mxu0 0.0
    %2013 = vmatprep.subr.mxu0 0.0
    %2014 = vmatpush1.xpose.msra.mxu0 0.0
    %2015 = vmatprep.subr.mxu0 0.0
    %2016 = vmatpush1.xpose.msra.mxu0 0.0
    %2017 = vmatprep.subr.mxu0 0.0
    %2018 = vmatpush1.xpose.msra.mxu0 0.0
    %2019 = vmatprep.subr.mxu0 0.0
    %2020 = vmatpush1.xpose.msra.mxu0 0.0
    %2021 = vmatprep.subr.mxu0 0.0
    %2022 = vmatpush1.xpose.msra.mxu0 0.0
    %2023 = vmatprep.subr.mxu0 0.0
    %2024 = vmatpush1.xpose.msra.mxu0 0.0
    %2025 = vmatprep.subr.mxu0 0.0
    %2026 = vmatpush1.xpose.msra.mxu0 0.0
    %2027 = vmatprep.subr.mxu0 0.0
    %2028 = vmatpush1.xpose.msra.mxu0 0.0
    %2029 = vmatprep.subr.mxu0 0.0
    %2030 = vmatpush1.xpose.msra.mxu0 0.0
    %2031 = vmatprep.subr.mxu0 0.0
    %2032 = vmatpush1.xpose.msra.mxu0 0.0
    %2033 = vmatprep.subr.mxu0 0.0
    %2034 = vmatpush1.xpose.msra.mxu0 0.0
    %2035 = vmatprep.subr.mxu0 0.0
    %2036 = vmatpush1.xpose.msra.mxu0 %v2003
    %2037 = vmatprep.subr.mxu0 0.0
    %2038 = vmatpush2.xpose.msra.mxu0 0.0
    %2039 = vmatprep.subr.mxu0 0.0
    %2040 = vmatpush2.xpose.msra.mxu0 0.0
    %2041 = vmatprep.subr.mxu0 0.0
    %2042 = vmatpush2.xpose.msra.mxu0 0.0
    %2043 = vmatprep.subr.mxu0 0.0
    %2044 = vmatpush2.xpose.msra.mxu0 0.0
    %2045 = vmatprep.subr.mxu0 0.0
    %2046 = vmatpush2.xpose.msra.mxu0 0.0
    %2047 = vmatprep.subr.mxu0 0.0
    %2048 = vmatpush2.xpose.msra.mxu0 0.0
    %2049 = vmatprep.subr.mxu0 0.0
    %2050 = vmatpush2.xpose.msra.mxu0 0.0
    %2051 = vmatprep.subr.mxu0 0.0
    %2052 = vmatpush2.xpose.msra.mxu0 0.0
    %2053 = vmatprep.subr.mxu0 0.0
    %2054 = vmatpush2.xpose.msra.mxu0 0.0
    %2055 = vmatprep.subr.mxu0 0.0
    %2056 = vmatpush2.xpose.msra.mxu0 0.0
    %2057 = vmatprep.subr.mxu0 0.0
    %2058 = vmatpush2.xpose.msra.mxu0 0.0
    %2059 = vmatprep.subr.mxu0 0.0
    %2060 = vmatpush2.xpose.msra.mxu0 0.0
    %2061 = vmatprep.subr.mxu0 0.0
    %2062 = vmatpush2.xpose.msra.mxu0 0.0
    %2063 = vmatprep.subr.mxu0 0.0
    %2064 = vmatpush2.xpose.msra.mxu0 0.0
    %2065 = vmatprep.subr.mxu0 0.0
    %2066 = vmatpush2.xpose.msra.mxu0 0.0
    %2067 = vmatprep.subr.mxu0 0.0
    %2068 = vmatpush2.xpose.msra.mxu0 0.0
    %2069 = vmatprep.mubr.f32.mxu0 0.0
    %2070 = vmatmul.mubr.f32.gmra.mxu0 %v2000
    %v2071 = vpop.f32.mrf.mxu0
    %v2072 = vadd.f32 %v507, %v2071
    %v2073 = vpop.f32.mrf.mxu0
    %2074 = vdwg.mxu0
    %v2075 = vsel %vm585, %v2072, -inf
    %2076 = vmax.xlane.f32.xlu0 %v2075
    %v2077 = vpop.xlane.xlu0 %2076
    %v2078 = vsub.f32 %v2072, %v2077
    %v2079 = vmul.f32 %v2078, 1.442695
    %v2080 = vpow.pop %v2079
    %v2081 = vsel %vm585, %v2080, 0.0
    %2082 = vadd.xlane.f32.xlu0 %v2081
    %v2083 = vpop.xlane.xlu0 %2082
    %v2084 = vrcp.pop %v2083
    %v2085 = vmul.f32 %v2080, %v2084
    %v2087 = vsel %vm585, %v2085, 0
    %2089 = vmatprep.subr.mxu0 0.0
    %2090 = vmatpush1.msra.mxu0 0.0
    %2091 = vmatprep.subr.mxu0 0.0
    %2092 = vmatpush1.msra.mxu0 0.0
    %2093 = vmatprep.subr.mxu0 0.0
    %2094 = vmatpush1.msra.mxu0 0.0
    %2095 = vmatprep.subr.mxu0 0.0
    %2096 = vmatpush1.msra.mxu0 0.0
    %2097 = vmatprep.subr.mxu0 0.0
    %2098 = vmatpush1.msra.mxu0 0.0
    %2099 = vmatprep.subr.mxu0 0.0
    %2100 = vmatpush1.msra.mxu0 0.0
    %2101 = vmatprep.subr.mxu0 0.0
    %2102 = vmatpush1.msra.mxu0 0.0
    %2103 = vmatprep.subr.mxu0 0.0
    %2104 = vmatpush1.msra.mxu0 0.0
    %2105 = vmatprep.subr.mxu0 0.0
    %2106 = vmatpush1.msra.mxu0 0.0
    %2107 = vmatprep.subr.mxu0 0.0
    %2108 = vmatpush1.msra.mxu0 0.0
    %2109 = vmatprep.subr.mxu0 0.0
    %2110 = vmatpush1.msra.mxu0 0.0
    %2111 = vmatprep.subr.mxu0 0.0
    %2112 = vmatpush1.msra.mxu0 0.0
    %2113 = vmatprep.subr.mxu0 0.0
    %2114 = vmatpush1.msra.mxu0 0.0
    %2115 = vmatprep.subr.mxu0 0.0
    %2116 = vmatpush1.msra.mxu0 0.0
    %2117 = vmatprep.subr.mxu0 0.0
    %2118 = vmatpush1.msra.mxu0 0.0
    %2119 = vmatprep.subr.mxu0 0.0
    %2120 = vmatpush1.msra.mxu0 %v1986
    %2121 = vmatprep.subr.mxu0 0.0
    %2122 = vmatpush2.msra.mxu0 0.0
    %2123 = vmatprep.subr.mxu0 0.0
    %2124 = vmatpush2.msra.mxu0 0.0
    %2125 = vmatprep.subr.mxu0 0.0
    %2126 = vmatpush2.msra.mxu0 0.0
    %2127 = vmatprep.subr.mxu0 0.0
    %2128 = vmatpush2.msra.mxu0 0.0
    %2129 = vmatprep.subr.mxu0 0.0
    %2130 = vmatpush2.msra.mxu0 0.0
    %2131 = vmatprep.subr.mxu0 0.0
    %2132 = vmatpush2.msra.mxu0 0.0
    %2133 = vmatprep.subr.mxu0 0.0
    %2134 = vmatpush2.msra.mxu0 0.0
    %2135 = vmatprep.subr.mxu0 0.0
    %2136 = vmatpush2.msra.mxu0 0.0
    %2137 = vmatprep.subr.mxu0 0.0
    %2138 = vmatpush2.msra.mxu0 0.0
    %2139 = vmatprep.subr.mxu0 0.0
    %2140 = vmatpush2.msra.mxu0 0.0
    %2141 = vmatprep.subr.mxu0 0.0
    %2142 = vmatpush2.msra.mxu0 0.0
    %2143 = vmatprep.subr.mxu0 0.0
    %2144 = vmatpush2.msra.mxu0 0.0
    %2145 = vmatprep.subr.mxu0 0.0
    %2146 = vmatpush2.msra.mxu0 0.0
    %2147 = vmatprep.subr.mxu0 0.0
    %2148 = vmatpush2.msra.mxu0 0.0
    %2149 = vmatprep.subr.mxu0 0.0
    %2150 = vmatpush2.msra.mxu0 0.0
    %2151 = vmatprep.subr.mxu0 0.0
    %2152 = vmatpush2.msra.mxu0 0.0
    %2153 = vmatprep.mubr.f32.mxu0 0.0
    %2154 = vmatmul.mubr.f32.gmra.mxu0 %v2087
    %v2155 = vpop.f32.mrf.mxu0
    %v2156 = vadd.f32 0.0, %v2155
    %v2157 = vpop.f32.mrf.mxu0
    %2158 = vdwg.mxu0
    %v2160 = vsel %vm508, %v2156, 0
    %2162 = vmatprep.subr.mxu0 0.0
    %2163 = vmatpush1.msra.mxu0 0.0
    %2164 = vmatprep.subr.mxu0 0.0
    %2165 = vmatpush1.msra.mxu0 0.0
    %2166 = vmatprep.subr.mxu0 0.0
    %2167 = vmatpush1.msra.mxu0 0.0
    %2168 = vmatprep.subr.mxu0 0.0
    %2169 = vmatpush1.msra.mxu0 0.0
    %2170 = vmatprep.subr.mxu0 0.0
    %2171 = vmatpush1.msra.mxu0 0.0
    %2172 = vmatprep.subr.mxu0 0.0
    %2173 = vmatpush1.msra.mxu0 0.0
    %2174 = vmatprep.subr.mxu0 0.0
    %2175 = vmatpush1.msra.mxu0 0.0
    %2176 = vmatprep.subr.mxu0 0.0
    %2177 = vmatpush1.msra.mxu0 0.0
    %2178 = vmatprep.subr.mxu0 0.0
    %2179 = vmatpush1.msra.mxu0 0.0
    %2180 = vmatprep.subr.mxu0 0.0
    %2181 = vmatpush1.msra.mxu0 0.0
    %2182 = vmatprep.subr.mxu0 0.0
    %2183 = vmatpush1.msra.mxu0 0.0
    %2184 = vmatprep.subr.mxu0 0.0
    %2185 = vmatpush1.msra.mxu0 0.0
    %2186 = vmatprep.subr.mxu0 0.0
    %2187 = vmatpush1.msra.mxu0 0.0
    %2188 = vmatprep.subr.mxu0 0.0
    %2189 = vmatpush1.msra.mxu0 0.0
    %2190 = vmatprep.subr.mxu0 0.0
    %2191 = vmatpush1.msra.mxu0 %v1996
    %2192 = vmatprep.subr.mxu0 0.0
    %2193 = vmatpush1.msra.mxu0 %v1995
    %2194 = vmatprep.subr.mxu0 0.0
    %2195 = vmatpush2.msra.mxu0 0.0
    %2196 = vmatprep.subr.mxu0 0.0
    %2197 = vmatpush2.msra.mxu0 0.0
    %2198 = vmatprep.subr.mxu0 0.0
    %2199 = vmatpush2.msra.mxu0 0.0
    %2200 = vmatprep.subr.mxu0 0.0
    %2201 = vmatpush2.msra.mxu0 0.0
    %2202 = vmatprep.subr.mxu0 0.0
    %2203 = vmatpush2.msra.mxu0 0.0
    %2204 = vmatprep.subr.mxu0 0.0
    %2205 = vmatpush2.msra.mxu0 0.0
    %2206 = vmatprep.subr.mxu0 0.0
    %2207 = vmatpush2.msra.mxu0 0.0
    %2208 = vmatprep.subr.mxu0 0.0
    %2209 = vmatpush2.msra.mxu0 0.0
    %2210 = vmatprep.subr.mxu0 0.0
    %2211 = vmatpush2.msra.mxu0 0.0
    %2212 = vmatprep.subr.mxu0 0.0
    %2213 = vmatpush2.msra.mxu0 0.0
    %2214 = vmatprep.subr.mxu0 0.0
    %2215 = vmatpush2.msra.mxu0 0.0
    %2216 = vmatprep.subr.mxu0 0.0
    %2217 = vmatpush2.msra.mxu0 0.0
    %2218 = vmatprep.subr.mxu0 0.0
    %2219 = vmatpush2.msra.mxu0 0.0
    %2220 = vmatprep.subr.mxu0 0.0
    %2221 = vmatpush2.msra.mxu0 0.0
    %2222 = vmatprep.subr.mxu0 0.0
    %2223 = vmatpush2.msra.mxu0 0.0
    %2224 = vmatprep.subr.mxu0 0.0
    %2225 = vmatpush2.msra.mxu0 0.0
    %2226 = vmatprep.mubr.f32.mxu0 0.0
    %2227 = vmatmul.mubr.f32.gmra.mxu0 %v2160
    %v2228 = vpop.f32.mrf.mxu0
    %v2229 = vadd.f32 0.0, %v2228
    %v2230 = vpop.f32.mrf.mxu0
    %2231 = vdwg.mxu0
    %v2232 = vadd.f32 %v1773, %v2229
    %2233 = vrot.lane.b32.xlu0 %v1909, 112
    %v2234 = vpop.permute.xlu0 %2233
    %2235 = vrot.lane.b32.xlu0 %v1911, 112
    %v2236 = vpop.permute.xlu0 %2235
    %v2237 = vsel %vm508, %v2234, 0
    %v2239 = vsel %vm508, %v2236, 0
    %2241 = vmatprep.subr.mxu0 0.0
    %2242 = vmatpush1.xpose.msra.mxu0 0.0
    %2243 = vmatprep.subr.mxu0 0.0
    %2244 = vmatpush1.xpose.msra.mxu0 0.0
    %2245 = vmatprep.subr.mxu0 0.0
    %2246 = vmatpush1.xpose.msra.mxu0 0.0
    %2247 = vmatprep.subr.mxu0 0.0
    %2248 = vmatpush1.xpose.msra.mxu0 0.0
    %2249 = vmatprep.subr.mxu0 0.0
    %2250 = vmatpush1.xpose.msra.mxu0 0.0
    %2251 = vmatprep.subr.mxu0 0.0
    %2252 = vmatpush1.xpose.msra.mxu0 0.0
    %2253 = vmatprep.subr.mxu0 0.0
    %2254 = vmatpush1.xpose.msra.mxu0 0.0
    %2255 = vmatprep.subr.mxu0 0.0
    %2256 = vmatpush1.xpose.msra.mxu0 0.0
    %2257 = vmatprep.subr.mxu0 0.0
    %2258 = vmatpush1.xpose.msra.mxu0 0.0
    %2259 = vmatprep.subr.mxu0 0.0
    %2260 = vmatpush1.xpose.msra.mxu0 0.0
    %2261 = vmatprep.subr.mxu0 0.0
    %2262 = vmatpush1.xpose.msra.mxu0 0.0
    %2263 = vmatprep.subr.mxu0 0.0
    %2264 = vmatpush1.xpose.msra.mxu0 0.0
    %2265 = vmatprep.subr.mxu0 0.0
    %2266 = vmatpush1.xpose.msra.mxu0 0.0
    %2267 = vmatprep.subr.mxu0 0.0
    %2268 = vmatpush1.xpose.msra.mxu0 0.0
    %2269 = vmatprep.subr.mxu0 0.0
    %2270 = vmatpush1.xpose.msra.mxu0 0.0
    %2271 = vmatprep.subr.mxu0 0.0
    %2272 = vmatpush1.xpose.msra.mxu0 %v2239
    %2273 = vmatprep.subr.mxu0 0.0
    %2274 = vmatpush2.xpose.msra.mxu0 0.0
    %2275 = vmatprep.subr.mxu0 0.0
    %2276 = vmatpush2.xpose.msra.mxu0 0.0
    %2277 = vmatprep.subr.mxu0 0.0
    %2278 = vmatpush2.xpose.msra.mxu0 0.0
    %2279 = vmatprep.subr.mxu0 0.0
    %2280 = vmatpush2.xpose.msra.mxu0 0.0
    %2281 = vmatprep.subr.mxu0 0.0
    %2282 = vmatpush2.xpose.msra.mxu0 0.0
    %2283 = vmatprep.subr.mxu0 0.0
    %2284 = vmatpush2.xpose.msra.mxu0 0.0
    %2285 = vmatprep.subr.mxu0 0.0
    %2286 = vmatpush2.xpose.msra.mxu0 0.0
    %2287 = vmatprep.subr.mxu0 0.0
    %2288 = vmatpush2.xpose.msra.mxu0 0.0
    %2289 = vmatprep.subr.mxu0 0.0
    %2290 = vmatpush2.xpose.msra.mxu0 0.0
    %2291 = vmatprep.subr.mxu0 0.0
    %2292 = vmatpush2.xpose.msra.mxu0 0.0
    %2293 = vmatprep.subr.mxu0 0.0
    %2294 = vmatpush2.xpose.msra.mxu0 0.0
    %2295 = vmatprep.subr.mxu0 0.0
    %2296 = vmatpush2.xpose.msra.mxu0 0.0
    %2297 = vmatprep.subr.mxu0 0.0
    %2298 = vmatpush2.xpose.msra.mxu0 0.0
    %2299 = vmatprep.subr.mxu0 0.0
    %2300 = vmatpush2.xpose.msra.mxu0 0.0
    %2301 = vmatprep.subr.mxu0 0.0
    %2302 = vmatpush2.xpose.msra.mxu0 0.0
    %2303 = vmatprep.subr.mxu0 0.0
    %2304 = vmatpush2.xpose.msra.mxu0 0.0
    %2305 = vmatprep.mubr.f32.mxu0 0.0
    %2306 = vmatmul.mubr.f32.gmra.mxu0 %v2237
    %v2307 = vpop.f32.mrf.mxu0
    %v2308 = vadd.f32 %v507, %v2307
    %v2309 = vpop.f32.mrf.mxu0
    %2310 = vdwg.mxu0
    %v2311 = vsel %vm585, %v2308, -inf
    %2312 = vmax.xlane.f32.xlu0 %v2311
    %v2313 = vpop.xlane.xlu0 %2312
    %v2314 = vsub.f32 %v2308, %v2313
    %v2315 = vmul.f32 %v2314, 1.442695
    %v2316 = vpow.pop %v2315
    %v2317 = vsel %vm585, %v2316, 0.0
    %2318 = vadd.xlane.f32.xlu0 %v2317
    %v2319 = vpop.xlane.xlu0 %2318
    %v2320 = vrcp.pop %v2319
    %v2321 = vmul.f32 %v2316, %v2320
    %2323 = vrot.lane.b32.xlu0 %v1986, 112
    %v2324 = vpop.permute.xlu0 %2323
    %v2327 = vsel %vm585, %v2321, 0
    %2329 = vmatprep.subr.mxu0 0.0
    %2330 = vmatpush1.msra.mxu0 0.0
    %2331 = vmatprep.subr.mxu0 0.0
    %2332 = vmatpush1.msra.mxu0 0.0
    %2333 = vmatprep.subr.mxu0 0.0
    %2334 = vmatpush1.msra.mxu0 0.0
    %2335 = vmatprep.subr.mxu0 0.0
    %2336 = vmatpush1.msra.mxu0 0.0
    %2337 = vmatprep.subr.mxu0 0.0
    %2338 = vmatpush1.msra.mxu0 0.0
    %2339 = vmatprep.subr.mxu0 0.0
    %2340 = vmatpush1.msra.mxu0 0.0
    %2341 = vmatprep.subr.mxu0 0.0
    %2342 = vmatpush1.msra.mxu0 0.0
    %2343 = vmatprep.subr.mxu0 0.0
    %2344 = vmatpush1.msra.mxu0 0.0
    %2345 = vmatprep.subr.mxu0 0.0
    %2346 = vmatpush1.msra.mxu0 0.0
    %2347 = vmatprep.subr.mxu0 0.0
    %2348 = vmatpush1.msra.mxu0 0.0
    %2349 = vmatprep.subr.mxu0 0.0
    %2350 = vmatpush1.msra.mxu0 0.0
    %2351 = vmatprep.subr.mxu0 0.0
    %2352 = vmatpush1.msra.mxu0 0.0
    %2353 = vmatprep.subr.mxu0 0.0
    %2354 = vmatpush1.msra.mxu0 0.0
    %2355 = vmatprep.subr.mxu0 0.0
    %2356 = vmatpush1.msra.mxu0 0.0
    %2357 = vmatprep.subr.mxu0 0.0
    %2358 = vmatpush1.msra.mxu0 0.0
    %2359 = vmatprep.subr.mxu0 0.0
    %2360 = vmatpush1.msra.mxu0 %v2324
    %2361 = vmatprep.subr.mxu0 0.0
    %2362 = vmatpush2.msra.mxu0 0.0
    %2363 = vmatprep.subr.mxu0 0.0
    %2364 = vmatpush2.msra.mxu0 0.0
    %2365 = vmatprep.subr.mxu0 0.0
    %2366 = vmatpush2.msra.mxu0 0.0
    %2367 = vmatprep.subr.mxu0 0.0
    %2368 = vmatpush2.msra.mxu0 0.0
    %2369 = vmatprep.subr.mxu0 0.0
    %2370 = vmatpush2.msra.mxu0 0.0
    %2371 = vmatprep.subr.mxu0 0.0
    %2372 = vmatpush2.msra.mxu0 0.0
    %2373 = vmatprep.subr.mxu0 0.0
    %2374 = vmatpush2.msra.mxu0 0.0
    %2375 = vmatprep.subr.mxu0 0.0
    %2376 = vmatpush2.msra.mxu0 0.0
    %2377 = vmatprep.subr.mxu0 0.0
    %2378 = vmatpush2.msra.mxu0 0.0
    %2379 = vmatprep.subr.mxu0 0.0
    %2380 = vmatpush2.msra.mxu0 0.0
    %2381 = vmatprep.subr.mxu0 0.0
    %2382 = vmatpush2.msra.mxu0 0.0
    %2383 = vmatprep.subr.mxu0 0.0
    %2384 = vmatpush2.msra.mxu0 0.0
    %2385 = vmatprep.subr.mxu0 0.0
    %2386 = vmatpush2.msra.mxu0 0.0
    %2387 = vmatprep.subr.mxu0 0.0
    %2388 = vmatpush2.msra.mxu0 0.0
    %2389 = vmatprep.subr.mxu0 0.0
    %2390 = vmatpush2.msra.mxu0 0.0
    %2391 = vmatprep.subr.mxu0 0.0
    %2392 = vmatpush2.msra.mxu0 0.0
    %2393 = vmatprep.mubr.f32.mxu0 0.0
    %2394 = vmatmul.mubr.f32.gmra.mxu0 %v2327
    %v2395 = vpop.f32.mrf.mxu0
    %v2396 = vadd.f32 0.0, %v2395
    %v2397 = vpop.f32.mrf.mxu0
    %2398 = vdwg.mxu0
    %v2400 = vsel %vm508, %v2396, 0
    %2402 = vmatprep.subr.mxu0 0.0
    %2403 = vmatpush1.msra.mxu0 0.0
    %2404 = vmatprep.subr.mxu0 0.0
    %2405 = vmatpush1.msra.mxu0 0.0
    %2406 = vmatprep.subr.mxu0 0.0
    %2407 = vmatpush1.msra.mxu0 0.0
    %2408 = vmatprep.subr.mxu0 0.0
    %2409 = vmatpush1.msra.mxu0 0.0
    %2410 = vmatprep.subr.mxu0 0.0
    %2411 = vmatpush1.msra.mxu0 0.0
    %2412 = vmatprep.subr.mxu0 0.0
    %2413 = vmatpush1.msra.mxu0 0.0
    %2414 = vmatprep.subr.mxu0 0.0
    %2415 = vmatpush1.msra.mxu0 0.0
    %2416 = vmatprep.subr.mxu0 0.0
    %2417 = vmatpush1.msra.mxu0 0.0
    %2418 = vmatprep.subr.mxu0 0.0
    %2419 = vmatpush1.msra.mxu0 0.0
    %2420 = vmatprep.subr.mxu0 0.0
    %2421 = vmatpush1.msra.mxu0 0.0
    %2422 = vmatprep.subr.mxu0 0.0
    %2423 = vmatpush1.msra.mxu0 0.0
    %2424 = vmatprep.subr.mxu0 0.0
    %2425 = vmatpush1.msra.mxu0 0.0
    %2426 = vmatprep.subr.mxu0 0.0
    %2427 = vmatpush1.msra.mxu0 0.0
    %2428 = vmatprep.subr.mxu0 0.0
    %2429 = vmatpush1.msra.mxu0 0.0
    %2430 = vmatprep.subr.mxu0 0.0
    %2431 = vmatpush1.msra.mxu0 %v1998
    %2432 = vmatprep.subr.mxu0 0.0
    %2433 = vmatpush1.msra.mxu0 %v1997
    %2434 = vmatprep.subr.mxu0 0.0
    %2435 = vmatpush2.msra.mxu0 0.0
    %2436 = vmatprep.subr.mxu0 0.0
    %2437 = vmatpush2.msra.mxu0 0.0
    %2438 = vmatprep.subr.mxu0 0.0
    %2439 = vmatpush2.msra.mxu0 0.0
    %2440 = vmatprep.subr.mxu0 0.0
    %2441 = vmatpush2.msra.mxu0 0.0
    %2442 = vmatprep.subr.mxu0 0.0
    %2443 = vmatpush2.msra.mxu0 0.0
    %2444 = vmatprep.subr.mxu0 0.0
    %2445 = vmatpush2.msra.mxu0 0.0
    %2446 = vmatprep.subr.mxu0 0.0
    %2447 = vmatpush2.msra.mxu0 0.0
    %2448 = vmatprep.subr.mxu0 0.0
    %2449 = vmatpush2.msra.mxu0 0.0
    %2450 = vmatprep.subr.mxu0 0.0
    %2451 = vmatpush2.msra.mxu0 0.0
    %2452 = vmatprep.subr.mxu0 0.0
    %2453 = vmatpush2.msra.mxu0 0.0
    %2454 = vmatprep.subr.mxu0 0.0
    %2455 = vmatpush2.msra.mxu0 0.0
    %2456 = vmatprep.subr.mxu0 0.0
    %2457 = vmatpush2.msra.mxu0 0.0
    %2458 = vmatprep.subr.mxu0 0.0
    %2459 = vmatpush2.msra.mxu0 0.0
    %2460 = vmatprep.subr.mxu0 0.0
    %2461 = vmatpush2.msra.mxu0 0.0
    %2462 = vmatprep.subr.mxu0 0.0
    %2463 = vmatpush2.msra.mxu0 0.0
    %2464 = vmatprep.subr.mxu0 0.0
    %2465 = vmatpush2.msra.mxu0 0.0
    %2466 = vmatprep.mubr.f32.mxu0 0.0
    %2467 = vmatmul.mubr.f32.gmra.mxu0 %v2400
    %v2468 = vpop.f32.mrf.mxu0
    %v2469 = vadd.f32 0.0, %v2468
    %v2470 = vpop.f32.mrf.mxu0
    %2471 = vdwg.mxu0
    %v2472 = vadd.f32 %v2232, %v2469
    %2473 = vst [vmem:[#allocation2] sm:$0xff] %v2472
    %v2475 = vsel %vm508, %v1915, 0
    %v2478 = vsel %vm508, %v1917, 0
    %2480 = vmatprep.subr.mxu0 0.0
    %2481 = vmatpush1.xpose.msra.mxu0 0.0
    %2482 = vmatprep.subr.mxu0 0.0
    %2483 = vmatpush1.xpose.msra.mxu0 0.0
    %2484 = vmatprep.subr.mxu0 0.0
    %2485 = vmatpush1.xpose.msra.mxu0 0.0
    %2486 = vmatprep.subr.mxu0 0.0
    %2487 = vmatpush1.xpose.msra.mxu0 0.0
    %2488 = vmatprep.subr.mxu0 0.0
    %2489 = vmatpush1.xpose.msra.mxu0 0.0
    %2490 = vmatprep.subr.mxu0 0.0
    %2491 = vmatpush1.xpose.msra.mxu0 0.0
    %2492 = vmatprep.subr.mxu0 0.0
    %2493 = vmatpush1.xpose.msra.mxu0 0.0
    %2494 = vmatprep.subr.mxu0 0.0
    %2495 = vmatpush1.xpose.msra.mxu0 0.0
    %2496 = vmatprep.subr.mxu0 0.0
    %2497 = vmatpush1.xpose.msra.mxu0 0.0
    %2498 = vmatprep.subr.mxu0 0.0
    %2499 = vmatpush1.xpose.msra.mxu0 0.0
    %2500 = vmatprep.subr.mxu0 0.0
    %2501 = vmatpush1.xpose.msra.mxu0 0.0
    %2502 = vmatprep.subr.mxu0 0.0
    %2503 = vmatpush1.xpose.msra.mxu0 0.0
    %2504 = vmatprep.subr.mxu0 0.0
    %2505 = vmatpush1.xpose.msra.mxu0 0.0
    %2506 = vmatprep.subr.mxu0 0.0
    %2507 = vmatpush1.xpose.msra.mxu0 0.0
    %2508 = vmatprep.subr.mxu0 0.0
    %2509 = vmatpush1.xpose.msra.mxu0 0.0
    %2510 = vmatprep.subr.mxu0 0.0
    %2511 = vmatpush1.xpose.msra.mxu0 %v2478
    %2512 = vmatprep.subr.mxu0 0.0
    %2513 = vmatpush2.xpose.msra.mxu0 0.0
    %2514 = vmatprep.subr.mxu0 0.0
    %2515 = vmatpush2.xpose.msra.mxu0 0.0
    %2516 = vmatprep.subr.mxu0 0.0
    %2517 = vmatpush2.xpose.msra.mxu0 0.0
    %2518 = vmatprep.subr.mxu0 0.0
    %2519 = vmatpush2.xpose.msra.mxu0 0.0
    %2520 = vmatprep.subr.mxu0 0.0
    %2521 = vmatpush2.xpose.msra.mxu0 0.0
    %2522 = vmatprep.subr.mxu0 0.0
    %2523 = vmatpush2.xpose.msra.mxu0 0.0
    %2524 = vmatprep.subr.mxu0 0.0
    %2525 = vmatpush2.xpose.msra.mxu0 0.0
    %2526 = vmatprep.subr.mxu0 0.0
    %2527 = vmatpush2.xpose.msra.mxu0 0.0
    %2528 = vmatprep.subr.mxu0 0.0
    %2529 = vmatpush2.xpose.msra.mxu0 0.0
    %2530 = vmatprep.subr.mxu0 0.0
    %2531 = vmatpush2.xpose.msra.mxu0 0.0
    %2532 = vmatprep.subr.mxu0 0.0
    %2533 = vmatpush2.xpose.msra.mxu0 0.0
    %2534 = vmatprep.subr.mxu0 0.0
    %2535 = vmatpush2.xpose.msra.mxu0 0.0
    %2536 = vmatprep.subr.mxu0 0.0
    %2537 = vmatpush2.xpose.msra.mxu0 0.0
    %2538 = vmatprep.subr.mxu0 0.0
    %2539 = vmatpush2.xpose.msra.mxu0 0.0
    %2540 = vmatprep.subr.mxu0 0.0
    %2541 = vmatpush2.xpose.msra.mxu0 0.0
    %2542 = vmatprep.subr.mxu0 0.0
    %2543 = vmatpush2.xpose.msra.mxu0 0.0
    %2544 = vmatprep.mubr.f32.mxu0 0.0
    %2545 = vmatmul.mubr.f32.gmra.mxu0 %v2475
    %v2546 = vpop.f32.mrf.mxu0
    %v2547 = vadd.f32 %v988, %v2546
    %v2548 = vpop.f32.mrf.mxu0
    %2549 = vdwg.mxu0
    %v2550 = vsel %vm585, %v2547, -inf
    %2551 = vmax.xlane.f32.xlu0 %v2550
    %v2552 = vpop.xlane.xlu0 %2551
    %v2553 = vsub.f32 %v2547, %v2552
    %v2554 = vmul.f32 %v2553, 1.442695
    %v2555 = vpow.pop %v2554
    %v2556 = vsel %vm585, %v2555, 0.0
    %2557 = vadd.xlane.f32.xlu0 %v2556
    %v2558 = vpop.xlane.xlu0 %2557
    %v2559 = vrcp.pop %v2558
    %v2560 = vmul.f32 %v2555, %v2559
    %v2562 = vsel %vm585, %v2560, 0
    %2564 = vmatprep.subr.mxu0 0.0
    %2565 = vmatpush1.msra.mxu0 0.0
    %2566 = vmatprep.subr.mxu0 0.0
    %2567 = vmatpush1.msra.mxu0 0.0
    %2568 = vmatprep.subr.mxu0 0.0
    %2569 = vmatpush1.msra.mxu0 0.0
    %2570 = vmatprep.subr.mxu0 0.0
    %2571 = vmatpush1.msra.mxu0 0.0
    %2572 = vmatprep.subr.mxu0 0.0
    %2573 = vmatpush1.msra.mxu0 0.0
    %2574 = vmatprep.subr.mxu0 0.0
    %2575 = vmatpush1.msra.mxu0 0.0
    %2576 = vmatprep.subr.mxu0 0.0
    %2577 = vmatpush1.msra.mxu0 0.0
    %2578 = vmatprep.subr.mxu0 0.0
    %2579 = vmatpush1.msra.mxu0 0.0
    %2580 = vmatprep.subr.mxu0 0.0
    %2581 = vmatpush1.msra.mxu0 0.0
    %2582 = vmatprep.subr.mxu0 0.0
    %2583 = vmatpush1.msra.mxu0 0.0
    %2584 = vmatprep.subr.mxu0 0.0
    %2585 = vmatpush1.msra.mxu0 0.0
    %2586 = vmatprep.subr.mxu0 0.0
    %2587 = vmatpush1.msra.mxu0 0.0
    %2588 = vmatprep.subr.mxu0 0.0
    %2589 = vmatpush1.msra.mxu0 0.0
    %2590 = vmatprep.subr.mxu0 0.0
    %2591 = vmatpush1.msra.mxu0 0.0
    %2592 = vmatprep.subr.mxu0 0.0
    %2593 = vmatpush1.msra.mxu0 0.0
    %2594 = vmatprep.subr.mxu0 0.0
    %2595 = vmatpush1.msra.mxu0 %v1991
    %2596 = vmatprep.subr.mxu0 0.0
    %2597 = vmatpush2.msra.mxu0 0.0
    %2598 = vmatprep.subr.mxu0 0.0
    %2599 = vmatpush2.msra.mxu0 0.0
    %2600 = vmatprep.subr.mxu0 0.0
    %2601 = vmatpush2.msra.mxu0 0.0
    %2602 = vmatprep.subr.mxu0 0.0
    %2603 = vmatpush2.msra.mxu0 0.0
    %2604 = vmatprep.subr.mxu0 0.0
    %2605 = vmatpush2.msra.mxu0 0.0
    %2606 = vmatprep.subr.mxu0 0.0
    %2607 = vmatpush2.msra.mxu0 0.0
    %2608 = vmatprep.subr.mxu0 0.0
    %2609 = vmatpush2.msra.mxu0 0.0
    %2610 = vmatprep.subr.mxu0 0.0
    %2611 = vmatpush2.msra.mxu0 0.0
    %2612 = vmatprep.subr.mxu0 0.0
    %2613 = vmatpush2.msra.mxu0 0.0
    %2614 = vmatprep.subr.mxu0 0.0
    %2615 = vmatpush2.msra.mxu0 0.0
    %2616 = vmatprep.subr.mxu0 0.0
    %2617 = vmatpush2.msra.mxu0 0.0
    %2618 = vmatprep.subr.mxu0 0.0
    %2619 = vmatpush2.msra.mxu0 0.0
    %2620 = vmatprep.subr.mxu0 0.0
    %2621 = vmatpush2.msra.mxu0 0.0
    %2622 = vmatprep.subr.mxu0 0.0
    %2623 = vmatpush2.msra.mxu0 0.0
    %2624 = vmatprep.subr.mxu0 0.0
    %2625 = vmatpush2.msra.mxu0 0.0
    %2626 = vmatprep.subr.mxu0 0.0
    %2627 = vmatpush2.msra.mxu0 0.0
    %2628 = vmatprep.mubr.f32.mxu0 0.0
    %2629 = vmatmul.mubr.f32.gmra.mxu0 %v2562
    %v2630 = vpop.f32.mrf.mxu0
    %v2631 = vadd.f32 0.0, %v2630
    %v2632 = vpop.f32.mrf.mxu0
    %2633 = vdwg.mxu0
    %v2635 = vsel %vm508, %v2631, 0
    %2637 = vmatprep.subr.mxu0 0.0
    %2638 = vmatpush1.msra.mxu0 0.0
    %2639 = vmatprep.subr.mxu0 0.0
    %2640 = vmatpush1.msra.mxu0 0.0
    %2641 = vmatprep.subr.mxu0 0.0
    %2642 = vmatpush1.msra.mxu0 0.0
    %2643 = vmatprep.subr.mxu0 0.0
    %2644 = vmatpush1.msra.mxu0 0.0
    %2645 = vmatprep.subr.mxu0 0.0
    %2646 = vmatpush1.msra.mxu0 0.0
    %2647 = vmatprep.subr.mxu0 0.0
    %2648 = vmatpush1.msra.mxu0 0.0
    %2649 = vmatprep.subr.mxu0 0.0
    %2650 = vmatpush1.msra.mxu0 0.0
    %2651 = vmatprep.subr.mxu0 0.0
    %2652 = vmatpush1.msra.mxu0 0.0
    %2653 = vmatprep.subr.mxu0 0.0
    %2654 = vmatpush1.msra.mxu0 0.0
    %2655 = vmatprep.subr.mxu0 0.0
    %2656 = vmatpush1.msra.mxu0 0.0
    %2657 = vmatprep.subr.mxu0 0.0
    %2658 = vmatpush1.msra.mxu0 0.0
    %2659 = vmatprep.subr.mxu0 0.0
    %2660 = vmatpush1.msra.mxu0 0.0
    %2661 = vmatprep.subr.mxu0 0.0
    %2662 = vmatpush1.msra.mxu0 0.0
    %2663 = vmatprep.subr.mxu0 0.0
    %2664 = vmatpush1.msra.mxu0 0.0
    %2665 = vmatprep.subr.mxu0 0.0
    %2666 = vmatpush1.msra.mxu0 %v1996
    %2667 = vmatprep.subr.mxu0 0.0
    %2668 = vmatpush1.msra.mxu0 %v1995
    %2669 = vmatprep.subr.mxu0 0.0
    %2670 = vmatpush2.msra.mxu0 0.0
    %2671 = vmatprep.subr.mxu0 0.0
    %2672 = vmatpush2.msra.mxu0 0.0
    %2673 = vmatprep.subr.mxu0 0.0
    %2674 = vmatpush2.msra.mxu0 0.0
    %2675 = vmatprep.subr.mxu0 0.0
    %2676 = vmatpush2.msra.mxu0 0.0
    %2677 = vmatprep.subr.mxu0 0.0
    %2678 = vmatpush2.msra.mxu0 0.0
    %2679 = vmatprep.subr.mxu0 0.0
    %2680 = vmatpush2.msra.mxu0 0.0
    %2681 = vmatprep.subr.mxu0 0.0
    %2682 = vmatpush2.msra.mxu0 0.0
    %2683 = vmatprep.subr.mxu0 0.0
    %2684 = vmatpush2.msra.mxu0 0.0
    %2685 = vmatprep.subr.mxu0 0.0
    %2686 = vmatpush2.msra.mxu0 0.0
    %2687 = vmatprep.subr.mxu0 0.0
    %2688 = vmatpush2.msra.mxu0 0.0
    %2689 = vmatprep.subr.mxu0 0.0
    %2690 = vmatpush2.msra.mxu0 0.0
    %2691 = vmatprep.subr.mxu0 0.0
    %2692 = vmatpush2.msra.mxu0 0.0
    %2693 = vmatprep.subr.mxu0 0.0
    %2694 = vmatpush2.msra.mxu0 0.0
    %2695 = vmatprep.subr.mxu0 0.0
    %2696 = vmatpush2.msra.mxu0 0.0
    %2697 = vmatprep.subr.mxu0 0.0
    %2698 = vmatpush2.msra.mxu0 0.0
    %2699 = vmatprep.subr.mxu0 0.0
    %2700 = vmatpush2.msra.mxu0 0.0
    %2701 = vmatprep.mubr.f32.mxu0 0.0
    %2702 = vmatmul.mubr.f32.gmra.mxu0 %v2635
    %v2703 = vpop.f32.mrf.mxu0
    %v2704 = vadd.f32 0.0, %v2703
    %v2705 = vpop.f32.mrf.mxu0
    %2706 = vdwg.mxu0
    %v2707 = vadd.f32 %v1774, %v2704
    %2708 = vrot.lane.b32.xlu0 %v1915, 112
    %v2709 = vpop.permute.xlu0 %2708
    %2710 = vrot.lane.b32.xlu0 %v1917, 112
    %v2711 = vpop.permute.xlu0 %2710
    %v2712 = vsel %vm508, %v2709, 0
    %v2714 = vsel %vm508, %v2711, 0
    %2716 = vmatprep.subr.mxu0 0.0
    %2717 = vmatpush1.xpose.msra.mxu0 0.0
    %2718 = vmatprep.subr.mxu0 0.0
    %2719 = vmatpush1.xpose.msra.mxu0 0.0
    %2720 = vmatprep.subr.mxu0 0.0
    %2721 = vmatpush1.xpose.msra.mxu0 0.0
    %2722 = vmatprep.subr.mxu0 0.0
    %2723 = vmatpush1.xpose.msra.mxu0 0.0
    %2724 = vmatprep.subr.mxu0 0.0
    %2725 = vmatpush1.xpose.msra.mxu0 0.0
    %2726 = vmatprep.subr.mxu0 0.0
    %2727 = vmatpush1.xpose.msra.mxu0 0.0
    %2728 = vmatprep.subr.mxu0 0.0
    %2729 = vmatpush1.xpose.msra.mxu0 0.0
    %2730 = vmatprep.subr.mxu0 0.0
    %2731 = vmatpush1.xpose.msra.mxu0 0.0
    %2732 = vmatprep.subr.mxu0 0.0
    %2733 = vmatpush1.xpose.msra.mxu0 0.0
    %2734 = vmatprep.subr.mxu0 0.0
    %2735 = vmatpush1.xpose.msra.mxu0 0.0
    %2736 = vmatprep.subr.mxu0 0.0
    %2737 = vmatpush1.xpose.msra.mxu0 0.0
    %2738 = vmatprep.subr.mxu0 0.0
    %2739 = vmatpush1.xpose.msra.mxu0 0.0
    %2740 = vmatprep.subr.mxu0 0.0
    %2741 = vmatpush1.xpose.msra.mxu0 0.0
    %2742 = vmatprep.subr.mxu0 0.0
    %2743 = vmatpush1.xpose.msra.mxu0 0.0
    %2744 = vmatprep.subr.mxu0 0.0
    %2745 = vmatpush1.xpose.msra.mxu0 0.0
    %2746 = vmatprep.subr.mxu0 0.0
    %2747 = vmatpush1.xpose.msra.mxu0 %v2714
    %2748 = vmatprep.subr.mxu0 0.0
    %2749 = vmatpush2.xpose.msra.mxu0 0.0
    %2750 = vmatprep.subr.mxu0 0.0
    %2751 = vmatpush2.xpose.msra.mxu0 0.0
    %2752 = vmatprep.subr.mxu0 0.0
    %2753 = vmatpush2.xpose.msra.mxu0 0.0
    %2754 = vmatprep.subr.mxu0 0.0
    %2755 = vmatpush2.xpose.msra.mxu0 0.0
    %2756 = vmatprep.subr.mxu0 0.0
    %2757 = vmatpush2.xpose.msra.mxu0 0.0
    %2758 = vmatprep.subr.mxu0 0.0
    %2759 = vmatpush2.xpose.msra.mxu0 0.0
    %2760 = vmatprep.subr.mxu0 0.0
    %2761 = vmatpush2.xpose.msra.mxu0 0.0
    %2762 = vmatprep.subr.mxu0 0.0
    %2763 = vmatpush2.xpose.msra.mxu0 0.0
    %2764 = vmatprep.subr.mxu0 0.0
    %2765 = vmatpush2.xpose.msra.mxu0 0.0
    %2766 = vmatprep.subr.mxu0 0.0
    %2767 = vmatpush2.xpose.msra.mxu0 0.0
    %2768 = vmatprep.subr.mxu0 0.0
    %2769 = vmatpush2.xpose.msra.mxu0 0.0
    %2770 = vmatprep.subr.mxu0 0.0
    %2771 = vmatpush2.xpose.msra.mxu0 0.0
    %2772 = vmatprep.subr.mxu0 0.0
    %2773 = vmatpush2.xpose.msra.mxu0 0.0
    %2774 = vmatprep.subr.mxu0 0.0
    %2775 = vmatpush2.xpose.msra.mxu0 0.0
    %2776 = vmatprep.subr.mxu0 0.0
    %2777 = vmatpush2.xpose.msra.mxu0 0.0
    %2778 = vmatprep.subr.mxu0 0.0
    %2779 = vmatpush2.xpose.msra.mxu0 0.0
    %2780 = vmatprep.mubr.f32.mxu0 0.0
    %2781 = vmatmul.mubr.f32.gmra.mxu0 %v2712
    %v2782 = vpop.f32.mrf.mxu0
    %v2783 = vadd.f32 %v988, %v2782
    %v2784 = vpop.f32.mrf.mxu0
    %2785 = vdwg.mxu0
    %v2786 = vsel %vm585, %v2783, -inf
    %2787 = vmax.xlane.f32.xlu0 %v2786
    %v2788 = vpop.xlane.xlu0 %2787
    %v2789 = vsub.f32 %v2783, %v2788
    %v2790 = vmul.f32 %v2789, 1.442695
    %v2791 = vpow.pop %v2790
    %v2792 = vsel %vm585, %v2791, 0.0
    %2793 = vadd.xlane.f32.xlu0 %v2792
    %v2794 = vpop.xlane.xlu0 %2793
    %v2795 = vrcp.pop %v2794
    %v2796 = vmul.f32 %v2791, %v2795
    %2798 = vrot.lane.b32.xlu0 %v1991, 112
    %v2799 = vpop.permute.xlu0 %2798
    %v2802 = vsel %vm585, %v2796, 0
    %2804 = vmatprep.subr.mxu0 0.0
    %2805 = vmatpush1.msra.mxu0 0.0
    %2806 = vmatprep.subr.mxu0 0.0
    %2807 = vmatpush1.msra.mxu0 0.0
    %2808 = vmatprep.subr.mxu0 0.0
    %2809 = vmatpush1.msra.mxu0 0.0
    %2810 = vmatprep.subr.mxu0 0.0
    %2811 = vmatpush1.msra.mxu0 0.0
    %2812 = vmatprep.subr.mxu0 0.0
    %2813 = vmatpush1.msra.mxu0 0.0
    %2814 = vmatprep.subr.mxu0 0.0
    %2815 = vmatpush1.msra.mxu0 0.0
    %2816 = vmatprep.subr.mxu0 0.0
    %2817 = vmatpush1.msra.mxu0 0.0
    %2818 = vmatprep.subr.mxu0 0.0
    %2819 = vmatpush1.msra.mxu0 0.0
    %2820 = vmatprep.subr.mxu0 0.0
    %2821 = vmatpush1.msra.mxu0 0.0
    %2822 = vmatprep.subr.mxu0 0.0
    %2823 = vmatpush1.msra.mxu0 0.0
    %2824 = vmatprep.subr.mxu0 0.0
    %2825 = vmatpush1.msra.mxu0 0.0
    %2826 = vmatprep.subr.mxu0 0.0
    %2827 = vmatpush1.msra.mxu0 0.0
    %2828 = vmatprep.subr.mxu0 0.0
    %2829 = vmatpush1.msra.mxu0 0.0
    %2830 = vmatprep.subr.mxu0 0.0
    %2831 = vmatpush1.msra.mxu0 0.0
    %2832 = vmatprep.subr.mxu0 0.0
    %2833 = vmatpush1.msra.mxu0 0.0
    %2834 = vmatprep.subr.mxu0 0.0
    %2835 = vmatpush1.msra.mxu0 %v2799
    %2836 = vmatprep.subr.mxu0 0.0
    %2837 = vmatpush2.msra.mxu0 0.0
    %2838 = vmatprep.subr.mxu0 0.0
    %2839 = vmatpush2.msra.mxu0 0.0
    %2840 = vmatprep.subr.mxu0 0.0
    %2841 = vmatpush2.msra.mxu0 0.0
    %2842 = vmatprep.subr.mxu0 0.0
    %2843 = vmatpush2.msra.mxu0 0.0
    %2844 = vmatprep.subr.mxu0 0.0
    %2845 = vmatpush2.msra.mxu0 0.0
    %2846 = vmatprep.subr.mxu0 0.0
    %2847 = vmatpush2.msra.mxu0 0.0
    %2848 = vmatprep.subr.mxu0 0.0
    %2849 = vmatpush2.msra.mxu0 0.0
    %2850 = vmatprep.subr.mxu0 0.0
    %2851 = vmatpush2.msra.mxu0 0.0
    %2852 = vmatprep.subr.mxu0 0.0
    %2853 = vmatpush2.msra.mxu0 0.0
    %2854 = vmatprep.subr.mxu0 0.0
    %2855 = vmatpush2.msra.mxu0 0.0
    %2856 = vmatprep.subr.mxu0 0.0
    %2857 = vmatpush2.msra.mxu0 0.0
    %2858 = vmatprep.subr.mxu0 0.0
    %2859 = vmatpush2.msra.mxu0 0.0
    %2860 = vmatprep.subr.mxu0 0.0
    %2861 = vmatpush2.msra.mxu0 0.0
    %2862 = vmatprep.subr.mxu0 0.0
    %2863 = vmatpush2.msra.mxu0 0.0
    %2864 = vmatprep.subr.mxu0 0.0
    %2865 = vmatpush2.msra.mxu0 0.0
    %2866 = vmatprep.subr.mxu0 0.0
    %2867 = vmatpush2.msra.mxu0 0.0
    %2868 = vmatprep.mubr.f32.mxu0 0.0
    %2869 = vmatmul.mubr.f32.gmra.mxu0 %v2802
    %v2870 = vpop.f32.mrf.mxu0
    %v2871 = vadd.f32 0.0, %v2870
    %v2872 = vpop.f32.mrf.mxu0
    %2873 = vdwg.mxu0
    %v2875 = vsel %vm508, %v2871, 0
    %2877 = vmatprep.subr.mxu0 0.0
    %2878 = vmatpush1.msra.mxu0 0.0
    %2879 = vmatprep.subr.mxu0 0.0
    %2880 = vmatpush1.msra.mxu0 0.0
    %2881 = vmatprep.subr.mxu0 0.0
    %2882 = vmatpush1.msra.mxu0 0.0
    %2883 = vmatprep.subr.mxu0 0.0
    %2884 = vmatpush1.msra.mxu0 0.0
    %2885 = vmatprep.subr.mxu0 0.0
    %2886 = vmatpush1.msra.mxu0 0.0
    %2887 = vmatprep.subr.mxu0 0.0
    %2888 = vmatpush1.msra.mxu0 0.0
    %2889 = vmatprep.subr.mxu0 0.0
    %2890 = vmatpush1.msra.mxu0 0.0
    %2891 = vmatprep.subr.mxu0 0.0
    %2892 = vmatpush1.msra.mxu0 0.0
    %2893 = vmatprep.subr.mxu0 0.0
    %2894 = vmatpush1.msra.mxu0 0.0
    %2895 = vmatprep.subr.mxu0 0.0
    %2896 = vmatpush1.msra.mxu0 0.0
    %2897 = vmatprep.subr.mxu0 0.0
    %2898 = vmatpush1.msra.mxu0 0.0
    %2899 = vmatprep.subr.mxu0 0.0
    %2900 = vmatpush1.msra.mxu0 0.0
    %2901 = vmatprep.subr.mxu0 0.0
    %2902 = vmatpush1.msra.mxu0 0.0
    %2903 = vmatprep.subr.mxu0 0.0
    %2904 = vmatpush1.msra.mxu0 0.0
    %2905 = vmatprep.subr.mxu0 0.0
    %2906 = vmatpush1.msra.mxu0 %v1998
    %2907 = vmatprep.subr.mxu0 0.0
    %2908 = vmatpush1.msra.mxu0 %v1997
    %2909 = vmatprep.subr.mxu0 0.0
    %2910 = vmatpush2.msra.mxu0 0.0
    %2911 = vmatprep.subr.mxu0 0.0
    %2912 = vmatpush2.msra.mxu0 0.0
    %2913 = vmatprep.subr.mxu0 0.0
    %2914 = vmatpush2.msra.mxu0 0.0
    %2915 = vmatprep.subr.mxu0 0.0
    %2916 = vmatpush2.msra.mxu0 0.0
    %2917 = vmatprep.subr.mxu0 0.0
    %2918 = vmatpush2.msra.mxu0 0.0
    %2919 = vmatprep.subr.mxu0 0.0
    %2920 = vmatpush2.msra.mxu0 0.0
    %2921 = vmatprep.subr.mxu0 0.0
    %2922 = vmatpush2.msra.mxu0 0.0
    %2923 = vmatprep.subr.mxu0 0.0
    %2924 = vmatpush2.msra.mxu0 0.0
    %2925 = vmatprep.subr.mxu0 0.0
    %2926 = vmatpush2.msra.mxu0 0.0
    %2927 = vmatprep.subr.mxu0 0.0
    %2928 = vmatpush2.msra.mxu0 0.0
    %2929 = vmatprep.subr.mxu0 0.0
    %2930 = vmatpush2.msra.mxu0 0.0
    %2931 = vmatprep.subr.mxu0 0.0
    %2932 = vmatpush2.msra.mxu0 0.0
    %2933 = vmatprep.subr.mxu0 0.0
    %2934 = vmatpush2.msra.mxu0 0.0
    %2935 = vmatprep.subr.mxu0 0.0
    %2936 = vmatpush2.msra.mxu0 0.0
    %2937 = vmatprep.subr.mxu0 0.0
    %2938 = vmatpush2.msra.mxu0 0.0
    %2939 = vmatprep.subr.mxu0 0.0
    %2940 = vmatpush2.msra.mxu0 0.0
    %2941 = vmatprep.mubr.f32.mxu0 0.0
    %2942 = vmatmul.mubr.f32.gmra.mxu0 %v2875
    %v2943 = vpop.f32.mrf.mxu0
    %v2944 = vadd.f32 0.0, %v2943
    %v2945 = vpop.f32.mrf.mxu0
    %2946 = vdwg.mxu0
    %v2947 = vadd.f32 %v2707, %v2944
    %2948 = vst [vmem:[#allocation2 + $0x8] sm:$0xff] %v2947
    %v2949 = vld [vmem:[#allocation2] sm:$0xff]
    %v2950 = vld [vmem:[#allocation2 + $0x8] sm:$0xff]
    %s2951 = scalar_lea.vmem %s7, 1
    %v2952 = vld [vmem:[%s2951] sm:$0x1]
    %v2954 = vlaneseq
    %v2955 = vshrl.u32 %v2954, 7
    %v2956 = vsub.s32 0, %v2955
    %v2957 = vrot.slane %v2952, %v2956
    %v2959 = vadd.f32 %v2949, %v2957
    %v2960 = vadd.f32 %v2950, %v2957
    %s2961 = scalar_lea.vmem %s8, 1
    %v2962 = vld [vmem:[%s2961] sm:$0x1]
    %s2963 = scalar_lea.vmem [#allocation9], 1
    %v2964 = vld [vmem:[%s2963] sm:$0x1]
    %2965 = vadd.xlane.f32.xlu0 %v2959
    %v2966 = vpop.xlane.xlu0 %2965
    %2967 = vadd.xlane.f32.xlu0 %v2960
    %v2968 = vpop.xlane.xlu0 %2967
    %v2969 = vmul.f32 %v2966, 0.03125
    %v2970 = vmul.f32 %v2968, 0.03125
    %v2971 = vsub.f32 %v2959, %v2969
    %v2972 = vsub.f32 %v2960, %v2970
    %v2973 = vmul.f32 %v2971, %v237
    %v2974 = vmul.f32 %v2972, %v237
    %v2975 = vmul.f32 %v2973, %v2973
    %v2976 = vmul.f32 %v2974, %v2974
    %2977 = vadd.xlane.f32.xlu0 %v2975
    %v2978 = vpop.xlane.xlu0 %2977
    %2979 = vadd.xlane.f32.xlu0 %v2976
    %v2980 = vpop.xlane.xlu0 %2979
    %v2981 = vmul.f32 %v2978, 0.03125
    %v2982 = vmul.f32 %v2980, 0.03125
    %v2983 = vadd.f32 %v2981, 1e-12
    %v2984 = vadd.f32 %v2982, 1e-12
    %v2985 = vrsqrt.pop %v2983
    %v2986 = vrsqrt.pop %v2984
    %v2987 = vmul.f32 %v2973, %v2985
    %v2988 = vmul.f32 %v2974, %v2986
    %v2990 = vlaneseq
    %v2991 = vshrl.u32 %v2990, 7
    %v2992 = vsub.s32 0, %v2991
    %v2993 = vrot.slane %v2962, %v2992
    %v2995 = vmul.f32 %v2987, %v2993
    %v2996 = vmul.f32 %v2988, %v2993
    %v2998 = vlaneseq
    %v2999 = vshrl.u32 %v2998, 7
    %v3000 = vsub.s32 0, %v2999
    %v3001 = vrot.slane %v2964, %v3000
    %v3003 = vadd.f32 %v2995, %v3001
    %v3004 = vadd.f32 %v2996, %v3001
    %s3005 = scalar_lea.vmem [#allocation11], 128
    %v3006 = vld [vmem:[%s3005] sm:$0xff]
    %v3007 = vld [vmem:[%s3005 + $0x8] sm:$0xff]
    %v3008 = vld [vmem:[%s3005 + $0x10] sm:$0xff]
    %v3009 = vld [vmem:[%s3005 + $0x18] sm:$0xff]
    %v3010 = vld [vmem:[%s3005 + $0x20] sm:$0xff]
    %v3011 = vld [vmem:[%s3005 + $0x28] sm:$0xff]
    %v3012 = vld [vmem:[%s3005 + $0x30] sm:$0xff]
    %v3013 = vld [vmem:[%s3005 + $0x38] sm:$0xff]
    %v3014 = vld [vmem:[%s3005 + $0x40] sm:$0xff]
    %v3015 = vld [vmem:[%s3005 + $0x48] sm:$0xff]
    %v3016 = vld [vmem:[%s3005 + $0x50] sm:$0xff]
    %v3017 = vld [vmem:[%s3005 + $0x58] sm:$0xff]
    %v3018 = vld [vmem:[%s3005 + $0x60] sm:$0xff]
    %v3019 = vld [vmem:[%s3005 + $0x68] sm:$0xff]
    %v3020 = vld [vmem:[%s3005 + $0x70] sm:$0xff]
    %v3021 = vld [vmem:[%s3005 + $0x78] sm:$0xff]
    %s3022 = scalar_lea.vmem [#allocation12], 1
    %v3023 = vld [vmem:[%s3022] sm:$0x1]
    %v3025 = vlaneseq
    %v3026 = vshrl.u32 %v3025, 7
    %v3027 = vsub.s32 0, %v3026
    %v3028 = vrot.slane %v3023, %v3027
    %3030 = vmatprep.subr.mxu0 0.0
    %3031 = vmatpush1.msra.mxu0 %v3021
    %3032 = vmatprep.subr.mxu0 0.0
    %3033 = vmatpush1.msra.mxu0 %v3020
    %3034 = vmatprep.subr.mxu0 0.0
    %3035 = vmatpush1.msra.mxu0 %v3019
    %3036 = vmatprep.subr.mxu0 0.0
    %3037 = vmatpush1.msra.mxu0 %v3018
    %3038 = vmatprep.subr.mxu0 0.0
    %3039 = vmatpush1.msra.mxu0 %v3017
    %3040 = vmatprep.subr.mxu0 0.0
    %3041 = vmatpush1.msra.mxu0 %v3016
    %3042 = vmatprep.subr.mxu0 0.0
    %3043 = vmatpush1.msra.mxu0 %v3015
    %3044 = vmatprep.subr.mxu0 0.0
    %3045 = vmatpush1.msra.mxu0 %v3014
    %3046 = vmatprep.subr.mxu0 0.0
    %3047 = vmatpush1.msra.mxu0 %v3013
    %3048 = vmatprep.subr.mxu0 0.0
    %3049 = vmatpush1.msra.mxu0 %v3012
    %3050 = vmatprep.subr.mxu0 0.0
    %3051 = vmatpush1.msra.mxu0 %v3011
    %3052 = vmatprep.subr.mxu0 0.0
    %3053 = vmatpush1.msra.mxu0 %v3010
    %3054 = vmatprep.subr.mxu0 0.0
    %3055 = vmatpush1.msra.mxu0 %v3009
    %3056 = vmatprep.subr.mxu0 0.0
    %3057 = vmatpush1.msra.mxu0 %v3008
    %3058 = vmatprep.subr.mxu0 0.0
    %3059 = vmatpush1.msra.mxu0 %v3007
    %3060 = vmatprep.subr.mxu0 0.0
    %3061 = vmatpush1.msra.mxu0 %v3006
    %3062 = vmatprep.subr.mxu0 0.0
    %3063 = vmatpush2.msra.mxu0 0.0
    %3064 = vmatprep.subr.mxu0 0.0
    %3065 = vmatpush2.msra.mxu0 0.0
    %3066 = vmatprep.subr.mxu0 0.0
    %3067 = vmatpush2.msra.mxu0 0.0
    %3068 = vmatprep.subr.mxu0 0.0
    %3069 = vmatpush2.msra.mxu0 0.0
    %3070 = vmatprep.subr.mxu0 0.0
    %3071 = vmatpush2.msra.mxu0 0.0
    %3072 = vmatprep.subr.mxu0 0.0
    %3073 = vmatpush2.msra.mxu0 0.0
    %3074 = vmatprep.subr.mxu0 0.0
    %3075 = vmatpush2.msra.mxu0 0.0
    %3076 = vmatprep.subr.mxu0 0.0
    %3077 = vmatpush2.msra.mxu0 0.0
    %3078 = vmatprep.subr.mxu0 0.0
    %3079 = vmatpush2.msra.mxu0 0.0
    %3080 = vmatprep.subr.mxu0 0.0
    %3081 = vmatpush2.msra.mxu0 0.0
    %3082 = vmatprep.subr.mxu0 0.0
    %3083 = vmatpush2.msra.mxu0 0.0
    %3084 = vmatprep.subr.mxu0 0.0
    %3085 = vmatpush2.msra.mxu0 0.0
    %3086 = vmatprep.subr.mxu0 0.0
    %3087 = vmatpush2.msra.mxu0 0.0
    %3088 = vmatprep.subr.mxu0 0.0
    %3089 = vmatpush2.msra.mxu0 0.0
    %3090 = vmatprep.subr.mxu0 0.0
    %3091 = vmatpush2.msra.mxu0 0.0
    %3092 = vmatprep.subr.mxu0 0.0
    %3093 = vmatpush2.msra.mxu0 0.0
    %3094 = vmatprep.mubr.f32.mxu0 0.0
    %3095 = vmatmul.mubr.f32.gmra.mxu0 %v3003
    %v3096 = vpop.f32.mrf.mxu0
    %v3097 = vadd.f32 %v3028, %v3096
    %v3098 = vpop.f32.mrf.mxu0
    %3099 = vmatprep.mubr.f32.mxu0 0.0
    %3100 = vmatmul.mubr.f32.gmra.mxu0 %v3004
    %v3101 = vpop.f32.mrf.mxu0
    %v3102 = vadd.f32 %v3028, %v3101
    %v3103 = vpop.f32.mrf.mxu0
    %3104 = vdwg.mxu0
    %v3105 = vmul.f32 %v3097, 0.5
    %v3106 = vmul.f32 %v3102, 0.5
    %v3107 = vmul.f32 %v3097, 0.044715
    %v3108 = vmul.f32 %v3102, 0.044715
    %v3109 = vmul.f32 %v3107, %v3097
    %v3110 = vmul.f32 %v3108, %v3102
    %v3111 = vmul.f32 %v3109, %v3097
    %v3112 = vmul.f32 %v3110, %v3102
    %v3113 = vadd.f32 %v3097, %v3111
    %v3114 = vadd.f32 %v3102, %v3112
    %v3115 = vmul.f32 %v3113, 0.7978846
    %v3116 = vmul.f32 %v3114, 0.7978846
    %v3117 = vtanh.pop %v3115
    %v3118 = vtanh.pop %v3116
    %v3119 = vadd.f32 %v3117, 1.0
    %v3120 = vadd.f32 %v3118, 1.0
    %v3121 = vmul.f32 %v3105, %v3119
    %v3122 = vmul.f32 %v3106, %v3120
    %s3123 = scalar_lea.vmem [#allocation14], 128
    %v3124 = vld [vmem:[%s3123] sm:$0xff]
    %v3125 = vld [vmem:[%s3123 + $0x8] sm:$0xff]
    %v3126 = vld [vmem:[%s3123 + $0x10] sm:$0xff]
    %v3127 = vld [vmem:[%s3123 + $0x18] sm:$0xff]
    %v3128 = vld [vmem:[%s3123 + $0x20] sm:$0xff]
    %v3129 = vld [vmem:[%s3123 + $0x28] sm:$0xff]
    %v3130 = vld [vmem:[%s3123 + $0x30] sm:$0xff]
    %v3131 = vld [vmem:[%s3123 + $0x38] sm:$0xff]
    %v3132 = vld [vmem:[%s3123 + $0x40] sm:$0xff]
    %v3133 = vld [vmem:[%s3123 + $0x48] sm:$0xff]
    %v3134 = vld [vmem:[%s3123 + $0x50] sm:$0xff]
    %v3135 = vld [vmem:[%s3123 + $0x58] sm:$0xff]
    %v3136 = vld [vmem:[%s3123 + $0x60] sm:$0xff]
    %v3137 = vld [vmem:[%s3123 + $0x68] sm:$0xff]
    %v3138 = vld [vmem:[%s3123 + $0x70] sm:$0xff]
    %v3139 = vld [vmem:[%s3123 + $0x78] sm:$0xff]
    %s3140 = scalar_lea.vmem [#allocation15], 1
    %v3141 = vld [vmem:[%s3140] sm:$0x1]
    %v3143 = vlaneseq
    %v3144 = vshrl.u32 %v3143, 7
    %v3145 = vsub.s32 0, %v3144
    %v3146 = vrot.slane %v3141, %v3145
    %3148 = vmatprep.subr.mxu0 0.0
    %3149 = vmatpush1.msra.mxu0 %v3139
    %3150 = vmatprep.subr.mxu0 0.0
    %3151 = vmatpush1.msra.mxu0 %v3138
    %3152 = vmatprep.subr.mxu0 0.0
    %3153 = vmatpush1.msra.mxu0 %v3137
    %3154 = vmatprep.subr.mxu0 0.0
    %3155 = vmatpush1.msra.mxu0 %v3136
    %3156 = vmatprep.subr.mxu0 0.0
    %3157 = vmatpush1.msra.mxu0 %v3135
    %3158 = vmatprep.subr.mxu0 0.0
    %3159 = vmatpush1.msra.mxu0 %v3134
    %3160 = vmatprep.subr.mxu0 0.0
    %3161 = vmatpush1.msra.mxu0 %v3133
    %3162 = vmatprep.subr.mxu0 0.0
    %3163 = vmatpush1.msra.mxu0 %v3132
    %3164 = vmatprep.subr.mxu0 0.0
    %3165 = vmatpush1.msra.mxu0 %v3131
    %3166 = vmatprep.subr.mxu0 0.0
    %3167 = vmatpush1.msra.mxu0 %v3130
    %3168 = vmatprep.subr.mxu0 0.0
    %3169 = vmatpush1.msra.mxu0 %v3129
    %3170 = vmatprep.subr.mxu0 0.0
    %3171 = vmatpush1.msra.mxu0 %v3128
    %3172 = vmatprep.subr.mxu0 0.0
    %3173 = vmatpush1.msra.mxu0 %v3127
    %3174 = vmatprep.subr.mxu0 0.0
    %3175 = vmatpush1.msra.mxu0 %v3126
    %3176 = vmatprep.subr.mxu0 0.0
    %3177 = vmatpush1.msra.mxu0 %v3125
    %3178 = vmatprep.subr.mxu0 0.0
    %3179 = vmatpush1.msra.mxu0 %v3124
    %3180 = vmatprep.subr.mxu0 0.0
    %3181 = vmatpush2.msra.mxu0 0.0
    %3182 = vmatprep.subr.mxu0 0.0
    %3183 = vmatpush2.msra.mxu0 0.0
    %3184 = vmatprep.subr.mxu0 0.0
    %3185 = vmatpush2.msra.mxu0 0.0
    %3186 = vmatprep.subr.mxu0 0.0
    %3187 = vmatpush2.msra.mxu0 0.0
    %3188 = vmatprep.subr.mxu0 0.0
    %3189 = vmatpush2.msra.mxu0 0.0
    %3190 = vmatprep.subr.mxu0 0.0
    %3191 = vmatpush2.msra.mxu0 0.0
    %3192 = vmatprep.subr.mxu0 0.0
    %3193 = vmatpush2.msra.mxu0 0.0
    %3194 = vmatprep.subr.mxu0 0.0
    %3195 = vmatpush2.msra.mxu0 0.0
    %3196 = vmatprep.subr.mxu0 0.0
    %3197 = vmatpush2.msra.mxu0 0.0
    %3198 = vmatprep.subr.mxu0 0.0
    %3199 = vmatpush2.msra.mxu0 0.0
    %3200 = vmatprep.subr.mxu0 0.0
    %3201 = vmatpush2.msra.mxu0 0.0
    %3202 = vmatprep.subr.mxu0 0.0
    %3203 = vmatpush2.msra.mxu0 0.0
    %3204 = vmatprep.subr.mxu0 0.0
    %3205 = vmatpush2.msra.mxu0 0.0
    %3206 = vmatprep.subr.mxu0 0.0
    %3207 = vmatpush2.msra.mxu0 0.0
    %3208 = vmatprep.subr.mxu0 0.0
    %3209 = vmatpush2.msra.mxu0 0.0
    %3210 = vmatprep.subr.mxu0 0.0
    %3211 = vmatpush2.msra.mxu0 0.0
    %3212 = vmatprep.mubr.f32.mxu0 0.0
    %3213 = vmatmul.mubr.f32.gmra.mxu0 %v3121
    %v3214 = vpop.f32.mrf.mxu0
    %v3215 = vadd.f32 %v3146, %v3214
    %v3216 = vpop.f32.mrf.mxu0
    %3217 = vmatprep.mubr.f32.mxu0 0.0
    %3218 = vmatmul.mubr.f32.gmra.mxu0 %v3122
    %v3219 = vpop.f32.mrf.mxu0
    %v3220 = vadd.f32 %v3146, %v3219
    %v3221 = vpop.f32.mrf.mxu0
    %3222 = vdwg.mxu0
    %v3223 = vadd.f32 %v3003, %v3215
    %v3224 = vadd.f32 %v3004, %v3220
    %s3225 = scalar_lea.vmem [#allocation17], 1
    %v3226 = vld [vmem:[%s3225] sm:$0x1]
    %s3227 = scalar_lea.vmem [#allocation18], 1
    %v3228 = vld [vmem:[%s3227] sm:$0x1]
    %3229 = vadd.xlane.f32.xlu0 %v3223
    %v3230 = vpop.xlane.xlu0 %3229
    %3231 = vadd.xlane.f32.xlu0 %v3224
    %v3232 = vpop.xlane.xlu0 %3231
    %v3233 = vmul.f32 %v3230, 0.03125
    %v3234 = vmul.f32 %v3232, 0.03125
    %v3235 = vsub.f32 %v3223, %v3233
    %v3236 = vsub.f32 %v3224, %v3234
    %v3237 = vmul.f32 %v3235, %v237
    %v3238 = vmul.f32 %v3236, %v237
    %v3239 = vmul.f32 %v3237, %v3237
    %v3240 = vmul.f32 %v3238, %v3238
    %3241 = vadd.xlane.f32.xlu0 %v3239
    %v3242 = vpop.xlane.xlu0 %3241
    %3243 = vadd.xlane.f32.xlu0 %v3240
    %v3244 = vpop.xlane.xlu0 %3243
    %v3245 = vmul.f32 %v3242, 0.03125
    %v3246 = vmul.f32 %v3244, 0.03125
    %v3247 = vadd.f32 %v3245, 1e-12
    %v3248 = vadd.f32 %v3246, 1e-12
    %v3249 = vrsqrt.pop %v3247
    %v3250 = vrsqrt.pop %v3248
    %v3251 = vmul.f32 %v3237, %v3249
    %v3252 = vmul.f32 %v3238, %v3250
    %v3254 = vlaneseq
    %v3255 = vshrl.u32 %v3254, 7
    %v3256 = vsub.s32 0, %v3255
    %v3257 = vrot.slane %v3226, %v3256
    %v3259 = vmul.f32 %v3251, %v3257
    %v3260 = vmul.f32 %v3252, %v3257
    %v3262 = vlaneseq
    %v3263 = vshrl.u32 %v3262, 7
    %v3264 = vsub.s32 0, %v3263
    %v3265 = vrot.slane %v3228, %v3264
    %v3267 = vadd.f32 %v3259, %v3265
    %v3268 = vadd.f32 %v3260, %v3265
    %3269 = vst [vmem:[#allocation3] sm:$0xff] 0.0
    %3270 = vst [vmem:[#allocation3] sm:$0x1] %v3267
    %3271 = vst [vmem:[#allocation3 + $0x1] sm:$0x1] %v3268
    %v3272 = vld [vmem:[#allocation3] sm:$0xff]
    %v3273 = vld [vmem:[%s16] sm:$0xff]
    %v3274 = vld [vmem:[%s16 + $0x8] sm:$0xff]
    %v3275 = vld [vmem:[%s16 + $0x10] sm:$0xff]
    %v3276 = vld [vmem:[%s16 + $0x18] sm:$0xff]
    %v3277 = vld [vmem:[%s16 + $0x20] sm:$0xff]
    %v3278 = vld [vmem:[%s16 + $0x28] sm:$0xff]
    %v3279 = vld [vmem:[%s16 + $0x30] sm:$0xff]
    %v3280 = vld [vmem:[%s16 + $0x38] sm:$0xff]
    %v3281 = vld [vmem:[%s16 + $0x40] sm:$0xff]
    %v3282 = vld [vmem:[%s16 + $0x48] sm:$0xff]
    %v3283 = vld [vmem:[%s16 + $0x50] sm:$0xff]
    %v3284 = vld [vmem:[%s16 + $0x58] sm:$0xff]
    %v3285 = vld [vmem:[%s16 + $0x60] sm:$0xff]
    %v3286 = vld [vmem:[%s16 + $0x68] sm:$0xff]
    %v3287 = vld [vmem:[%s16 + $0x70] sm:$0xff]
    %v3288 = vld [vmem:[%s16 + $0x78] sm:$0xff]
    %v3289 = vld [vmem:[#allocation20] sm:$0x1]
    %v3291 = vlaneseq
    %v3292 = vshrl.u32 %v3291, 7
    %v3293 = vsub.s32 0, %v3292
    %v3294 = vrot.slane %v3289, %v3293
    %3296 = vmatprep.subr.mxu0 0.0
    %3297 = vmatpush1.msra.mxu0 %v3288
    %3298 = vmatprep.subr.mxu0 0.0
    %3299 = vmatpush1.msra.mxu0 %v3287
    %3300 = vmatprep.subr.mxu0 0.0
    %3301 = vmatpush1.msra.mxu0 %v3286
    %3302 = vmatprep.subr.mxu0 0.0
    %3303 = vmatpush1.msra.mxu0 %v3285
    %3304 = vmatprep.subr.mxu0 0.0
    %3305 = vmatpush1.msra.mxu0 %v3284
    %3306 = vmatprep.subr.mxu0 0.0
    %3307 = vmatpush1.msra.mxu0 %v3283
    %3308 = vmatprep.subr.mxu0 0.0
    %3309 = vmatpush1.msra.mxu0 %v3282
    %3310 = vmatprep.subr.mxu0 0.0
    %3311 = vmatpush1.msra.mxu0 %v3281
    %3312 = vmatprep.subr.mxu0 0.0
    %3313 = vmatpush1.msra.mxu0 %v3280
    %3314 = vmatprep.subr.mxu0 0.0
    %3315 = vmatpush1.msra.mxu0 %v3279
    %3316 = vmatprep.subr.mxu0 0.0
    %3317 = vmatpush1.msra.mxu0 %v3278
    %3318 = vmatprep.subr.mxu0 0.0
    %3319 = vmatpush1.msra.mxu0 %v3277
    %3320 = vmatprep.subr.mxu0 0.0
    %3321 = vmatpush1.msra.mxu0 %v3276
    %3322 = vmatprep.subr.mxu0 0.0
    %3323 = vmatpush1.msra.mxu0 %v3275
    %3324 = vmatprep.subr.mxu0 0.0
    %3325 = vmatpush1.msra.mxu0 %v3274
    %3326 = vmatprep.subr.mxu0 0.0
    %3327 = vmatpush1.msra.mxu0 %v3273
    %3328 = vmatprep.subr.mxu0 0.0
    %3329 = vmatpush2.msra.mxu0 0.0
    %3330 = vmatprep.subr.mxu0 0.0
    %3331 = vmatpush2.msra.mxu0 0.0
    %3332 = vmatprep.subr.mxu0 0.0
    %3333 = vmatpush2.msra.mxu0 0.0
    %3334 = vmatprep.subr.mxu0 0.0
    %3335 = vmatpush2.msra.mxu0 0.0
    %3336 = vmatprep.subr.mxu0 0.0
    %3337 = vmatpush2.msra.mxu0 0.0
    %3338 = vmatprep.subr.mxu0 0.0
    %3339 = vmatpush2.msra.mxu0 0.0
    %3340 = vmatprep.subr.mxu0 0.0
    %3341 = vmatpush2.msra.mxu0 0.0
    %3342 = vmatprep.subr.mxu0 0.0
    %3343 = vmatpush2.msra.mxu0 0.0
    %3344 = vmatprep.subr.mxu0 0.0
    %3345 = vmatpush2.msra.mxu0 0.0
    %3346 = vmatprep.subr.mxu0 0.0
    %3347 = vmatpush2.msra.mxu0 0.0
    %3348 = vmatprep.subr.mxu0 0.0
    %3349 = vmatpush2.msra.mxu0 0.0
    %3350 = vmatprep.subr.mxu0 0.0
    %3351 = vmatpush2.msra.mxu0 0.0
    %3352 = vmatprep.subr.mxu0 0.0
    %3353 = vmatpush2.msra.mxu0 0.0
    %3354 = vmatprep.subr.mxu0 0.0
    %3355 = vmatpush2.msra.mxu0 0.0
    %3356 = vmatprep.subr.mxu0 0.0
    %3357 = vmatpush2.msra.mxu0 0.0
    %3358 = vmatprep.subr.mxu0 0.0
    %3359 = vmatpush2.msra.mxu0 0.0
    %3360 = vmatprep.mubr.f32.mxu0 0.0
    %3361 = vmatmul.mubr.f32.gmra.mxu0 %v3272
    %v3362 = vpop.f32.mrf.mxu0
    %v3363 = vadd.f32 %v3294, %v3362
    %v3364 = vpop.f32.mrf.mxu0
    %3365 = vdwg.mxu0
    %v3366 = vtanh.pop %v3363
    %v3367 = vld [vmem:[#allocation21] sm:$0xff]
    %v3368 = vld [vmem:[#allocation21 + $0x8] sm:$0xff]
    %v3369 = vld [vmem:[#allocation21 + $0x10] sm:$0xff]
    %v3370 = vld [vmem:[#allocation21 + $0x18] sm:$0xff]
    %v3371 = vld [vmem:[#allocation21 + $0x20] sm:$0xff]
    %v3372 = vld [vmem:[#allocation21 + $0x28] sm:$0xff]
    %v3373 = vld [vmem:[#allocation21 + $0x30] sm:$0xff]
    %v3374 = vld [vmem:[#allocation21 + $0x38] sm:$0xff]
    %v3375 = vld [vmem:[#allocation21 + $0x40] sm:$0xff]
    %v3376 = vld [vmem:[#allocation21 + $0x48] sm:$0xff]
    %v3377 = vld [vmem:[#allocation21 + $0x50] sm:$0xff]
    %v3378 = vld [vmem:[#allocation21 + $0x58] sm:$0xff]
    %v3379 = vld [vmem:[#allocation21 + $0x60] sm:$0xff]
    %v3380 = vld [vmem:[#allocation21 + $0x68] sm:$0xff]
    %v3381 = vld [vmem:[#allocation21 + $0x70] sm:$0xff]
    %v3382 = vld [vmem:[#allocation21 + $0x78] sm:$0xff]
    %v3383 = vld [vmem:[#allocation23] sm:$0x1]
    %v3385 = vlaneseq
    %v3386 = vshrl.u32 %v3385, 7
    %v3387 = vsub.s32 0, %v3386
    %v3388 = vrot.slane %v3383, %v3387
    %3390 = vmatprep.subr.mxu0 0.0
    %3391 = vmatpush1.msra.mxu0 %v3382
    %3392 = vmatprep.subr.mxu0 0.0
    %3393 = vmatpush1.msra.mxu0 %v3381
    %3394 = vmatprep.subr.mxu0 0.0
    %3395 = vmatpush1.msra.mxu0 %v3380
    %3396 = vmatprep.subr.mxu0 0.0
    %3397 = vmatpush1.msra.mxu0 %v3379
    %3398 = vmatprep.subr.mxu0 0.0
    %3399 = vmatpush1.msra.mxu0 %v3378
    %3400 = vmatprep.subr.mxu0 0.0
    %3401 = vmatpush1.msra.mxu0 %v3377
    %3402 = vmatprep.subr.mxu0 0.0
    %3403 = vmatpush1.msra.mxu0 %v3376
    %3404 = vmatprep.subr.mxu0 0.0
    %3405 = vmatpush1.msra.mxu0 %v3375
    %3406 = vmatprep.subr.mxu0 0.0
    %3407 = vmatpush1.msra.mxu0 %v3374
    %3408 = vmatprep.subr.mxu0 0.0
    %3409 = vmatpush1.msra.mxu0 %v3373
    %3410 = vmatprep.subr.mxu0 0.0
    %3411 = vmatpush1.msra.mxu0 %v3372
    %3412 = vmatprep.subr.mxu0 0.0
    %3413 = vmatpush1.msra.mxu0 %v3371
    %3414 = vmatprep.subr.mxu0 0.0
    %3415 = vmatpush1.msra.mxu0 %v3370
    %3416 = vmatprep.subr.mxu0 0.0
    %3417 = vmatpush1.msra.mxu0 %v3369
    %3418 = vmatprep.subr.mxu0 0.0
    %3419 = vmatpush1.msra.mxu0 %v3368
    %3420 = vmatprep.subr.mxu0 0.0
    %3421 = vmatpush1.msra.mxu0 %v3367
    %3422 = vmatprep.subr.mxu0 0.0
    %3423 = vmatpush2.msra.mxu0 0.0
    %3424 = vmatprep.subr.mxu0 0.0
    %3425 = vmatpush2.msra.mxu0 0.0
    %3426 = vmatprep.subr.mxu0 0.0
    %3427 = vmatpush2.msra.mxu0 0.0
    %3428 = vmatprep.subr.mxu0 0.0
    %3429 = vmatpush2.msra.mxu0 0.0
    %3430 = vmatprep.subr.mxu0 0.0
    %3431 = vmatpush2.msra.mxu0 0.0
    %3432 = vmatprep.subr.mxu0 0.0
    %3433 = vmatpush2.msra.mxu0 0.0
    %3434 = vmatprep.subr.mxu0 0.0
    %3435 = vmatpush2.msra.mxu0 0.0
    %3436 = vmatprep.subr.mxu0 0.0
    %3437 = vmatpush2.msra.mxu0 0.0
    %3438 = vmatprep.subr.mxu0 0.0
    %3439 = vmatpush2.msra.mxu0 0.0
    %3440 = vmatprep.subr.mxu0 0.0
    %3441 = vmatpush2.msra.mxu0 0.0
    %3442 = vmatprep.subr.mxu0 0.0
    %3443 = vmatpush2.msra.mxu0 0.0
    %3444 = vmatprep.subr.mxu0 0.0
    %3445 = vmatpush2.msra.mxu0 0.0
    %3446 = vmatprep.subr.mxu0 0.0
    %3447 = vmatpush2.msra.mxu0 0.0
    %3448 = vmatprep.subr.mxu0 0.0
    %3449 = vmatpush2.msra.mxu0 0.0
    %3450 = vmatprep.subr.mxu0 0.0
    %3451 = vmatpush2.msra.mxu0 0.0
    %3452 = vmatprep.subr.mxu0 0.0
    %3453 = vmatpush2.msra.mxu0 0.0
    %3454 = vmatprep.mubr.f32.mxu0 0.0
    %3455 = vmatmul.mubr.f32.gmra.mxu0 %v3366
    %v3456 = vpop.f32.mrf.mxu0
    %v3457 = vadd.f32 %v3388, %v3456
    %v3458 = vpop.f32.mrf.mxu0
    %3459 = vdwg.mxu0
    %3460 = vst [vmem:[%s20] sm:$0xff] %v3457
    // Predicated region
    $region134: #{bert_for_multilabel_forward.1} parent=1 // pred_check
      _
    $region135: #{bert_for_multilabel_forward.1} parent=1 // pred_check_branch
      %3462 = sbr.rel (0) target = $region137
    $region136: #{bert_for_multilabel_forward.1} parent=1 // pred_region
      _
    $region137: #{bert_for_multilabel_forward.1} parent=1 // pred_fallthru
      _
    // Predicated region
    $region138: #{bert_for_multilabel_forward.1} parent=1 // pred_check
      _
    $region139: #{bert_for_multilabel_forward.1} parent=1 // pred_check_branch
      %3464 = sbr.rel (0) target = $region141
    $region140: #{bert_for_multilabel_forward.1} parent=1 // pred_region
      _
    $region141: #{bert_for_multilabel_forward.1} parent=1 // pred_fallthru
      _
    %3465 = vsyncpa [#allocation5], 1
    %3466 = vsyncpa [#allocation7], 1
    %3467 = vsyncpa [#allocation10], 1
    %3468 = vsyncpa [#allocation13], 1
    %3469 = vsyncpa [#allocation16], 1
    %3470 = vsyncpa [#allocation19], 1
    %3471 = vsyncpa [#allocation22], 1

</llo_original>
